<compile_context>
chip_gen: v7x
topology: tpu7x:2x2x1
jax: 0.10.0
libtpu: 0.0.40
codegen_flags: <defaults>
</compile_context>

<pallas_src>
import math

import numpy as np
import jax
import jax.numpy as jnp
from jax.experimental import pallas as pl
from jax.experimental.pallas import tpu as pltpu

CLASS_NUM = 5
IN_CHANNEL = 4
LENGTH = 64
HEAD = 1
BN_EPS = 1e-5

OUT_PAD = 128          # lane-dense padded logit width (sliced to CLASS_NUM outside)
SE_HID_PAD = 16        # agca SE hidden width 6  -> 16
ATT_PAD = 32           # agca attention width 24 -> 32
OC1_PAD = 32           # out_conv2[0] width 18   -> 32

# Kernel weight-operand order (folded bf16 matmul RHS operands).
W_ORDER = ('a', 'b', 'c', 'd', 'e', 'u', 'f', 'g', 'h', 'exp', 'i', 'j', 'k')
# Bias segments packed (128-lane-aligned) into ONE f32 operand.
BIAS_ORDER = ('a', 'b', 'c', 'd', 'e', 'u', 'f', 'g', 'h', 'i', 'j', 'k')


# ----------------------------------------------------------------------------
# Parameter initialization (PyTorch-equivalent values).
# ----------------------------------------------------------------------------
def kaiming_uniform(key, shape, fan_in):
    bound = math.sqrt(6.0 / fan_in)
    return jax.random.uniform(key, shape, jnp.float32, minval=-bound, maxval=bound)


def bn_eval_params(c):
    # gamma=1, beta=0, running_mean=0, running_var=1  (module's _weights_init)
    scale = jnp.full((c,), 1.0 / math.sqrt(1.0 + BN_EPS), jnp.float32)
    shift = jnp.zeros((c,), jnp.float32)
    return scale, shift


def dense_from_grouped(w, groups):      # (C_out, C_in/g, K) -> block-diag (C_out, C_in, K)
    c_out, cig, K = w.shape
    cog = c_out // groups
    c_in = cig * groups
    W = jnp.zeros((c_out, c_in, K), jnp.float32)
    for g in range(groups):
        W = W.at[g * cog:(g + 1) * cog, g * cig:(g + 1) * cig, :].set(w[g * cog:(g + 1) * cog])
    return W


def dft_weight(L):
    # TODO(synk): the lowercase gcu() used in GCU.forward is not defined in the
    # provided source; we keep the previous interpretation: the DFT returning
    # (imag, real) parts of each channel's length-L signal.
    n = np.arange(L)
    ang = 2.0 * np.pi * np.outer(n, n) / L
    Wi = -np.sin(ang)
    Wr = np.cos(ang)
    return jnp.asarray(np.concatenate([Wi, Wr], axis=1), jnp.float32)   # (L, 2L)


def init_gcu_params(key, channels, kernel, stride, length):
    c2 = 2 * channels
    k1, k2 = jax.random.split(key)

    def branch(k, groups):
        cig = c2 // groups
        w = kaiming_uniform(k, (c2, cig, kernel), cig * kernel)
        return dict(w_dense=dense_from_grouped(w, groups),
                    bias=jnp.zeros((c2,), jnp.float32),
                    stride=stride,
                    bn_pre=bn_eval_params(c2),
                    bn_post=bn_eval_params(c2))

    return dict(dft=dft_weight(length), conv1=branch(k1, 2), conv2=branch(k2, channels))


def init_agca_params(key, exp, head, length):
    d, divide = 16, 4
    k1, k2, k3, k4, k5 = jax.random.split(key, 5)
    cov_conv_w = kaiming_uniform(k3, (exp * d, (4 * exp) // 4, 1), (4 * exp) // 4)
    return dict(
        d=d, head=head,
        gcu=init_gcu_params(k1, exp, 3, 1, length),
        cov_lin_w=kaiming_uniform(k2, (1, d), d),
        cov_lin_b=jnp.zeros((1,), jnp.float32),
        cov_conv_w=dense_from_grouped(cov_conv_w, 4),
        cov_conv_b=jnp.zeros((exp * d,), jnp.float32),
        se1_w=kaiming_uniform(k4, (exp // divide, head * d * exp), head * d * exp),
        se1_b=jnp.zeros((exp // divide,), jnp.float32),
        se2_w=kaiming_uniform(k5, (exp, exp // divide), exp // divide),
        se2_b=jnp.zeros((exp,), jnp.float32),
    )


def init_ffc_params(key, in_ch, length):
    s, k = 2, 5
    k1, k2, k3 = jax.random.split(key, 3)
    l2 = length // s
    return dict(
        gcu=init_gcu_params(k1, in_ch, k, s, length),
        pool_out=l2,
        lin1_w=kaiming_uniform(k2, (l2 // 6, l2), l2),
        lin1_b=jnp.zeros((l2 // 6,), jnp.float32),
        lin2_w=kaiming_uniform(k3, (length // 4, l2 // 6), l2 // 6),
        lin2_b=jnp.zeros((length // 4,), jnp.float32),
        bn=bn_eval_params(4 * in_ch),
    )


def init_fuse_params(key, in_ch, out_ch):
    return dict(w=kaiming_uniform(key, (out_ch, in_ch, 1), in_ch),
                b=jnp.zeros((out_ch,), jnp.float32),
                bn=bn_eval_params(out_ch))


def init_block_params(key, in_ch, out_ch, ks, stride, exp, in_len):
    k1, k2, k3, k4 = jax.random.split(key, 4)
    pad = (ks - 1) // 2
    dw_len = (in_len + 2 * pad - ks) // stride + 1
    dw_w = kaiming_uniform(k2, (exp, 1, ks), ks)
    return dict(
        conv_w=kaiming_uniform(k1, (exp, in_ch, 1), in_ch),
        conv_bn=bn_eval_params(exp),
        dw_dense=dense_from_grouped(dw_w, exp),
        dw_b=jnp.zeros((exp,), jnp.float32),
        dw_bn=bn_eval_params(exp),
        dw_pad=pad, dw_stride=stride,
        ca=init_agca_params(k3, exp, HEAD, dw_len),
        pw_w=kaiming_uniform(k4, (out_ch, exp, 1), exp),
        pw_b=jnp.zeros((out_ch,), jnp.float32),
        pw_bn=bn_eval_params(out_ch),
    )


def init_gcanet_params(key):
    k1, k2, k3, k4, k5 = jax.random.split(key, 5)
    return dict(
        ffc=init_ffc_params(k1, IN_CHANNEL, LENGTH),
        fuse=init_fuse_params(k2, IN_CHANNEL * 4, 10),
        block=init_block_params(k3, 10, 24, 15, 2, 24, in_len=LENGTH // 4),
        oc1_w=kaiming_uniform(k4, (18, 24, 1), 24),
        oc1_b=jnp.zeros((18,), jnp.float32),
        oc2_w=kaiming_uniform(k5, (CLASS_NUM, 18, 1), 18),
        oc2_b=jnp.zeros((CLASS_NUM,), jnp.float32),
    )


# ----------------------------------------------------------------------------
# Pure-JAX (init-time / reference only) layer pieces used for folding.
# ----------------------------------------------------------------------------
def bn_apply(x, scale, shift):                    # eval-mode BatchNorm1d affine
    return x * scale[None, :, None] + shift[None, :, None]


def avgpool3(x):                                  # AvgPool1d(kernel_size=3, stride=1)
    return (x[:, :, :-2] + x[:, :, 1:-1] + x[:, :, 2:]) / 3.0


def conv1d_ref(x, w_dense, bias=None, stride=1, padding=0):
    out = jax.lax.conv_general_dilated(
        x, w_dense, window_strides=(stride,), padding=[(padding, padding)],
        dimension_numbers=('NCH', 'OIH', 'NCH'))
    if bias is not None:
        out = out + bias[None, :, None]
    return out


def adaptive_avg_pool_ref(x, out_len):            # AdaptiveAvgPool1d
    _, _, L = x.shape
    cols = []
    for i in range(out_len):
        s = (i * L) // out_len
        e = -((-(i + 1) * L) // out_len)          # ceil
        cols.append(jnp.mean(x[:, :, s:e], axis=-1))
    return jnp.stack(cols, axis=-1)


def adaptive_max_pool_ref(x, out_len):            # AdaptiveMaxPool1d
    _, _, L = x.shape
    cols = []
    for i in range(out_len):
        s = (i * L) // out_len
        e = -((-(i + 1) * L) // out_len)
        cols.append(jnp.max(x[:, :, s:e], axis=-1))
    return jnp.stack(cols, axis=-1)


def _adaptive_pool_bounds(l_in, l_out):           # window [lo, hi] per output pos
    lo, hi = [], []
    for i in range(l_out):
        s = (i * l_in) // l_out
        e = -((-(i + 1) * l_in) // l_out)
        lo.append(s)
        hi.append(e - 1)
    return np.asarray(lo), np.asarray(hi)


def gcu_forward_ref(x, p):
    n, c, l = x.shape
    y = x.reshape(n * c, l) @ p['dft']
    yi = y[:, :l].reshape(n, c, l)
    yr = y[:, l:].reshape(n, c, l)
    y1 = jnp.concatenate([yi, yr], axis=1)
    y2 = jnp.concatenate([yi, yr], axis=-1).reshape(n, 2 * c, l)

    def branch(yb, bp):
        yb = bn_apply(yb, *bp['bn_pre'])
        yb = avgpool3(yb)
        yb = conv1d_ref(yb, bp['w_dense'], bp['bias'], stride=bp['stride'])
        return bn_apply(yb, *bp['bn_post'])

    return jnp.concatenate([branch(y1, p['conv1']), branch(y2, p['conv2'])], axis=1)


def _affine_fold(fn, in_dim):
    """Extract (W, b) such that fn(v) == v @ W + b for an affine fn on (n, in_dim)."""
    bias = fn(jnp.zeros((1, in_dim), jnp.float32))            # (1, out_dim)
    mat = fn(jnp.eye(in_dim, dtype=jnp.float32)) - bias       # (in_dim, out_dim)
    return mat, bias


def _pad2(a, rows=None, cols=None):
    r = a.shape[0] if rows is None else rows
    c = a.shape[1] if cols is None else cols
    return jnp.pad(a, ((0, r - a.shape[0]), (0, c - a.shape[1])))


def _pack_biases(B):
    """Concatenate all bias rows at 128-lane-aligned offsets into ONE f32 operand."""
    slots, cols, off = {}, [], 0
    for name in BIAS_ORDER:
        b = B[name]
        w = b.shape[1]
        wp = -(-w // 128) * 128
        slots[name] = (off, w)
        cols.append(jnp.pad(b, ((0, 0), (0, wp - w))))
        off += wp
    return jnp.concatenate(cols, axis=1).astype(jnp.float32), slots


# ----------------------------------------------------------------------------
# Fold the whole network into the matrices/biases consumed by the Pallas kernel.
# ----------------------------------------------------------------------------
def build_folded_params(p):
    ffc, fuse, blk = p['ffc'], p['fuse'], p['block']
    ca = blk['ca']
    W, B = {}, {}

    d_in = IN_CHANNEL * LENGTH                                   # 256

    # --- ffc: GCU -> AdaptiveMaxPool1d.  The two window taps share the same LHS,
    #     so they are fused into ONE (256, 1024) matmul; the kernel takes the
    #     elementwise max of the two 512-lane halves. ---------------------------
    probe = gcu_forward_ref(jnp.zeros((1, IN_CHANNEL, LENGTH), jnp.float32), ffc['gcu'])
    c_gcu, l_gcu = probe.shape[1], probe.shape[2]                # 16, 29
    pool_out = ffc['pool_out']                                   # 32
    lo, hi = _adaptive_pool_bounds(l_gcu, pool_out)
    # TODO(synk): two taps cover adaptive-max windows of size <= 2 (holds whenever
    # the pool downsamples by < 2x); generalize the tap count if shapes change.
    assert int(np.max(hi - lo)) <= 1

    def seg_gcu_tap(idx):
        def fn(v):
            y = gcu_forward_ref(v.reshape(v.shape[0], IN_CHANNEL, LENGTH), ffc['gcu'])
            return y[:, :, idx].reshape(v.shape[0], -1)
        return fn

    w_lo, b_lo = _affine_fold(seg_gcu_tap(lo), d_in)
    w_hi, b_hi = _affine_fold(seg_gcu_tap(hi), d_in)
    W['a'] = jnp.concatenate([w_lo, w_hi], axis=1)               # (256, 1024)
    B['a'] = jnp.concatenate([b_lo, b_hi], axis=1)               # (1, 1024)

    # --- ffc: Linear(32, 5)  (ReLU in-kernel; Dropout = id) --------------------
    n_lin1 = ffc['lin1_w'].shape[0]                              # 5
    def seg_b(v):
        y = v.reshape(v.shape[0], c_gcu, pool_out)
        y = jnp.einsum('ncl,kl->nck', y, ffc['lin1_w']) + ffc['lin1_b'][None, None, :]
        return y.reshape(v.shape[0], -1)
    W['b'], B['b'] = _affine_fold(seg_b, c_gcu * pool_out)

    # --- ffc: Linear(5, 16) + BatchNorm1d(16)  (h_sigmoid in-kernel) -----------
    l_blk = ffc['lin2_w'].shape[0]                               # 16
    def seg_c(v):
        y = v.reshape(v.shape[0], c_gcu, n_lin1)
        y = jnp.einsum('nck,mk->ncm', y, ffc['lin2_w']) + ffc['lin2_b'][None, None, :]
        y = bn_apply(y, *ffc['bn'])
        return y.reshape(v.shape[0], -1)
    W['c'], B['c'] = _affine_fold(seg_c, c_gcu * n_lin1)

    # --- channel_fuse: Conv1d(16, 10, 1) + BN(10)  (h_swish in-kernel) ---------
    n_fuse = fuse['w'].shape[0]                                  # 10
    def seg_d(v):
        x = v.reshape(v.shape[0], c_gcu, l_blk)
        y = bn_apply(conv1d_ref(x, fuse['w'], fuse['b']), *fuse['bn'])
        return y.reshape(v.shape[0], -1)
    W['d'], B['d'] = _affine_fold(seg_d, c_gcu * l_blk)

    # --- Block expand conv: Conv1d(10, 24, 1, bias=False) + BN  (ReLU in-kernel)
    exp = blk['conv_w'].shape[0]                                 # 24
    def seg_e(v):
        x = v.reshape(v.shape[0], n_fuse, l_blk)
        y = bn_apply(conv1d_ref(x, blk['conv_w'], None), *blk['conv_bn'])
        return y.reshape(v.shape[0], -1)
    W['e'], B['e'] = _affine_fold(seg_e, n_fuse * l_blk)

    # --- Block depthwise conv (k=15, s=2, pad=7, groups=exp) + BN -> u (linear) -
    l_dw = ca['gcu']['dft'].shape[0]                             # 8
    def seg_u(v):
        x = v.reshape(v.shape[0], exp, l_blk)
        y = conv1d_ref(x, blk['dw_dense'], blk['dw_b'],
                       stride=blk['dw_stride'], padding=blk['dw_pad'])
        y = bn_apply(y, *blk['dw_bn'])
        return y.reshape(v.shape[0], -1)
    W['u'], B['u'] = _affine_fold(seg_u, exp * l_blk)

    # --- agca squeeze: GCU -> AdaptiveAvgPool1d(16) -> Linear(16,1) -> grouped
    #     Conv1d(4*exp, exp*16, 1, groups=4)   (ReLU in-kernel; Dropout = id) ---
    def seg_f(v):
        u = v.reshape(v.shape[0], exp, l_dw)
        y = gcu_forward_ref(u, ca['gcu'])                        # (n, 4*exp, l_dw-4)
        z = adaptive_avg_pool_ref(y, ca['d'])                    # (n, 4*exp, 16)
        z = (jnp.einsum('ncl,kl->nck', z, ca['cov_lin_w'])
             + ca['cov_lin_b'][None, None, :])                   # (n, 4*exp, 1)
        z = conv1d_ref(z, ca['cov_conv_w'], ca['cov_conv_b'])    # (n, exp*16, 1)
        return z.reshape(v.shape[0], -1)
    W['f'], B['f'] = _affine_fold(seg_f, exp * l_dw)

    # --- agca SE MLP (plain linears; degenerate dims zero-padded below) --------
    W['g'], B['g'] = ca['se1_w'].T, ca['se1_b'][None, :]         # (384, 6), (1, 6)
    W['h'], B['h'] = ca['se2_w'].T, ca['se2_b'][None, :]         # (6, 24), (1, 24)

    # --- broadcast attention (B, exp) over the length axis: out.view(B,C,1)*u --
    w_exp_np = np.zeros((exp, exp * l_dw), np.float32)
    for c in range(exp):
        w_exp_np[c, c * l_dw:(c + 1) * l_dw] = 1.0
    W['exp'] = jnp.asarray(w_exp_np)                             # (24, 192)

    # --- Block pointwise conv: Conv1d(24, 24, 1) + BN  (ReLU in-kernel) --------
    def seg_i(v):
        x = v.reshape(v.shape[0], exp, l_dw)
        y = bn_apply(conv1d_ref(x, blk['pw_w'], blk['pw_b']), *blk['pw_bn'])
        return y.reshape(v.shape[0], -1)
    W['i'], B['i'] = _affine_fold(seg_i, exp * l_dw)

    # --- global adaptive_avg_pool1d(1) + out_conv2[0]  (h_swish in-kernel) -----
    def seg_j(v):
        y = v.reshape(v.shape[0], exp, l_dw).mean(axis=-1)
        return y @ p['oc1_w'][:, :, 0].T + p['oc1_b'][None, :]
    W['j'], B['j'] = _affine_fold(seg_j, exp * l_dw)             # (192, 18)

    # --- out_conv2[3], padded to a lane-dense 128-wide output ------------------
    W['k'] = _pad2(p['oc2_w'][:, :, 0].T, cols=OUT_PAD)          # (18, 128)
    B['k'] = _pad2(p['oc2_b'][None, :], cols=OUT_PAD)            # (1, 128)

    # --- Zero-pad degenerate inner dims (free at init; keeps vreg layouts clean,
    #     padded channels feed zero rows downstream so semantics are unchanged) -
    W['g'] = _pad2(W['g'], cols=SE_HID_PAD)
    B['g'] = _pad2(B['g'], cols=SE_HID_PAD)
    W['h'] = _pad2(W['h'], rows=SE_HID_PAD, cols=ATT_PAD)
    B['h'] = _pad2(B['h'], cols=ATT_PAD)
    W['exp'] = _pad2(W['exp'], rows=ATT_PAD)
    W['j'] = _pad2(W['j'], cols=OC1_PAD)
    B['j'] = _pad2(B['j'], cols=OC1_PAD)
    W['k'] = _pad2(W['k'], rows=OC1_PAD)

    bias_pack, bias_slots = _pack_biases(B)
    weights = {k: v.astype(jnp.bfloat16) for k, v in W.items()}
    return dict(w=weights, bias_pack=bias_pack, bias_slots=bias_slots)


# ----------------------------------------------------------------------------
# The fused forward chain (shared by the Pallas kernel and the jnp reference).
# ----------------------------------------------------------------------------
def _forward_chain(v, W, B):
    """v: (rows, 256) bf16; W/B: name -> (already loaded) weight / bias arrays."""
    def mm(a, name, bias=True):
        y = jnp.dot(a.astype(jnp.bfloat16), W[name],
                    preferred_element_type=jnp.float32)
        if bias:
            y = y + B[name]
        return y

    relu = lambda t: jnp.maximum(t, 0.0)
    hsig = lambda t: jnp.clip(t + 3.0, 0.0, 6.0) * (1.0 / 6.0)
    hswish = lambda t: t * hsig(t)

    # ffc (Global_Convolution): GCU + AdaptiveMaxPool1d (fused taps) + MLP + BN
    ya = mm(v, 'a')
    half = ya.shape[1] // 2
    pool = jnp.maximum(ya[:, :half], ya[:, half:])
    y = relu(mm(pool, 'b'))
    y = hsig(mm(y, 'c'))
    # channel_fuse
    y = hswish(mm(y, 'd'))
    # Block: expand conv -> depthwise conv (u) -> agca attention -> pointwise conv
    y = relu(mm(y, 'e'))
    u = mm(y, 'u')
    y = relu(mm(u, 'f'))
    y = relu(mm(y, 'g'))
    att = hsig(mm(y, 'h'))
    q = mm(att, 'exp', bias=False) * u
    y = relu(mm(q, 'i'))
    # tail: global avg pool + out_conv2
    y = hswish(mm(y, 'j'))
    return mm(y, 'k')                                            # (rows, OUT_PAD)


def _make_kernel(bias_slots):
    n_w = len(W_ORDER)

    def kernel(x_ref, *refs):
        w_refs, bias_ref, o_ref = refs[:n_w], refs[n_w], refs[n_w + 1]
        W = {name: r[...] for name, r in zip(W_ORDER, w_refs)}
        B = {name: bias_ref[0:1, off:off + w]                    # static, 128-aligned
             for name, (off, w) in bias_slots.items()}
        o_ref[...] = _forward_chain(x_ref[...], W, B)

    return kernel


def _tpu_tuning():
    """(row-block target, TensorCores per chip) inferred from the device kind."""
    try:
        kind = jax.devices()[0].device_kind.lower()
    except Exception:
        kind = ''
    if any(v in kind for v in ('v2', 'v3', 'v4', 'v5')):
        return 128, 1          # 128-deep MXUs, single TensorCore
    if 'v7' in kind:
        return 256, 2          # 256-deep MXUs, two TensorCores
    return 256, 1              # v6e default


def gcanet_forward(x, folded):
    b = x.shape[0]
    d_in = IN_CHANNEL * LENGTH
    v0 = x.reshape(b, -1).astype(jnp.bfloat16)       # bf16 input: halves HBM read

    target_rows, cores = _tpu_tuning()
    b8 = -(-b // 8) * 8                              # sublane-align rows
    row_block = min(target_rows, b8)
    steps = -(-b8 // row_block)
    if steps > 1:                                    # balance across TensorCores
        steps = -(-steps // cores) * cores
    bp = steps * row_block
    if bp != b:
        v0 = jnp.pad(v0, ((0, bp - b), (0, 0)))

    weights = [folded['w'][k] for k in W_ORDER]
    bias_pack = folded['bias_pack']

    in_specs = ([pl.BlockSpec((row_block, d_in), lambda i: (i, 0))] +
                [pl.BlockSpec(a.shape, lambda i: (0, 0)) for a in weights] +
                [pl.BlockSpec(bias_pack.shape, lambda i: (0, 0))])

    out = pl.pallas_call(
        _make_kernel(folded['bias_slots']),
        out_shape=jax.ShapeDtypeStruct((bp, OUT_PAD), jnp.float32),
        grid=(steps,),
        in_specs=in_specs,
        out_specs=pl.BlockSpec((row_block, OUT_PAD), lambda i: (i, 0)),
        compiler_params=pltpu.CompilerParams(
            dimension_semantics=("parallel",),
            vmem_limit_bytes=32 * 1024 * 1024),      # raise v5e's 16 MiB default
    )(v0, *weights, bias_pack)
    return out[:b, :CLASS_NUM]


# ----------------------------------------------------------------------------
# References for validation.
# ----------------------------------------------------------------------------
def gcanet_folded_reference(x, folded):
    """Same bf16 folded weights, plain XLA chain (checks the kernel itself)."""
    v = x.reshape(x.shape[0], -1).astype(jnp.bfloat16)
    B = {name: folded['bias_pack'][0:1, off:off + w]
         for name, (off, w) in folded['bias_slots'].items()}
    return _forward_chain(v, folded['w'], B)[:, :CLASS_NUM]


def gcanet_unfolded_reference(x, p):
    """Per-layer f32 eval-mode forward (no folding) -- bounds bf16 fold drift."""
    relu = lambda t: jnp.maximum(t, 0.0)
    hsig = lambda t: jnp.clip(t + 3.0, 0.0, 6.0) * (1.0 / 6.0)
    hswish = lambda t: t * hsig(t)
    ffc, fuse, blk = p['ffc'], p['fuse'], p['block']
    ca = blk['ca']
    n = x.shape[0]

    # ffc (Global_Convolution)
    y = gcu_forward_ref(x, ffc['gcu'])
    y = adaptive_max_pool_ref(y, ffc['pool_out'])
    y = relu(jnp.einsum('ncl,kl->nck', y, ffc['lin1_w']) + ffc['lin1_b'][None, None, :])
    y = jnp.einsum('nck,mk->ncm', y, ffc['lin2_w']) + ffc['lin2_b'][None, None, :]
    y = hsig(bn_apply(y, *ffc['bn']))
    # channel_fuse
    y = hswish(bn_apply(conv1d_ref(y, fuse['w'], fuse['b']), *fuse['bn']))
    # Block
    y = relu(bn_apply(conv1d_ref(y, blk['conv_w'], None), *blk['conv_bn']))
    u = bn_apply(conv1d_ref(y, blk['dw_dense'], blk['dw_b'],
                            stride=blk['dw_stride'], padding=blk['dw_pad']),
                 *blk['dw_bn'])
    # agca attention
    g = gcu_forward_ref(u, ca['gcu'])
    z = adaptive_avg_pool_ref(g, ca['d'])
    z = jnp.einsum('ncl,kl->nck', z, ca['cov_lin_w']) + ca['cov_lin_b'][None, None, :]
    z = relu(conv1d_ref(z, ca['cov_conv_w'], ca['cov_conv_b']))
    s = z.reshape(n, -1)
    s = relu(s @ ca['se1_w'].T + ca['se1_b'][None, :])
    s = hsig(s @ ca['se2_w'].T + ca['se2_b'][None, :])
    q = s[:, :, None] * u
    y = relu(bn_apply(conv1d_ref(q, blk['pw_w'], blk['pw_b']), *blk['pw_bn']))
    # tail: global avg pool + out_conv2
    y = y.mean(axis=-1)
    y = hswish(y @ p['oc1_w'][:, :, 0].T + p['oc1_b'][None, :])
    return y @ p['oc2_w'][:, :, 0].T + p['oc2_b'][None, :]


if __name__ == "__main__":
    params = init_gcanet_params(jax.random.PRNGKey(42))
    folded = build_folded_params(params)

    x = jax.random.normal(jax.random.PRNGKey(0), (2, IN_CHANNEL, LENGTH), jnp.float32)

    fwd = jax.jit(lambda inp: gcanet_forward(inp, folded))
    out = jax.block_until_ready(fwd(x))

    assert out.shape == (2, CLASS_NUM), out.shape
    assert bool(jnp.all(jnp.isfinite(out)))

    # Kernel vs identical-math XLA chain (same bf16 folded weights).
    ref_folded = gcanet_folded_reference(x, folded)
    assert bool(jnp.allclose(out, ref_folded, atol=2e-2, rtol=2e-2))

    # Kernel vs unfolded per-layer f32 forward (bounds bf16 folding drift).
    ref_full = gcanet_unfolded_reference(x, params)
    assert bool(jnp.allclose(out, ref_full, atol=1e-1, rtol=1e-1)), (
        float(jnp.max(jnp.abs(out - ref_full))))

    print("KERNEL_OK")
</pallas_src>

<mosaic_0001>
module attributes {stable_mosaic.version = 11 : i64} {
  func.func @kernel(%arg0: i32, %arg1: memref<8x256xbf16, #tpu.memory_space<vmem>>, %arg2: memref<256x1024xbf16, #tpu.memory_space<vmem>>, %arg3: memref<512x80xbf16, #tpu.memory_space<vmem>>, %arg4: memref<80x256xbf16, #tpu.memory_space<vmem>>, %arg5: memref<256x160xbf16, #tpu.memory_space<vmem>>, %arg6: memref<160x384xbf16, #tpu.memory_space<vmem>>, %arg7: memref<384x192xbf16, #tpu.memory_space<vmem>>, %arg8: memref<192x384xbf16, #tpu.memory_space<vmem>>, %arg9: memref<384x16xbf16, #tpu.memory_space<vmem>>, %arg10: memref<16x32xbf16, #tpu.memory_space<vmem>>, %arg11: memref<32x192xbf16, #tpu.memory_space<vmem>>, %arg12: memref<192x192xbf16, #tpu.memory_space<vmem>>, %arg13: memref<192x32xbf16, #tpu.memory_space<vmem>>, %arg14: memref<32x128xbf16, #tpu.memory_space<vmem>>, %arg15: memref<1x3456xf32, #tpu.memory_space<vmem>>, %arg16: memref<8x128xf32, #tpu.memory_space<vmem>>) attributes {dimension_semantics = [#tpu.dimension_semantics<parallel>], iteration_bounds = array<i64: 1>, scalar_prefetch = 0 : i64, scratch_operands = 0 : i64, tpu.core_type = #tpu.core_type<tc>, window_params = [{transform_indices = @transform_0, window_bounds = array<i64: 8, 256>}, {pipeline_mode = #tpu.pipeline_mode<synchronous>, transform_indices = @transform_1, window_bounds = array<i64: 256, 1024>}, {pipeline_mode = #tpu.pipeline_mode<synchronous>, transform_indices = @transform_2, window_bounds = array<i64: 512, 80>}, {pipeline_mode = #tpu.pipeline_mode<synchronous>, transform_indices = @transform_3, window_bounds = array<i64: 80, 256>}, {pipeline_mode = #tpu.pipeline_mode<synchronous>, transform_indices = @transform_4, window_bounds = array<i64: 256, 160>}, {pipeline_mode = #tpu.pipeline_mode<synchronous>, transform_indices = @transform_5, window_bounds = array<i64: 160, 384>}, {pipeline_mode = #tpu.pipeline_mode<synchronous>, transform_indices = @transform_6, window_bounds = array<i64: 384, 192>}, {pipeline_mode = #tpu.pipeline_mode<synchronous>, transform_indices = @transform_7, window_bounds = array<i64: 192, 384>}, {pipeline_mode = #tpu.pipeline_mode<synchronous>, transform_indices = @transform_8, window_bounds = array<i64: 384, 16>}, {pipeline_mode = #tpu.pipeline_mode<synchronous>, transform_indices = @transform_9, window_bounds = array<i64: 16, 32>}, {pipeline_mode = #tpu.pipeline_mode<synchronous>, transform_indices = @transform_10, window_bounds = array<i64: 32, 192>}, {pipeline_mode = #tpu.pipeline_mode<synchronous>, transform_indices = @transform_11, window_bounds = array<i64: 192, 192>}, {pipeline_mode = #tpu.pipeline_mode<synchronous>, transform_indices = @transform_12, window_bounds = array<i64: 192, 32>}, {pipeline_mode = #tpu.pipeline_mode<synchronous>, transform_indices = @transform_13, window_bounds = array<i64: 32, 128>}, {pipeline_mode = #tpu.pipeline_mode<synchronous>, transform_indices = @transform_14, window_bounds = array<i64: 1, 3456>}, {transform_indices = @transform_15, window_bounds = array<i64: 8, 128>}]} {
    %c0 = arith.constant 0 : index
    %c0_0 = arith.constant 0 : index
    %0 = vector.load %arg2[%c0, %c0_0] : memref<256x1024xbf16, #tpu.memory_space<vmem>>, vector<256x1024xbf16>
    %c0_1 = arith.constant 0 : index
    %c0_2 = arith.constant 0 : index
    %1 = vector.load %arg3[%c0_1, %c0_2] : memref<512x80xbf16, #tpu.memory_space<vmem>>, vector<512x80xbf16>
    %c0_3 = arith.constant 0 : index
    %c0_4 = arith.constant 0 : index
    %2 = vector.load %arg4[%c0_3, %c0_4] : memref<80x256xbf16, #tpu.memory_space<vmem>>, vector<80x256xbf16>
    %c0_5 = arith.constant 0 : index
    %c0_6 = arith.constant 0 : index
    %3 = vector.load %arg5[%c0_5, %c0_6] : memref<256x160xbf16, #tpu.memory_space<vmem>>, vector<256x160xbf16>
    %c0_7 = arith.constant 0 : index
    %c0_8 = arith.constant 0 : index
    %4 = vector.load %arg6[%c0_7, %c0_8] : memref<160x384xbf16, #tpu.memory_space<vmem>>, vector<160x384xbf16>
    %c0_9 = arith.constant 0 : index
    %c0_10 = arith.constant 0 : index
    %5 = vector.load %arg7[%c0_9, %c0_10] : memref<384x192xbf16, #tpu.memory_space<vmem>>, vector<384x192xbf16>
    %c0_11 = arith.constant 0 : index
    %c0_12 = arith.constant 0 : index
    %6 = vector.load %arg8[%c0_11, %c0_12] : memref<192x384xbf16, #tpu.memory_space<vmem>>, vector<192x384xbf16>
    %c0_13 = arith.constant 0 : index
    %c0_14 = arith.constant 0 : index
    %7 = vector.load %arg9[%c0_13, %c0_14] : memref<384x16xbf16, #tpu.memory_space<vmem>>, vector<384x16xbf16>
    %c0_15 = arith.constant 0 : index
    %c0_16 = arith.constant 0 : index
    %8 = vector.load %arg10[%c0_15, %c0_16] : memref<16x32xbf16, #tpu.memory_space<vmem>>, vector<16x32xbf16>
    %c0_17 = arith.constant 0 : index
    %c0_18 = arith.constant 0 : index
    %9 = vector.load %arg11[%c0_17, %c0_18] : memref<32x192xbf16, #tpu.memory_space<vmem>>, vector<32x192xbf16>
    %c0_19 = arith.constant 0 : index
    %c0_20 = arith.constant 0 : index
    %10 = vector.load %arg12[%c0_19, %c0_20] : memref<192x192xbf16, #tpu.memory_space<vmem>>, vector<192x192xbf16>
    %c0_21 = arith.constant 0 : index
    %c0_22 = arith.constant 0 : index
    %11 = vector.load %arg13[%c0_21, %c0_22] : memref<192x32xbf16, #tpu.memory_space<vmem>>, vector<192x32xbf16>
    %c0_23 = arith.constant 0 : index
    %c0_24 = arith.constant 0 : index
    %12 = vector.load %arg14[%c0_23, %c0_24] : memref<32x128xbf16, #tpu.memory_space<vmem>>, vector<32x128xbf16>
    %c0_25 = arith.constant 0 : index
    %c0_26 = arith.constant 0 : index
    %13 = vector.load %arg15[%c0_25, %c0_26] : memref<1x3456xf32, #tpu.memory_space<vmem>>, vector<1x1024xf32>
    %c0_27 = arith.constant 0 : index
    %c1024 = arith.constant 1024 : index
    %14 = vector.load %arg15[%c0_27, %c1024] : memref<1x3456xf32, #tpu.memory_space<vmem>>, vector<1x80xf32>
    %c0_28 = arith.constant 0 : index
    %c1152 = arith.constant 1152 : index
    %15 = vector.load %arg15[%c0_28, %c1152] : memref<1x3456xf32, #tpu.memory_space<vmem>>, vector<1x256xf32>
    %c0_29 = arith.constant 0 : index
    %c1408 = arith.constant 1408 : index
    %16 = vector.load %arg15[%c0_29, %c1408] : memref<1x3456xf32, #tpu.memory_space<vmem>>, vector<1x160xf32>
    %c0_30 = arith.constant 0 : index
    %c1664 = arith.constant 1664 : index
    %17 = vector.load %arg15[%c0_30, %c1664] : memref<1x3456xf32, #tpu.memory_space<vmem>>, vector<1x384xf32>
    %c0_31 = arith.constant 0 : index
    %c2048 = arith.constant 2048 : index
    %18 = vector.load %arg15[%c0_31, %c2048] : memref<1x3456xf32, #tpu.memory_space<vmem>>, vector<1x192xf32>
    %c0_32 = arith.constant 0 : index
    %c2304 = arith.constant 2304 : index
    %19 = vector.load %arg15[%c0_32, %c2304] : memref<1x3456xf32, #tpu.memory_space<vmem>>, vector<1x384xf32>
    %c0_33 = arith.constant 0 : index
    %c2688 = arith.constant 2688 : index
    %20 = vector.load %arg15[%c0_33, %c2688] : memref<1x3456xf32, #tpu.memory_space<vmem>>, vector<1x16xf32>
    %c0_34 = arith.constant 0 : index
    %c2816 = arith.constant 2816 : index
    %21 = vector.load %arg15[%c0_34, %c2816] : memref<1x3456xf32, #tpu.memory_space<vmem>>, vector<1x32xf32>
    %c0_35 = arith.constant 0 : index
    %c2944 = arith.constant 2944 : index
    %22 = vector.load %arg15[%c0_35, %c2944] : memref<1x3456xf32, #tpu.memory_space<vmem>>, vector<1x192xf32>
    %c0_36 = arith.constant 0 : index
    %c3200 = arith.constant 3200 : index
    %23 = vector.load %arg15[%c0_36, %c3200] : memref<1x3456xf32, #tpu.memory_space<vmem>>, vector<1x32xf32>
    %c0_37 = arith.constant 0 : index
    %c3328 = arith.constant 3328 : index
    %24 = vector.load %arg15[%c0_37, %c3328] : memref<1x3456xf32, #tpu.memory_space<vmem>>, vector<1x128xf32>
    %c0_38 = arith.constant 0 : index
    %c0_39 = arith.constant 0 : index
    %25 = vector.load %arg1[%c0_38, %c0_39] : memref<8x256xbf16, #tpu.memory_space<vmem>>, vector<8x256xbf16>
    %cst = arith.constant dense<0.000000e+00> : vector<8x1024xf32>
    %26 = tpu.matmul %25, %0, %cst {dimension_numbers = #tpu.dot_dimension_numbers<[1], [0], [0], [1], [0, 0, 1, 1], [], []>} : vector<8x256xbf16>, vector<256x1024xbf16>, vector<8x1024xf32> -> vector<8x1024xf32>
    %27 = vector.broadcast %13 : vector<1x1024xf32> to vector<8x1024xf32>
    %28 = arith.addf %26, %27 : vector<8x1024xf32>
    %29 = vector.extract_strided_slice %28 {offsets = [0, 0], sizes = [8, 512], strides = [1, 1]} : vector<8x1024xf32> to vector<8x512xf32>
    %30 = vector.extract_strided_slice %28 {offsets = [0, 512], sizes = [8, 512], strides = [1, 1]} : vector<8x1024xf32> to vector<8x512xf32>
    %31 = arith.maximumf %29, %30 : vector<8x512xf32>
    %32 = arith.truncf %31 : vector<8x512xf32> to vector<8x512xbf16>
    %cst_40 = arith.constant dense<0.000000e+00> : vector<8x80xf32>
    %33 = tpu.matmul %32, %1, %cst_40 {dimension_numbers = #tpu.dot_dimension_numbers<[1], [0], [0], [1], [0, 0, 1, 1], [], []>} : vector<8x512xbf16>, vector<512x80xbf16>, vector<8x80xf32> -> vector<8x80xf32>
    %34 = vector.broadcast %14 : vector<1x80xf32> to vector<8x80xf32>
    %35 = arith.addf %33, %34 : vector<8x80xf32>
    %cst_41 = arith.constant 0.000000e+00 : f32
    %36 = vector.broadcast %cst_41 : f32 to vector<8x80xf32>
    %37 = arith.maximumf %35, %36 : vector<8x80xf32>
    %38 = arith.truncf %37 : vector<8x80xf32> to vector<8x80xbf16>
    %cst_42 = arith.constant dense<0.000000e+00> : vector<8x256xf32>
    %39 = tpu.matmul %38, %2, %cst_42 {dimension_numbers = #tpu.dot_dimension_numbers<[1], [0], [0], [1], [0, 0, 1, 1], [], []>} : vector<8x80xbf16>, vector<80x256xbf16>, vector<8x256xf32> -> vector<8x256xf32>
    %40 = vector.broadcast %15 : vector<1x256xf32> to vector<8x256xf32>
    %41 = arith.addf %39, %40 : vector<8x256xf32>
    %cst_43 = arith.constant 3.000000e+00 : f32
    %42 = vector.broadcast %cst_43 : f32 to vector<8x256xf32>
    %43 = arith.addf %41, %42 : vector<8x256xf32>
    %cst_44 = arith.constant 0.000000e+00 : f32
    %cst_45 = arith.constant 6.000000e+00 : f32
    %44 = vector.broadcast %cst_44 : f32 to vector<8x256xf32>
    %45 = arith.maximumf %44, %43 : vector<8x256xf32>
    %46 = vector.broadcast %cst_45 : f32 to vector<8x256xf32>
    %47 = arith.minimumf %46, %45 : vector<8x256xf32>
    %cst_46 = arith.constant 0.166666672 : f32
    %48 = vector.broadcast %cst_46 : f32 to vector<8x256xf32>
    %49 = arith.mulf %47, %48 : vector<8x256xf32>
    %50 = arith.truncf %49 : vector<8x256xf32> to vector<8x256xbf16>
    %cst_47 = arith.constant dense<0.000000e+00> : vector<8x160xf32>
    %51 = tpu.matmul %50, %3, %cst_47 {dimension_numbers = #tpu.dot_dimension_numbers<[1], [0], [0], [1], [0, 0, 1, 1], [], []>} : vector<8x256xbf16>, vector<256x160xbf16>, vector<8x160xf32> -> vector<8x160xf32>
    %52 = vector.broadcast %16 : vector<1x160xf32> to vector<8x160xf32>
    %53 = arith.addf %51, %52 : vector<8x160xf32>
    %cst_48 = arith.constant 3.000000e+00 : f32
    %54 = vector.broadcast %cst_48 : f32 to vector<8x160xf32>
    %55 = arith.addf %53, %54 : vector<8x160xf32>
    %cst_49 = arith.constant 0.000000e+00 : f32
    %cst_50 = arith.constant 6.000000e+00 : f32
    %56 = vector.broadcast %cst_49 : f32 to vector<8x160xf32>
    %57 = arith.maximumf %56, %55 : vector<8x160xf32>
    %58 = vector.broadcast %cst_50 : f32 to vector<8x160xf32>
    %59 = arith.minimumf %58, %57 : vector<8x160xf32>
    %cst_51 = arith.constant 0.166666672 : f32
    %60 = vector.broadcast %cst_51 : f32 to vector<8x160xf32>
    %61 = arith.mulf %59, %60 : vector<8x160xf32>
    %62 = arith.mulf %53, %61 : vector<8x160xf32>
    %63 = arith.truncf %62 : vector<8x160xf32> to vector<8x160xbf16>
    %cst_52 = arith.constant dense<0.000000e+00> : vector<8x384xf32>
    %64 = tpu.matmul %63, %4, %cst_52 {dimension_numbers = #tpu.dot_dimension_numbers<[1], [0], [0], [1], [0, 0, 1, 1], [], []>} : vector<8x160xbf16>, vector<160x384xbf16>, vector<8x384xf32> -> vector<8x384xf32>
    %65 = vector.broadcast %17 : vector<1x384xf32> to vector<8x384xf32>
    %66 = arith.addf %64, %65 : vector<8x384xf32>
    %cst_53 = arith.constant 0.000000e+00 : f32
    %67 = vector.broadcast %cst_53 : f32 to vector<8x384xf32>
    %68 = arith.maximumf %66, %67 : vector<8x384xf32>
    %69 = arith.truncf %68 : vector<8x384xf32> to vector<8x384xbf16>
    %cst_54 = arith.constant dense<0.000000e+00> : vector<8x192xf32>
    %70 = tpu.matmul %69, %5, %cst_54 {dimension_numbers = #tpu.dot_dimension_numbers<[1], [0], [0], [1], [0, 0, 1, 1], [], []>} : vector<8x384xbf16>, vector<384x192xbf16>, vector<8x192xf32> -> vector<8x192xf32>
    %71 = vector.broadcast %18 : vector<1x192xf32> to vector<8x192xf32>
    %72 = arith.addf %70, %71 : vector<8x192xf32>
    %73 = arith.truncf %72 : vector<8x192xf32> to vector<8x192xbf16>
    %cst_55 = arith.constant dense<0.000000e+00> : vector<8x384xf32>
    %74 = tpu.matmul %73, %6, %cst_55 {dimension_numbers = #tpu.dot_dimension_numbers<[1], [0], [0], [1], [0, 0, 1, 1], [], []>} : vector<8x192xbf16>, vector<192x384xbf16>, vector<8x384xf32> -> vector<8x384xf32>
    %75 = vector.broadcast %19 : vector<1x384xf32> to vector<8x384xf32>
    %76 = arith.addf %74, %75 : vector<8x384xf32>
    %cst_56 = arith.constant 0.000000e+00 : f32
    %77 = vector.broadcast %cst_56 : f32 to vector<8x384xf32>
    %78 = arith.maximumf %76, %77 : vector<8x384xf32>
    %79 = arith.truncf %78 : vector<8x384xf32> to vector<8x384xbf16>
    %cst_57 = arith.constant dense<0.000000e+00> : vector<8x16xf32>
    %80 = tpu.matmul %79, %7, %cst_57 {dimension_numbers = #tpu.dot_dimension_numbers<[1], [0], [0], [1], [0, 0, 1, 1], [], []>} : vector<8x384xbf16>, vector<384x16xbf16>, vector<8x16xf32> -> vector<8x16xf32>
    %81 = vector.broadcast %20 : vector<1x16xf32> to vector<8x16xf32>
    %82 = arith.addf %80, %81 : vector<8x16xf32>
    %cst_58 = arith.constant 0.000000e+00 : f32
    %83 = vector.broadcast %cst_58 : f32 to vector<8x16xf32>
    %84 = arith.maximumf %82, %83 : vector<8x16xf32>
    %85 = arith.truncf %84 : vector<8x16xf32> to vector<8x16xbf16>
    %cst_59 = arith.constant dense<0.000000e+00> : vector<8x32xf32>
    %86 = tpu.matmul %85, %8, %cst_59 {dimension_numbers = #tpu.dot_dimension_numbers<[1], [0], [0], [1], [0, 0, 1, 1], [], []>} : vector<8x16xbf16>, vector<16x32xbf16>, vector<8x32xf32> -> vector<8x32xf32>
    %87 = vector.broadcast %21 : vector<1x32xf32> to vector<8x32xf32>
    %88 = arith.addf %86, %87 : vector<8x32xf32>
    %cst_60 = arith.constant 3.000000e+00 : f32
    %89 = vector.broadcast %cst_60 : f32 to vector<8x32xf32>
    %90 = arith.addf %88, %89 : vector<8x32xf32>
    %cst_61 = arith.constant 0.000000e+00 : f32
    %cst_62 = arith.constant 6.000000e+00 : f32
    %91 = vector.broadcast %cst_61 : f32 to vector<8x32xf32>
    %92 = arith.maximumf %91, %90 : vector<8x32xf32>
    %93 = vector.broadcast %cst_62 : f32 to vector<8x32xf32>
    %94 = arith.minimumf %93, %92 : vector<8x32xf32>
    %cst_63 = arith.constant 0.166666672 : f32
    %95 = vector.broadcast %cst_63 : f32 to vector<8x32xf32>
    %96 = arith.mulf %94, %95 : vector<8x32xf32>
    %97 = arith.truncf %96 : vector<8x32xf32> to vector<8x32xbf16>
    %cst_64 = arith.constant dense<0.000000e+00> : vector<8x192xf32>
    %98 = tpu.matmul %97, %9, %cst_64 {dimension_numbers = #tpu.dot_dimension_numbers<[1], [0], [0], [1], [0, 0, 1, 1], [], []>} : vector<8x32xbf16>, vector<32x192xbf16>, vector<8x192xf32> -> vector<8x192xf32>
    %99 = arith.mulf %98, %72 : vector<8x192xf32>
    %100 = arith.truncf %99 : vector<8x192xf32> to vector<8x192xbf16>
    %cst_65 = arith.constant dense<0.000000e+00> : vector<8x192xf32>
    %101 = tpu.matmul %100, %10, %cst_65 {dimension_numbers = #tpu.dot_dimension_numbers<[1], [0], [0], [1], [0, 0, 1, 1], [], []>} : vector<8x192xbf16>, vector<192x192xbf16>, vector<8x192xf32> -> vector<8x192xf32>
    %102 = vector.broadcast %22 : vector<1x192xf32> to vector<8x192xf32>
    %103 = arith.addf %101, %102 : vector<8x192xf32>
    %cst_66 = arith.constant 0.000000e+00 : f32
    %104 = vector.broadcast %cst_66 : f32 to vector<8x192xf32>
    %105 = arith.maximumf %103, %104 : vector<8x192xf32>
    %106 = arith.truncf %105 : vector<8x192xf32> to vector<8x192xbf16>
    %cst_67 = arith.constant dense<0.000000e+00> : vector<8x32xf32>
    %107 = tpu.matmul %106, %11, %cst_67 {dimension_numbers = #tpu.dot_dimension_numbers<[1], [0], [0], [1], [0, 0, 1, 1], [], []>} : vector<8x192xbf16>, vector<192x32xbf16>, vector<8x32xf32> -> vector<8x32xf32>
    %108 = vector.broadcast %23 : vector<1x32xf32> to vector<8x32xf32>
    %109 = arith.addf %107, %108 : vector<8x32xf32>
    %cst_68 = arith.constant 3.000000e+00 : f32
    %110 = vector.broadcast %cst_68 : f32 to vector<8x32xf32>
    %111 = arith.addf %109, %110 : vector<8x32xf32>
    %cst_69 = arith.constant 0.000000e+00 : f32
    %cst_70 = arith.constant 6.000000e+00 : f32
    %112 = vector.broadcast %cst_69 : f32 to vector<8x32xf32>
    %113 = arith.maximumf %112, %111 : vector<8x32xf32>
    %114 = vector.broadcast %cst_70 : f32 to vector<8x32xf32>
    %115 = arith.minimumf %114, %113 : vector<8x32xf32>
    %cst_71 = arith.constant 0.166666672 : f32
    %116 = vector.broadcast %cst_71 : f32 to vector<8x32xf32>
    %117 = arith.mulf %115, %116 : vector<8x32xf32>
    %118 = arith.mulf %109, %117 : vector<8x32xf32>
    %119 = arith.truncf %118 : vector<8x32xf32> to vector<8x32xbf16>
    %cst_72 = arith.constant dense<0.000000e+00> : vector<8x128xf32>
    %120 = tpu.matmul %119, %12, %cst_72 {dimension_numbers = #tpu.dot_dimension_numbers<[1], [0], [0], [1], [0, 0, 1, 1], [], []>} : vector<8x32xbf16>, vector<32x128xbf16>, vector<8x128xf32> -> vector<8x128xf32>
    %121 = vector.broadcast %24 : vector<1x128xf32> to vector<8x128xf32>
    %122 = arith.addf %120, %121 : vector<8x128xf32>
    %c0_73 = arith.constant 0 : index
    %c0_74 = arith.constant 0 : index
    %123 = vector.load %arg16[%c0_73, %c0_74] : memref<8x128xf32, #tpu.memory_space<vmem>>, vector<8x128xf32>
    tpu.vector_store %arg16[%c0_73, %c0_74], %122 {strides = array<i32>} : memref<8x128xf32, #tpu.memory_space<vmem>>, vector<8x128xf32>,
    return
  }
  func.func @transform_0(%arg0: i32) -> (i32, i32) {
    %c0_i32 = arith.constant 0 : i32
    %c0_i32_0 = arith.constant 0 : i32
    return %arg0, %c0_i32 : i32, i32
  }
  func.func @transform_1(%arg0: i32) -> (i32, i32) {
    %c0_i32 = arith.constant 0 : i32
    %c0_i32_0 = arith.constant 0 : i32
    %c0_i32_1 = arith.constant 0 : i32
    return %c0_i32, %c0_i32_0 : i32, i32
  }
  func.func @transform_2(%arg0: i32) -> (i32, i32) {
    %c0_i32 = arith.constant 0 : i32
    %c0_i32_0 = arith.constant 0 : i32
    %c0_i32_1 = arith.constant 0 : i32
    return %c0_i32, %c0_i32_0 : i32, i32
  }
  func.func @transform_3(%arg0: i32) -> (i32, i32) {
    %c0_i32 = arith.constant 0 : i32
    %c0_i32_0 = arith.constant 0 : i32
    %c0_i32_1 = arith.constant 0 : i32
    return %c0_i32, %c0_i32_0 : i32, i32
  }
  func.func @transform_4(%arg0: i32) -> (i32, i32) {
    %c0_i32 = arith.constant 0 : i32
    %c0_i32_0 = arith.constant 0 : i32
    %c0_i32_1 = arith.constant 0 : i32
    return %c0_i32, %c0_i32_0 : i32, i32
  }
  func.func @transform_5(%arg0: i32) -> (i32, i32) {
    %c0_i32 = arith.constant 0 : i32
    %c0_i32_0 = arith.constant 0 : i32
    %c0_i32_1 = arith.constant 0 : i32
    return %c0_i32, %c0_i32_0 : i32, i32
  }
  func.func @transform_6(%arg0: i32) -> (i32, i32) {
    %c0_i32 = arith.constant 0 : i32
    %c0_i32_0 = arith.constant 0 : i32
    %c0_i32_1 = arith.constant 0 : i32
    return %c0_i32, %c0_i32_0 : i32, i32
  }
  func.func @transform_7(%arg0: i32) -> (i32, i32) {
    %c0_i32 = arith.constant 0 : i32
    %c0_i32_0 = arith.constant 0 : i32
    %c0_i32_1 = arith.constant 0 : i32
    return %c0_i32, %c0_i32_0 : i32, i32
  }
  func.func @transform_8(%arg0: i32) -> (i32, i32) {
    %c0_i32 = arith.constant 0 : i32
    %c0_i32_0 = arith.constant 0 : i32
    %c0_i32_1 = arith.constant 0 : i32
    return %c0_i32, %c0_i32_0 : i32, i32
  }
  func.func @transform_9(%arg0: i32) -> (i32, i32) {
    %c0_i32 = arith.constant 0 : i32
    %c0_i32_0 = arith.constant 0 : i32
    %c0_i32_1 = arith.constant 0 : i32
    return %c0_i32, %c0_i32_0 : i32, i32
  }
  func.func @transform_10(%arg0: i32) -> (i32, i32) {
    %c0_i32 = arith.constant 0 : i32
    %c0_i32_0 = arith.constant 0 : i32
    %c0_i32_1 = arith.constant 0 : i32
    return %c0_i32, %c0_i32_0 : i32, i32
  }
  func.func @transform_11(%arg0: i32) -> (i32, i32) {
    %c0_i32 = arith.constant 0 : i32
    %c0_i32_0 = arith.constant 0 : i32
    %c0_i32_1 = arith.constant 0 : i32
    return %c0_i32, %c0_i32_0 : i32, i32
  }
  func.func @transform_12(%arg0: i32) -> (i32, i32) {
    %c0_i32 = arith.constant 0 : i32
    %c0_i32_0 = arith.constant 0 : i32
    %c0_i32_1 = arith.constant 0 : i32
    return %c0_i32, %c0_i32_0 : i32, i32
  }
  func.func @transform_13(%arg0: i32) -> (i32, i32) {
    %c0_i32 = arith.constant 0 : i32
    %c0_i32_0 = arith.constant 0 : i32
    %c0_i32_1 = arith.constant 0 : i32
    return %c0_i32, %c0_i32_0 : i32, i32
  }
  func.func @transform_14(%arg0: i32) -> (i32, i32) {
    %c0_i32 = arith.constant 0 : i32
    %c0_i32_0 = arith.constant 0 : i32
    %c0_i32_1 = arith.constant 0 : i32
    return %c0_i32, %c0_i32_0 : i32, i32
  }
  func.func @transform_15(%arg0: i32) -> (i32, i32) {
    %c0_i32 = arith.constant 0 : i32
    %c0_i32_0 = arith.constant 0 : i32
    return %arg0, %c0_i32 : i32, i32
  }
}

</mosaic_0001>

<llo_original>
// kernel: _lambda_.1
$region0: #{_lambda_.1}
  #allocation0 [shape = 'u32[]', space=smem, size = 0x4, offset = 0x4, fixed_abs, tag = 'smem constant byte address 0x4 - core index']
  #allocation1 [shape = 'u32[144,128]{1,0:T(1,128)}', space=vmem, size = 0x12000, scoped, tag = 'internal scratch']
  %s0 = inlined_call_operand.vmem [shape: bf16[8,256], index: 0, kind: input, shape index: {}]
  %s1 = inlined_call_operand.vmem [shape: bf16[256,1024], index: 1, kind: input, shape index: {}]
  %s2 = inlined_call_operand.vmem [shape: bf16[512,80], index: 2, kind: input, shape index: {}]
  %s3 = inlined_call_operand.vmem [shape: bf16[80,256], index: 3, kind: input, shape index: {}]
  %s4 = inlined_call_operand.vmem [shape: bf16[256,160], index: 4, kind: input, shape index: {}]
  %s5 = inlined_call_operand.vmem [shape: bf16[160,384], index: 5, kind: input, shape index: {}]
  %s6 = inlined_call_operand.vmem [shape: bf16[384,192], index: 6, kind: input, shape index: {}]
  %s7 = inlined_call_operand.vmem [shape: bf16[192,384], index: 7, kind: input, shape index: {}]
  %s8 = inlined_call_operand.vmem [shape: bf16[384,16], index: 8, kind: input, shape index: {}]
  %s9 = inlined_call_operand.vmem [shape: bf16[16,32], index: 9, kind: input, shape index: {}]
  %s10 = inlined_call_operand.vmem [shape: bf16[32,192], index: 10, kind: input, shape index: {}]
  %s11 = inlined_call_operand.vmem [shape: bf16[192,192], index: 11, kind: input, shape index: {}]
  %s12 = inlined_call_operand.vmem [shape: bf16[192,32], index: 12, kind: input, shape index: {}]
  %s13 = inlined_call_operand.vmem [shape: bf16[32,128], index: 13, kind: input, shape index: {}]
  %s14 = inlined_call_operand.vmem [shape: f32[1,3456], index: 14, kind: input, shape index: {}]
  %s15 = inlined_call_operand.vmem [shape: f32[8,128], index: 15, kind: output, shape index: {}]
  %s16 = sld [smem:[#allocation0]]
  $region70: #{_lambda_.1} parent=0
    _
  %s18 = ssub.s32 1, %s16
  %s19 = scalar_select 0, %s18, %s16
  // Predicated region
  $region2: #{_lambda_.1} parent=0 // pred_check
    _
  $region3: #{_lambda_.1} parent=0 // pred_check_branch
    %21 = sbr.rel (0) target = $region5
  $region4: #{_lambda_.1} parent=0 // pred_region
    _
  $region5: #{_lambda_.1} parent=0 // pred_fallthru
    _
  // Predicated region
  $region6: #{_lambda_.1} parent=0 // pred_check
    _
  $region7: #{_lambda_.1} parent=0 // pred_check_branch
    %23 = sbr.rel (0) target = $region9
  $region8: #{_lambda_.1} parent=0 // pred_region
    _
  $region9: #{_lambda_.1} parent=0 // pred_fallthru
    _
  // Predicated region
  $region10: #{_lambda_.1} parent=0 // pred_check
    _
  $region11: #{_lambda_.1} parent=0 // pred_check_branch
    %25 = sbr.rel (0) target = $region13
  $region12: #{_lambda_.1} parent=0 // pred_region
    _
  $region13: #{_lambda_.1} parent=0 // pred_fallthru
    _
  // Predicated region
  $region14: #{_lambda_.1} parent=0 // pred_check
    _
  $region15: #{_lambda_.1} parent=0 // pred_check_branch
    %27 = sbr.rel (0) target = $region17
  $region16: #{_lambda_.1} parent=0 // pred_region
    _
  $region17: #{_lambda_.1} parent=0 // pred_fallthru
    _
  // Predicated region
  $region18: #{_lambda_.1} parent=0 // pred_check
    _
  $region19: #{_lambda_.1} parent=0 // pred_check_branch
    %29 = sbr.rel (0) target = $region21
  $region20: #{_lambda_.1} parent=0 // pred_region
    _
  $region21: #{_lambda_.1} parent=0 // pred_fallthru
    _
  // Predicated region
  $region22: #{_lambda_.1} parent=0 // pred_check
    _
  $region23: #{_lambda_.1} parent=0 // pred_check_branch
    %31 = sbr.rel (0) target = $region25
  $region24: #{_lambda_.1} parent=0 // pred_region
    _
  $region25: #{_lambda_.1} parent=0 // pred_fallthru
    _
  // Predicated region
  $region26: #{_lambda_.1} parent=0 // pred_check
    _
  $region27: #{_lambda_.1} parent=0 // pred_check_branch
    %33 = sbr.rel (0) target = $region29
  $region28: #{_lambda_.1} parent=0 // pred_region
    _
  $region29: #{_lambda_.1} parent=0 // pred_fallthru
    _
  // Predicated region
  $region30: #{_lambda_.1} parent=0 // pred_check
    _
  $region31: #{_lambda_.1} parent=0 // pred_check_branch
    %35 = sbr.rel (0) target = $region33
  $region32: #{_lambda_.1} parent=0 // pred_region
    _
  $region33: #{_lambda_.1} parent=0 // pred_fallthru
    _
  // Predicated region
  $region34: #{_lambda_.1} parent=0 // pred_check
    _
  $region35: #{_lambda_.1} parent=0 // pred_check_branch
    %37 = sbr.rel (0) target = $region37
  $region36: #{_lambda_.1} parent=0 // pred_region
    _
  $region37: #{_lambda_.1} parent=0 // pred_fallthru
    _
  // Predicated region
  $region38: #{_lambda_.1} parent=0 // pred_check
    _
  $region39: #{_lambda_.1} parent=0 // pred_check_branch
    %39 = sbr.rel (0) target = $region41
  $region40: #{_lambda_.1} parent=0 // pred_region
    _
  $region41: #{_lambda_.1} parent=0 // pred_fallthru
    _
  // Predicated region
  $region42: #{_lambda_.1} parent=0 // pred_check
    _
  $region43: #{_lambda_.1} parent=0 // pred_check_branch
    %41 = sbr.rel (0) target = $region45
  $region44: #{_lambda_.1} parent=0 // pred_region
    _
  $region45: #{_lambda_.1} parent=0 // pred_fallthru
    _
  // Predicated region
  $region46: #{_lambda_.1} parent=0 // pred_check
    _
  $region47: #{_lambda_.1} parent=0 // pred_check_branch
    %43 = sbr.rel (0) target = $region49
  $region48: #{_lambda_.1} parent=0 // pred_region
    _
  $region49: #{_lambda_.1} parent=0 // pred_fallthru
    _
  // Predicated region
  $region50: #{_lambda_.1} parent=0 // pred_check
    _
  $region51: #{_lambda_.1} parent=0 // pred_check_branch
    %45 = sbr.rel (0) target = $region53
  $region52: #{_lambda_.1} parent=0 // pred_region
    _
  $region53: #{_lambda_.1} parent=0 // pred_fallthru
    _
  // Predicated region
  $region54: #{_lambda_.1} parent=0 // pred_check
    _
  $region55: #{_lambda_.1} parent=0 // pred_check_branch
    %47 = sbr.rel (0) target = $region57
  $region56: #{_lambda_.1} parent=0 // pred_region
    _
  $region57: #{_lambda_.1} parent=0 // pred_fallthru
    _
  // Predicated region
  $region58: #{_lambda_.1} parent=0 // pred_check
    _
  $region59: #{_lambda_.1} parent=0 // pred_check_branch
    %49 = sbr.rel (0) target = $region61
  $region60: #{_lambda_.1} parent=0 // pred_region
    _
  $region61: #{_lambda_.1} parent=0 // pred_fallthru
    _
  %v51 = vld [vmem:[%s1] sm:$0xff]
  %v52 = vld [vmem:[%s1 + $0x8] sm:$0xff]
  %v53 = vld [vmem:[%s1 + $0x10] sm:$0xff]
  %v54 = vld [vmem:[%s1 + $0x18] sm:$0xff]
  %v55 = vld [vmem:[%s1 + $0x20] sm:$0xff]
  %v56 = vld [vmem:[%s1 + $0x28] sm:$0xff]
  %v57 = vld [vmem:[%s1 + $0x30] sm:$0xff]
  %v58 = vld [vmem:[%s1 + $0x38] sm:$0xff]
  %v59 = vld [vmem:[%s1 + $0x40] sm:$0xff]
  %v60 = vld [vmem:[%s1 + $0x48] sm:$0xff]
  %v61 = vld [vmem:[%s1 + $0x50] sm:$0xff]
  %v62 = vld [vmem:[%s1 + $0x58] sm:$0xff]
  %v63 = vld [vmem:[%s1 + $0x60] sm:$0xff]
  %v64 = vld [vmem:[%s1 + $0x68] sm:$0xff]
  %v65 = vld [vmem:[%s1 + $0x70] sm:$0xff]
  %v66 = vld [vmem:[%s1 + $0x78] sm:$0xff]
  %v67 = vld [vmem:[%s1 + $0x80] sm:$0xff]
  %v68 = vld [vmem:[%s1 + $0x88] sm:$0xff]
  %v69 = vld [vmem:[%s1 + $0x90] sm:$0xff]
  %v70 = vld [vmem:[%s1 + $0x98] sm:$0xff]
  %v71 = vld [vmem:[%s1 + $0xa0] sm:$0xff]
  %v72 = vld [vmem:[%s1 + $0xa8] sm:$0xff]
  %v73 = vld [vmem:[%s1 + $0xb0] sm:$0xff]
  %v74 = vld [vmem:[%s1 + $0xb8] sm:$0xff]
  %v75 = vld [vmem:[%s1 + $0xc0] sm:$0xff]
  %v76 = vld [vmem:[%s1 + $0xc8] sm:$0xff]
  %v77 = vld [vmem:[%s1 + $0xd0] sm:$0xff]
  %v78 = vld [vmem:[%s1 + $0xd8] sm:$0xff]
  %v79 = vld [vmem:[%s1 + $0xe0] sm:$0xff]
  %v80 = vld [vmem:[%s1 + $0xe8] sm:$0xff]
  %v81 = vld [vmem:[%s1 + $0xf0] sm:$0xff]
  %v82 = vld [vmem:[%s1 + $0xf8] sm:$0xff]
  %v83 = vld [vmem:[%s1 + $0x100] sm:$0xff]
  %v84 = vld [vmem:[%s1 + $0x108] sm:$0xff]
  %v85 = vld [vmem:[%s1 + $0x110] sm:$0xff]
  %v86 = vld [vmem:[%s1 + $0x118] sm:$0xff]
  %v87 = vld [vmem:[%s1 + $0x120] sm:$0xff]
  %v88 = vld [vmem:[%s1 + $0x128] sm:$0xff]
  %v89 = vld [vmem:[%s1 + $0x130] sm:$0xff]
  %v90 = vld [vmem:[%s1 + $0x138] sm:$0xff]
  %v91 = vld [vmem:[%s1 + $0x140] sm:$0xff]
  %v92 = vld [vmem:[%s1 + $0x148] sm:$0xff]
  %v93 = vld [vmem:[%s1 + $0x150] sm:$0xff]
  %v94 = vld [vmem:[%s1 + $0x158] sm:$0xff]
  %v95 = vld [vmem:[%s1 + $0x160] sm:$0xff]
  %v96 = vld [vmem:[%s1 + $0x168] sm:$0xff]
  %v97 = vld [vmem:[%s1 + $0x170] sm:$0xff]
  %v98 = vld [vmem:[%s1 + $0x178] sm:$0xff]
  %v99 = vld [vmem:[%s1 + $0x180] sm:$0xff]
  %v100 = vld [vmem:[%s1 + $0x188] sm:$0xff]
  %v101 = vld [vmem:[%s1 + $0x190] sm:$0xff]
  %v102 = vld [vmem:[%s1 + $0x198] sm:$0xff]
  %v103 = vld [vmem:[%s1 + $0x1a0] sm:$0xff]
  %v104 = vld [vmem:[%s1 + $0x1a8] sm:$0xff]
  %v105 = vld [vmem:[%s1 + $0x1b0] sm:$0xff]
  %v106 = vld [vmem:[%s1 + $0x1b8] sm:$0xff]
  %v107 = vld [vmem:[%s1 + $0x1c0] sm:$0xff]
  %v108 = vld [vmem:[%s1 + $0x1c8] sm:$0xff]
  %v109 = vld [vmem:[%s1 + $0x1d0] sm:$0xff]
  %v110 = vld [vmem:[%s1 + $0x1d8] sm:$0xff]
  %v111 = vld [vmem:[%s1 + $0x1e0] sm:$0xff]
  %v112 = vld [vmem:[%s1 + $0x1e8] sm:$0xff]
  %v113 = vld [vmem:[%s1 + $0x1f0] sm:$0xff]
  %v114 = vld [vmem:[%s1 + $0x1f8] sm:$0xff]
  %v115 = vld [vmem:[%s1 + $0x200] sm:$0xff]
  %v116 = vld [vmem:[%s1 + $0x208] sm:$0xff]
  %v117 = vld [vmem:[%s1 + $0x210] sm:$0xff]
  %v118 = vld [vmem:[%s1 + $0x218] sm:$0xff]
  %v119 = vld [vmem:[%s1 + $0x220] sm:$0xff]
  %v120 = vld [vmem:[%s1 + $0x228] sm:$0xff]
  %v121 = vld [vmem:[%s1 + $0x230] sm:$0xff]
  %v122 = vld [vmem:[%s1 + $0x238] sm:$0xff]
  %v123 = vld [vmem:[%s1 + $0x240] sm:$0xff]
  %v124 = vld [vmem:[%s1 + $0x248] sm:$0xff]
  %v125 = vld [vmem:[%s1 + $0x250] sm:$0xff]
  %v126 = vld [vmem:[%s1 + $0x258] sm:$0xff]
  %v127 = vld [vmem:[%s1 + $0x260] sm:$0xff]
  %v128 = vld [vmem:[%s1 + $0x268] sm:$0xff]
  %v129 = vld [vmem:[%s1 + $0x270] sm:$0xff]
  %v130 = vld [vmem:[%s1 + $0x278] sm:$0xff]
  %v131 = vld [vmem:[%s1 + $0x280] sm:$0xff]
  %v132 = vld [vmem:[%s1 + $0x288] sm:$0xff]
  %v133 = vld [vmem:[%s1 + $0x290] sm:$0xff]
  %v134 = vld [vmem:[%s1 + $0x298] sm:$0xff]
  %v135 = vld [vmem:[%s1 + $0x2a0] sm:$0xff]
  %v136 = vld [vmem:[%s1 + $0x2a8] sm:$0xff]
  %v137 = vld [vmem:[%s1 + $0x2b0] sm:$0xff]
  %v138 = vld [vmem:[%s1 + $0x2b8] sm:$0xff]
  %v139 = vld [vmem:[%s1 + $0x2c0] sm:$0xff]
  %v140 = vld [vmem:[%s1 + $0x2c8] sm:$0xff]
  %v141 = vld [vmem:[%s1 + $0x2d0] sm:$0xff]
  %v142 = vld [vmem:[%s1 + $0x2d8] sm:$0xff]
  %v143 = vld [vmem:[%s1 + $0x2e0] sm:$0xff]
  %v144 = vld [vmem:[%s1 + $0x2e8] sm:$0xff]
  %v145 = vld [vmem:[%s1 + $0x2f0] sm:$0xff]
  %v146 = vld [vmem:[%s1 + $0x2f8] sm:$0xff]
  %v147 = vld [vmem:[%s1 + $0x300] sm:$0xff]
  %v148 = vld [vmem:[%s1 + $0x308] sm:$0xff]
  %v149 = vld [vmem:[%s1 + $0x310] sm:$0xff]
  %v150 = vld [vmem:[%s1 + $0x318] sm:$0xff]
  %v151 = vld [vmem:[%s1 + $0x320] sm:$0xff]
  %v152 = vld [vmem:[%s1 + $0x328] sm:$0xff]
  %v153 = vld [vmem:[%s1 + $0x330] sm:$0xff]
  %v154 = vld [vmem:[%s1 + $0x338] sm:$0xff]
  %v155 = vld [vmem:[%s1 + $0x340] sm:$0xff]
  %v156 = vld [vmem:[%s1 + $0x348] sm:$0xff]
  %v157 = vld [vmem:[%s1 + $0x350] sm:$0xff]
  %v158 = vld [vmem:[%s1 + $0x358] sm:$0xff]
  %v159 = vld [vmem:[%s1 + $0x360] sm:$0xff]
  %v160 = vld [vmem:[%s1 + $0x368] sm:$0xff]
  %v161 = vld [vmem:[%s1 + $0x370] sm:$0xff]
  %v162 = vld [vmem:[%s1 + $0x378] sm:$0xff]
  %v163 = vld [vmem:[%s1 + $0x380] sm:$0xff]
  %v164 = vld [vmem:[%s1 + $0x388] sm:$0xff]
  %v165 = vld [vmem:[%s1 + $0x390] sm:$0xff]
  %v166 = vld [vmem:[%s1 + $0x398] sm:$0xff]
  %v167 = vld [vmem:[%s1 + $0x3a0] sm:$0xff]
  %v168 = vld [vmem:[%s1 + $0x3a8] sm:$0xff]
  %v169 = vld [vmem:[%s1 + $0x3b0] sm:$0xff]
  %v170 = vld [vmem:[%s1 + $0x3b8] sm:$0xff]
  %v171 = vld [vmem:[%s1 + $0x3c0] sm:$0xff]
  %v172 = vld [vmem:[%s1 + $0x3c8] sm:$0xff]
  %v173 = vld [vmem:[%s1 + $0x3d0] sm:$0xff]
  %v174 = vld [vmem:[%s1 + $0x3d8] sm:$0xff]
  %v175 = vld [vmem:[%s1 + $0x3e0] sm:$0xff]
  %v176 = vld [vmem:[%s1 + $0x3e8] sm:$0xff]
  %v177 = vld [vmem:[%s1 + $0x3f0] sm:$0xff]
  %v178 = vld [vmem:[%s1 + $0x3f8] sm:$0xff]
  %v179 = vld [vmem:[%s2] sm:$0xf]
  %v180 = vld [vmem:[%s2 + $0x4] sm:$0xf]
  %v181 = vld [vmem:[%s2 + $0x8] sm:$0xf]
  %v182 = vld [vmem:[%s2 + $0xc] sm:$0xf]
  %v183 = vld [vmem:[%s2 + $0x10] sm:$0xf]
  %v184 = vld [vmem:[%s2 + $0x14] sm:$0xf]
  %v185 = vld [vmem:[%s2 + $0x18] sm:$0xf]
  %v186 = vld [vmem:[%s2 + $0x1c] sm:$0xf]
  %v187 = vld [vmem:[%s2 + $0x20] sm:$0xf]
  %v188 = vld [vmem:[%s2 + $0x24] sm:$0xf]
  %v189 = vld [vmem:[%s2 + $0x28] sm:$0xf]
  %v190 = vld [vmem:[%s2 + $0x2c] sm:$0xf]
  %v191 = vld [vmem:[%s2 + $0x30] sm:$0xf]
  %v192 = vld [vmem:[%s2 + $0x34] sm:$0xf]
  %v193 = vld [vmem:[%s2 + $0x38] sm:$0xf]
  %v194 = vld [vmem:[%s2 + $0x3c] sm:$0xf]
  %v195 = vld [vmem:[%s2 + $0x40] sm:$0xf]
  %v196 = vld [vmem:[%s2 + $0x44] sm:$0xf]
  %v197 = vld [vmem:[%s2 + $0x48] sm:$0xf]
  %v198 = vld [vmem:[%s2 + $0x4c] sm:$0xf]
  %v199 = vld [vmem:[%s2 + $0x50] sm:$0xf]
  %v200 = vld [vmem:[%s2 + $0x54] sm:$0xf]
  %v201 = vld [vmem:[%s2 + $0x58] sm:$0xf]
  %v202 = vld [vmem:[%s2 + $0x5c] sm:$0xf]
  %v203 = vld [vmem:[%s2 + $0x60] sm:$0xf]
  %v204 = vld [vmem:[%s2 + $0x64] sm:$0xf]
  %v205 = vld [vmem:[%s2 + $0x68] sm:$0xf]
  %v206 = vld [vmem:[%s2 + $0x6c] sm:$0xf]
  %v207 = vld [vmem:[%s2 + $0x70] sm:$0xf]
  %v208 = vld [vmem:[%s2 + $0x74] sm:$0xf]
  %v209 = vld [vmem:[%s2 + $0x78] sm:$0xf]
  %v210 = vld [vmem:[%s2 + $0x7c] sm:$0xf]
  %v211 = vld [vmem:[%s2 + $0x80] sm:$0xf]
  %v212 = vld [vmem:[%s2 + $0x84] sm:$0xf]
  %v213 = vld [vmem:[%s2 + $0x88] sm:$0xf]
  %v214 = vld [vmem:[%s2 + $0x8c] sm:$0xf]
  %v215 = vld [vmem:[%s2 + $0x90] sm:$0xf]
  %v216 = vld [vmem:[%s2 + $0x94] sm:$0xf]
  %v217 = vld [vmem:[%s2 + $0x98] sm:$0xf]
  %v218 = vld [vmem:[%s2 + $0x9c] sm:$0xf]
  %v219 = vld [vmem:[%s2 + $0xa0] sm:$0xf]
  %v220 = vld [vmem:[%s2 + $0xa4] sm:$0xf]
  %v221 = vld [vmem:[%s2 + $0xa8] sm:$0xf]
  %v222 = vld [vmem:[%s2 + $0xac] sm:$0xf]
  %v223 = vld [vmem:[%s2 + $0xb0] sm:$0xf]
  %v224 = vld [vmem:[%s2 + $0xb4] sm:$0xf]
  %v225 = vld [vmem:[%s2 + $0xb8] sm:$0xf]
  %v226 = vld [vmem:[%s2 + $0xbc] sm:$0xf]
  %v227 = vld [vmem:[%s2 + $0xc0] sm:$0xf]
  %v228 = vld [vmem:[%s2 + $0xc4] sm:$0xf]
  %v229 = vld [vmem:[%s2 + $0xc8] sm:$0xf]
  %v230 = vld [vmem:[%s2 + $0xcc] sm:$0xf]
  %v231 = vld [vmem:[%s2 + $0xd0] sm:$0xf]
  %v232 = vld [vmem:[%s2 + $0xd4] sm:$0xf]
  %v233 = vld [vmem:[%s2 + $0xd8] sm:$0xf]
  %v234 = vld [vmem:[%s2 + $0xdc] sm:$0xf]
  %v235 = vld [vmem:[%s2 + $0xe0] sm:$0xf]
  %v236 = vld [vmem:[%s2 + $0xe4] sm:$0xf]
  %v237 = vld [vmem:[%s2 + $0xe8] sm:$0xf]
  %v238 = vld [vmem:[%s2 + $0xec] sm:$0xf]
  %v239 = vld [vmem:[%s2 + $0xf0] sm:$0xf]
  %v240 = vld [vmem:[%s2 + $0xf4] sm:$0xf]
  %v241 = vld [vmem:[%s2 + $0xf8] sm:$0xf]
  %v242 = vld [vmem:[%s2 + $0xfc] sm:$0xf]
  %v243 = vld [vmem:[%s3] sm:$0xff]
  %v244 = vld [vmem:[%s3 + $0x8] sm:$0xff]
  %v245 = vld [vmem:[%s3 + $0x10] sm:$0xff]
  %v246 = vld [vmem:[%s3 + $0x18] sm:$0xff]
  %v247 = vld [vmem:[%s3 + $0x20] sm:$0xff]
  %v248 = vld [vmem:[%s3 + $0x28] sm:$0xff]
  %v249 = vld [vmem:[%s3 + $0x30] sm:$0xff]
  %v250 = vld [vmem:[%s3 + $0x38] sm:$0xff]
  %v251 = vld [vmem:[%s3 + $0x40] sm:$0xff]
  %v252 = vld [vmem:[%s3 + $0x48] sm:$0xff]
  %v253 = vld [vmem:[%s4] sm:$0xff]
  %v254 = vld [vmem:[%s4 + $0x8] sm:$0xff]
  %v255 = vld [vmem:[%s4 + $0x10] sm:$0xff]
  %v256 = vld [vmem:[%s4 + $0x18] sm:$0xff]
  %v257 = vld [vmem:[%s4 + $0x20] sm:$0xff]
  %v258 = vld [vmem:[%s4 + $0x28] sm:$0xff]
  %v259 = vld [vmem:[%s4 + $0x30] sm:$0xff]
  %v260 = vld [vmem:[%s4 + $0x38] sm:$0xff]
  %v261 = vld [vmem:[%s4 + $0x40] sm:$0xff]
  %v262 = vld [vmem:[%s4 + $0x48] sm:$0xff]
  %v263 = vld [vmem:[%s4 + $0x50] sm:$0xff]
  %v264 = vld [vmem:[%s4 + $0x58] sm:$0xff]
  %v265 = vld [vmem:[%s4 + $0x60] sm:$0xff]
  %v266 = vld [vmem:[%s4 + $0x68] sm:$0xff]
  %v267 = vld [vmem:[%s4 + $0x70] sm:$0xff]
  %v268 = vld [vmem:[%s4 + $0x78] sm:$0xff]
  %v269 = vld [vmem:[%s4 + $0x80] sm:$0xff]
  %v270 = vld [vmem:[%s4 + $0x88] sm:$0xff]
  %v271 = vld [vmem:[%s4 + $0x90] sm:$0xff]
  %v272 = vld [vmem:[%s4 + $0x98] sm:$0xff]
  %v273 = vld [vmem:[%s4 + $0xa0] sm:$0xff]
  %v274 = vld [vmem:[%s4 + $0xa8] sm:$0xff]
  %v275 = vld [vmem:[%s4 + $0xb0] sm:$0xff]
  %v276 = vld [vmem:[%s4 + $0xb8] sm:$0xff]
  %v277 = vld [vmem:[%s4 + $0xc0] sm:$0xff]
  %v278 = vld [vmem:[%s4 + $0xc8] sm:$0xff]
  %v279 = vld [vmem:[%s4 + $0xd0] sm:$0xff]
  %v280 = vld [vmem:[%s4 + $0xd8] sm:$0xff]
  %v281 = vld [vmem:[%s4 + $0xe0] sm:$0xff]
  %v282 = vld [vmem:[%s4 + $0xe8] sm:$0xff]
  %v283 = vld [vmem:[%s4 + $0xf0] sm:$0xff]
  %v284 = vld [vmem:[%s4 + $0xf8] sm:$0xff]
  %v285 = vld [vmem:[%s5] sm:$0xff]
  %v286 = vld [vmem:[%s5 + $0x8] sm:$0xf]
  %v287 = vld [vmem:[%s5 + $0xc] sm:$0xff]
  %v288 = vld [vmem:[%s5 + $0x14] sm:$0xf]
  %v289 = vld [vmem:[%s5 + $0x18] sm:$0xff]
  %v290 = vld [vmem:[%s5 + $0x20] sm:$0xf]
  %v291 = vld [vmem:[%s5 + $0x24] sm:$0xff]
  %v292 = vld [vmem:[%s5 + $0x2c] sm:$0xf]
  %v293 = vld [vmem:[%s5 + $0x30] sm:$0xff]
  %v294 = vld [vmem:[%s5 + $0x38] sm:$0xf]
  %v295 = vld [vmem:[%s5 + $0x3c] sm:$0xff]
  %v296 = vld [vmem:[%s5 + $0x44] sm:$0xf]
  %v297 = vld [vmem:[%s5 + $0x48] sm:$0xff]
  %v298 = vld [vmem:[%s5 + $0x50] sm:$0xf]
  %v299 = vld [vmem:[%s5 + $0x54] sm:$0xff]
  %v300 = vld [vmem:[%s5 + $0x5c] sm:$0xf]
  %v301 = vld [vmem:[%s5 + $0x60] sm:$0xff]
  %v302 = vld [vmem:[%s5 + $0x68] sm:$0xf]
  %v303 = vld [vmem:[%s5 + $0x6c] sm:$0xff]
  %v304 = vld [vmem:[%s5 + $0x74] sm:$0xf]
  %v305 = vld [vmem:[%s5 + $0x78] sm:$0xff]
  %v306 = vld [vmem:[%s5 + $0x80] sm:$0xf]
  %v307 = vld [vmem:[%s5 + $0x84] sm:$0xff]
  %v308 = vld [vmem:[%s5 + $0x8c] sm:$0xf]
  %v309 = vld [vmem:[%s5 + $0x90] sm:$0xff]
  %v310 = vld [vmem:[%s5 + $0x98] sm:$0xf]
  %v311 = vld [vmem:[%s5 + $0x9c] sm:$0xff]
  %v312 = vld [vmem:[%s5 + $0xa4] sm:$0xf]
  %v313 = vld [vmem:[%s5 + $0xa8] sm:$0xff]
  %v314 = vld [vmem:[%s5 + $0xb0] sm:$0xf]
  %v315 = vld [vmem:[%s5 + $0xb4] sm:$0xff]
  %v316 = vld [vmem:[%s5 + $0xbc] sm:$0xf]
  %v317 = vld [vmem:[%s5 + $0xc0] sm:$0xff]
  %v318 = vld [vmem:[%s5 + $0xc8] sm:$0xf]
  %v319 = vld [vmem:[%s5 + $0xcc] sm:$0xff]
  %v320 = vld [vmem:[%s5 + $0xd4] sm:$0xf]
  %v321 = vld [vmem:[%s5 + $0xd8] sm:$0xff]
  %v322 = vld [vmem:[%s5 + $0xe0] sm:$0xf]
  %v323 = vld [vmem:[%s5 + $0xe4] sm:$0xff]
  %v324 = vld [vmem:[%s5 + $0xec] sm:$0xf]
  %v325 = vld [vmem:[%s6] sm:$0xff]
  %v326 = vld [vmem:[%s6 + $0x8] sm:$0xff]
  %v327 = vld [vmem:[%s6 + $0x10] sm:$0xff]
  %v328 = vld [vmem:[%s6 + $0x18] sm:$0xff]
  %v329 = vld [vmem:[%s6 + $0x20] sm:$0xff]
  %v330 = vld [vmem:[%s6 + $0x28] sm:$0xff]
  %v331 = vld [vmem:[%s6 + $0x30] sm:$0xff]
  %v332 = vld [vmem:[%s6 + $0x38] sm:$0xff]
  %v333 = vld [vmem:[%s6 + $0x40] sm:$0xff]
  %v334 = vld [vmem:[%s6 + $0x48] sm:$0xff]
  %v335 = vld [vmem:[%s6 + $0x50] sm:$0xff]
  %v336 = vld [vmem:[%s6 + $0x58] sm:$0xff]
  %v337 = vld [vmem:[%s6 + $0x60] sm:$0xff]
  %v338 = vld [vmem:[%s6 + $0x68] sm:$0xff]
  %v339 = vld [vmem:[%s6 + $0x70] sm:$0xff]
  %v340 = vld [vmem:[%s6 + $0x78] sm:$0xff]
  %v341 = vld [vmem:[%s6 + $0x80] sm:$0xff]
  %v342 = vld [vmem:[%s6 + $0x88] sm:$0xff]
  %v343 = vld [vmem:[%s6 + $0x90] sm:$0xff]
  %v344 = vld [vmem:[%s6 + $0x98] sm:$0xff]
  %v345 = vld [vmem:[%s6 + $0xa0] sm:$0xff]
  %v346 = vld [vmem:[%s6 + $0xa8] sm:$0xff]
  %v347 = vld [vmem:[%s6 + $0xb0] sm:$0xff]
  %v348 = vld [vmem:[%s6 + $0xb8] sm:$0xff]
  %v349 = vld [vmem:[%s6 + $0xc0] sm:$0xff]
  %v350 = vld [vmem:[%s6 + $0xc8] sm:$0xff]
  %v351 = vld [vmem:[%s6 + $0xd0] sm:$0xff]
  %v352 = vld [vmem:[%s6 + $0xd8] sm:$0xff]
  %v353 = vld [vmem:[%s6 + $0xe0] sm:$0xff]
  %v354 = vld [vmem:[%s6 + $0xe8] sm:$0xff]
  %v355 = vld [vmem:[%s6 + $0xf0] sm:$0xff]
  %v356 = vld [vmem:[%s6 + $0xf8] sm:$0xff]
  %v357 = vld [vmem:[%s6 + $0x100] sm:$0xff]
  %v358 = vld [vmem:[%s6 + $0x108] sm:$0xff]
  %v359 = vld [vmem:[%s6 + $0x110] sm:$0xff]
  %v360 = vld [vmem:[%s6 + $0x118] sm:$0xff]
  %v361 = vld [vmem:[%s6 + $0x120] sm:$0xff]
  %v362 = vld [vmem:[%s6 + $0x128] sm:$0xff]
  %v363 = vld [vmem:[%s6 + $0x130] sm:$0xff]
  %v364 = vld [vmem:[%s6 + $0x138] sm:$0xff]
  %v365 = vld [vmem:[%s6 + $0x140] sm:$0xff]
  %v366 = vld [vmem:[%s6 + $0x148] sm:$0xff]
  %v367 = vld [vmem:[%s6 + $0x150] sm:$0xff]
  %v368 = vld [vmem:[%s6 + $0x158] sm:$0xff]
  %v369 = vld [vmem:[%s6 + $0x160] sm:$0xff]
  %v370 = vld [vmem:[%s6 + $0x168] sm:$0xff]
  %v371 = vld [vmem:[%s6 + $0x170] sm:$0xff]
  %v372 = vld [vmem:[%s6 + $0x178] sm:$0xff]
  %v373 = vld [vmem:[%s7] sm:$0xff]
  %v374 = vld [vmem:[%s7 + $0x8] sm:$0xf]
  %v375 = vld [vmem:[%s7 + $0xc] sm:$0xff]
  %v376 = vld [vmem:[%s7 + $0x14] sm:$0xf]
  %v377 = vld [vmem:[%s7 + $0x18] sm:$0xff]
  %v378 = vld [vmem:[%s7 + $0x20] sm:$0xf]
  %v379 = vld [vmem:[%s7 + $0x24] sm:$0xff]
  %v380 = vld [vmem:[%s7 + $0x2c] sm:$0xf]
  %v381 = vld [vmem:[%s7 + $0x30] sm:$0xff]
  %v382 = vld [vmem:[%s7 + $0x38] sm:$0xf]
  %v383 = vld [vmem:[%s7 + $0x3c] sm:$0xff]
  %v384 = vld [vmem:[%s7 + $0x44] sm:$0xf]
  %v385 = vld [vmem:[%s7 + $0x48] sm:$0xff]
  %v386 = vld [vmem:[%s7 + $0x50] sm:$0xf]
  %v387 = vld [vmem:[%s7 + $0x54] sm:$0xff]
  %v388 = vld [vmem:[%s7 + $0x5c] sm:$0xf]
  %v389 = vld [vmem:[%s7 + $0x60] sm:$0xff]
  %v390 = vld [vmem:[%s7 + $0x68] sm:$0xf]
  %v391 = vld [vmem:[%s7 + $0x6c] sm:$0xff]
  %v392 = vld [vmem:[%s7 + $0x74] sm:$0xf]
  %v393 = vld [vmem:[%s7 + $0x78] sm:$0xff]
  %v394 = vld [vmem:[%s7 + $0x80] sm:$0xf]
  %v395 = vld [vmem:[%s7 + $0x84] sm:$0xff]
  %v396 = vld [vmem:[%s7 + $0x8c] sm:$0xf]
  %v397 = vld [vmem:[%s7 + $0x90] sm:$0xff]
  %v398 = vld [vmem:[%s7 + $0x98] sm:$0xf]
  %v399 = vld [vmem:[%s7 + $0x9c] sm:$0xff]
  %v400 = vld [vmem:[%s7 + $0xa4] sm:$0xf]
  %v401 = vld [vmem:[%s7 + $0xa8] sm:$0xff]
  %v402 = vld [vmem:[%s7 + $0xb0] sm:$0xf]
  %v403 = vld [vmem:[%s7 + $0xb4] sm:$0xff]
  %v404 = vld [vmem:[%s7 + $0xbc] sm:$0xf]
  %v405 = vld [vmem:[%s7 + $0xc0] sm:$0xff]
  %v406 = vld [vmem:[%s7 + $0xc8] sm:$0xf]
  %v407 = vld [vmem:[%s7 + $0xcc] sm:$0xff]
  %v408 = vld [vmem:[%s7 + $0xd4] sm:$0xf]
  %v409 = vld [vmem:[%s7 + $0xd8] sm:$0xff]
  %v410 = vld [vmem:[%s7 + $0xe0] sm:$0xf]
  %v411 = vld [vmem:[%s7 + $0xe4] sm:$0xff]
  %v412 = vld [vmem:[%s7 + $0xec] sm:$0xf]
  %v413 = vld [vmem:[%s7 + $0xf0] sm:$0xff]
  %v414 = vld [vmem:[%s7 + $0xf8] sm:$0xf]
  %v415 = vld [vmem:[%s7 + $0xfc] sm:$0xff]
  %v416 = vld [vmem:[%s7 + $0x104] sm:$0xf]
  %v417 = vld [vmem:[%s7 + $0x108] sm:$0xff]
  %v418 = vld [vmem:[%s7 + $0x110] sm:$0xf]
  %v419 = vld [vmem:[%s7 + $0x114] sm:$0xff]
  %v420 = vld [vmem:[%s7 + $0x11c] sm:$0xf]
  %v421 = vld [vmem:[%s8] sm:$0xf]
  %v422 = vld [vmem:[%s8 + $0x4] sm:$0xf]
  %v423 = vld [vmem:[%s8 + $0x8] sm:$0xf]
  %v424 = vld [vmem:[%s8 + $0xc] sm:$0xf]
  %v425 = vld [vmem:[%s8 + $0x10] sm:$0xf]
  %v426 = vld [vmem:[%s8 + $0x14] sm:$0xf]
  %v427 = vld [vmem:[%s8 + $0x18] sm:$0xf]
  %v428 = vld [vmem:[%s8 + $0x1c] sm:$0xf]
  %v429 = vld [vmem:[%s8 + $0x20] sm:$0xf]
  %v430 = vld [vmem:[%s8 + $0x24] sm:$0xf]
  %v431 = vld [vmem:[%s8 + $0x28] sm:$0xf]
  %v432 = vld [vmem:[%s8 + $0x2c] sm:$0xf]
  %v433 = vld [vmem:[%s8 + $0x30] sm:$0xf]
  %v434 = vld [vmem:[%s8 + $0x34] sm:$0xf]
  %v435 = vld [vmem:[%s8 + $0x38] sm:$0xf]
  %v436 = vld [vmem:[%s8 + $0x3c] sm:$0xf]
  %v437 = vld [vmem:[%s8 + $0x40] sm:$0xf]
  %v438 = vld [vmem:[%s8 + $0x44] sm:$0xf]
  %v439 = vld [vmem:[%s8 + $0x48] sm:$0xf]
  %v440 = vld [vmem:[%s8 + $0x4c] sm:$0xf]
  %v441 = vld [vmem:[%s8 + $0x50] sm:$0xf]
  %v442 = vld [vmem:[%s8 + $0x54] sm:$0xf]
  %v443 = vld [vmem:[%s8 + $0x58] sm:$0xf]
  %v444 = vld [vmem:[%s8 + $0x5c] sm:$0xf]
  %v445 = vld [vmem:[%s8 + $0x60] sm:$0xf]
  %v446 = vld [vmem:[%s8 + $0x64] sm:$0xf]
  %v447 = vld [vmem:[%s8 + $0x68] sm:$0xf]
  %v448 = vld [vmem:[%s8 + $0x6c] sm:$0xf]
  %v449 = vld [vmem:[%s8 + $0x70] sm:$0xf]
  %v450 = vld [vmem:[%s8 + $0x74] sm:$0xf]
  %v451 = vld [vmem:[%s8 + $0x78] sm:$0xf]
  %v452 = vld [vmem:[%s8 + $0x7c] sm:$0xf]
  %v453 = vld [vmem:[%s8 + $0x80] sm:$0xf]
  %v454 = vld [vmem:[%s8 + $0x84] sm:$0xf]
  %v455 = vld [vmem:[%s8 + $0x88] sm:$0xf]
  %v456 = vld [vmem:[%s8 + $0x8c] sm:$0xf]
  %v457 = vld [vmem:[%s8 + $0x90] sm:$0xf]
  %v458 = vld [vmem:[%s8 + $0x94] sm:$0xf]
  %v459 = vld [vmem:[%s8 + $0x98] sm:$0xf]
  %v460 = vld [vmem:[%s8 + $0x9c] sm:$0xf]
  %v461 = vld [vmem:[%s8 + $0xa0] sm:$0xf]
  %v462 = vld [vmem:[%s8 + $0xa4] sm:$0xf]
  %v463 = vld [vmem:[%s8 + $0xa8] sm:$0xf]
  %v464 = vld [vmem:[%s8 + $0xac] sm:$0xf]
  %v465 = vld [vmem:[%s8 + $0xb0] sm:$0xf]
  %v466 = vld [vmem:[%s8 + $0xb4] sm:$0xf]
  %v467 = vld [vmem:[%s8 + $0xb8] sm:$0xf]
  %v468 = vld [vmem:[%s8 + $0xbc] sm:$0xf]
  %v469 = vld [vmem:[%s9] sm:$0xf]
  %v470 = vld [vmem:[%s9 + $0x4] sm:$0xf]
  %v471 = vld [vmem:[%s10] sm:$0xff]
  %v472 = vld [vmem:[%s10 + $0x8] sm:$0xff]
  %v473 = vld [vmem:[%s10 + $0x10] sm:$0xff]
  %v474 = vld [vmem:[%s10 + $0x18] sm:$0xff]
  %v475 = vld [vmem:[%s11] sm:$0xff]
  %v476 = vld [vmem:[%s11 + $0x8] sm:$0xff]
  %v477 = vld [vmem:[%s11 + $0x10] sm:$0xff]
  %v478 = vld [vmem:[%s11 + $0x18] sm:$0xff]
  %v479 = vld [vmem:[%s11 + $0x20] sm:$0xff]
  %v480 = vld [vmem:[%s11 + $0x28] sm:$0xff]
  %v481 = vld [vmem:[%s11 + $0x30] sm:$0xff]
  %v482 = vld [vmem:[%s11 + $0x38] sm:$0xff]
  %v483 = vld [vmem:[%s11 + $0x40] sm:$0xff]
  %v484 = vld [vmem:[%s11 + $0x48] sm:$0xff]
  %v485 = vld [vmem:[%s11 + $0x50] sm:$0xff]
  %v486 = vld [vmem:[%s11 + $0x58] sm:$0xff]
  %v487 = vld [vmem:[%s11 + $0x60] sm:$0xff]
  %v488 = vld [vmem:[%s11 + $0x68] sm:$0xff]
  %v489 = vld [vmem:[%s11 + $0x70] sm:$0xff]
  %v490 = vld [vmem:[%s11 + $0x78] sm:$0xff]
  %v491 = vld [vmem:[%s11 + $0x80] sm:$0xff]
  %v492 = vld [vmem:[%s11 + $0x88] sm:$0xff]
  %v493 = vld [vmem:[%s11 + $0x90] sm:$0xff]
  %v494 = vld [vmem:[%s11 + $0x98] sm:$0xff]
  %v495 = vld [vmem:[%s11 + $0xa0] sm:$0xff]
  %v496 = vld [vmem:[%s11 + $0xa8] sm:$0xff]
  %v497 = vld [vmem:[%s11 + $0xb0] sm:$0xff]
  %v498 = vld [vmem:[%s11 + $0xb8] sm:$0xff]
  %v499 = vld [vmem:[%s12] sm:$0xf]
  %v500 = vld [vmem:[%s12 + $0x4] sm:$0xf]
  %v501 = vld [vmem:[%s12 + $0x8] sm:$0xf]
  %v502 = vld [vmem:[%s12 + $0xc] sm:$0xf]
  %v503 = vld [vmem:[%s12 + $0x10] sm:$0xf]
  %v504 = vld [vmem:[%s12 + $0x14] sm:$0xf]
  %v505 = vld [vmem:[%s12 + $0x18] sm:$0xf]
  %v506 = vld [vmem:[%s12 + $0x1c] sm:$0xf]
  %v507 = vld [vmem:[%s12 + $0x20] sm:$0xf]
  %v508 = vld [vmem:[%s12 + $0x24] sm:$0xf]
  %v509 = vld [vmem:[%s12 + $0x28] sm:$0xf]
  %v510 = vld [vmem:[%s12 + $0x2c] sm:$0xf]
  %v511 = vld [vmem:[%s12 + $0x30] sm:$0xf]
  %v512 = vld [vmem:[%s12 + $0x34] sm:$0xf]
  %v513 = vld [vmem:[%s12 + $0x38] sm:$0xf]
  %v514 = vld [vmem:[%s12 + $0x3c] sm:$0xf]
  %v515 = vld [vmem:[%s12 + $0x40] sm:$0xf]
  %v516 = vld [vmem:[%s12 + $0x44] sm:$0xf]
  %v517 = vld [vmem:[%s12 + $0x48] sm:$0xf]
  %v518 = vld [vmem:[%s12 + $0x4c] sm:$0xf]
  %v519 = vld [vmem:[%s12 + $0x50] sm:$0xf]
  %v520 = vld [vmem:[%s12 + $0x54] sm:$0xf]
  %v521 = vld [vmem:[%s12 + $0x58] sm:$0xf]
  %v522 = vld [vmem:[%s12 + $0x5c] sm:$0xf]
  %v523 = vld [vmem:[%s13] sm:$0xf]
  %v524 = vld [vmem:[%s13 + $0x4] sm:$0xf]
  %v525 = vld [vmem:[%s13 + $0x8] sm:$0xf]
  %v526 = vld [vmem:[%s13 + $0xc] sm:$0xf]
  %v527 = vld [vmem:[%s14] sm:$0xff]
  %v528 = vld [vmem:[%s14 + $0x8] sm:$0x1]
  %v529 = vld [vmem:[%s14 + $0x9] sm:$0x3]
  %v530 = vld [vmem:[%s14 + $0xb] sm:$0x3]
  %v531 = vld [vmem:[%s14 + $0xd] sm:$0x7]
  %v532 = vld [vmem:[%s14 + $0x10] sm:$0x3]
  %v533 = vld [vmem:[%s14 + $0x12] sm:$0x7]
  %v534 = vld [vmem:[%s14 + $0x15] sm:$0x1]
  %v535 = vld [vmem:[%s14 + $0x16] sm:$0x1]
  %v536 = vld [vmem:[%s14 + $0x17] sm:$0x3]
  %v537 = vld [vmem:[%s14 + $0x19] sm:$0x1]
  %v538 = vld [vmem:[%s14 + $0x1a] sm:$0x1]
  %v539 = vld [vmem:[%s0] sm:$0xff]
  %v541 = vlaneseq
  %v542 = vshrl.u32 %v541, 7
  %v543 = vsub.s32 0, %v542
  %v544 = vrot.slane %v527, %v543
  %v545 = vlaneseq
  %v546 = vshrl.u32 %v545, 7
  %v547 = vsub.s32 1, %v546
  %v548 = vrot.slane %v527, %v547
  %v549 = vlaneseq
  %v550 = vshrl.u32 %v549, 7
  %v551 = vsub.s32 2, %v550
  %v552 = vrot.slane %v527, %v551
  %v553 = vlaneseq
  %v554 = vshrl.u32 %v553, 7
  %v555 = vsub.s32 3, %v554
  %v556 = vrot.slane %v527, %v555
  %v557 = vlaneseq
  %v558 = vshrl.u32 %v557, 7
  %v559 = vsub.s32 4, %v558
  %v560 = vrot.slane %v527, %v559
  %v561 = vlaneseq
  %v562 = vshrl.u32 %v561, 7
  %v563 = vsub.s32 5, %v562
  %v564 = vrot.slane %v527, %v563
  %v565 = vlaneseq
  %v566 = vshrl.u32 %v565, 7
  %v567 = vsub.s32 6, %v566
  %v568 = vrot.slane %v527, %v567
  %v569 = vlaneseq
  %v570 = vshrl.u32 %v569, 7
  %v571 = vsub.s32 7, %v570
  %v572 = vrot.slane %v527, %v571
  %v582 = vunpack.c.l.b16 %v539
  %v583 = vunpack.c.h.b16 %v539
  %v584 = vpack.c.b16 %v582, %v582
  %v585 = vpack.c.b16 %v583, %v583
  %v716 = vunpack.c.l.b16 %v51
  %v717 = vunpack.c.h.b16 %v51
  %v718 = vunpack.c.l.b16 %v52
  %v719 = vunpack.c.h.b16 %v52
  %v720 = vunpack.c.l.b16 %v53
  %v721 = vunpack.c.h.b16 %v53
  %v722 = vunpack.c.l.b16 %v54
  %v723 = vunpack.c.h.b16 %v54
  %v724 = vunpack.c.l.b16 %v55
  %v725 = vunpack.c.h.b16 %v55
  %v726 = vunpack.c.l.b16 %v56
  %v727 = vunpack.c.h.b16 %v56
  %v728 = vunpack.c.l.b16 %v57
  %v729 = vunpack.c.h.b16 %v57
  %v730 = vunpack.c.l.b16 %v58
  %v731 = vunpack.c.h.b16 %v58
  %v732 = vunpack.c.l.b16 %v59
  %v733 = vunpack.c.h.b16 %v59
  %v734 = vunpack.c.l.b16 %v60
  %v735 = vunpack.c.h.b16 %v60
  %v736 = vunpack.c.l.b16 %v61
  %v737 = vunpack.c.h.b16 %v61
  %v738 = vunpack.c.l.b16 %v62
  %v739 = vunpack.c.h.b16 %v62
  %v740 = vunpack.c.l.b16 %v63
  %v741 = vunpack.c.h.b16 %v63
  %v742 = vunpack.c.l.b16 %v64
  %v743 = vunpack.c.h.b16 %v64
  %v744 = vunpack.c.l.b16 %v65
  %v745 = vunpack.c.h.b16 %v65
  %v746 = vunpack.c.l.b16 %v66
  %v747 = vunpack.c.h.b16 %v66
  %v748 = vunpack.c.l.b16 %v67
  %v749 = vunpack.c.h.b16 %v67
  %v750 = vunpack.c.l.b16 %v68
  %v751 = vunpack.c.h.b16 %v68
  %v752 = vunpack.c.l.b16 %v69
  %v753 = vunpack.c.h.b16 %v69
  %v754 = vunpack.c.l.b16 %v70
  %v755 = vunpack.c.h.b16 %v70
  %v756 = vunpack.c.l.b16 %v71
  %v757 = vunpack.c.h.b16 %v71
  %v758 = vunpack.c.l.b16 %v72
  %v759 = vunpack.c.h.b16 %v72
  %v760 = vunpack.c.l.b16 %v73
  %v761 = vunpack.c.h.b16 %v73
  %v762 = vunpack.c.l.b16 %v74
  %v763 = vunpack.c.h.b16 %v74
  %v764 = vunpack.c.l.b16 %v75
  %v765 = vunpack.c.h.b16 %v75
  %v766 = vunpack.c.l.b16 %v76
  %v767 = vunpack.c.h.b16 %v76
  %v768 = vunpack.c.l.b16 %v77
  %v769 = vunpack.c.h.b16 %v77
  %v770 = vunpack.c.l.b16 %v78
  %v771 = vunpack.c.h.b16 %v78
  %v772 = vunpack.c.l.b16 %v79
  %v773 = vunpack.c.h.b16 %v79
  %v774 = vunpack.c.l.b16 %v80
  %v775 = vunpack.c.h.b16 %v80
  %v776 = vunpack.c.l.b16 %v81
  %v777 = vunpack.c.h.b16 %v81
  %v778 = vunpack.c.l.b16 %v82
  %v779 = vunpack.c.h.b16 %v82
  %v780 = vunpack.c.l.b16 %v83
  %v781 = vunpack.c.h.b16 %v83
  %v782 = vunpack.c.l.b16 %v84
  %v783 = vunpack.c.h.b16 %v84
  %v784 = vunpack.c.l.b16 %v85
  %v785 = vunpack.c.h.b16 %v85
  %v786 = vunpack.c.l.b16 %v86
  %v787 = vunpack.c.h.b16 %v86
  %v788 = vunpack.c.l.b16 %v87
  %v789 = vunpack.c.h.b16 %v87
  %v790 = vunpack.c.l.b16 %v88
  %v791 = vunpack.c.h.b16 %v88
  %v792 = vunpack.c.l.b16 %v89
  %v793 = vunpack.c.h.b16 %v89
  %v794 = vunpack.c.l.b16 %v90
  %v795 = vunpack.c.h.b16 %v90
  %v796 = vunpack.c.l.b16 %v91
  %v797 = vunpack.c.h.b16 %v91
  %v798 = vunpack.c.l.b16 %v92
  %v799 = vunpack.c.h.b16 %v92
  %v800 = vunpack.c.l.b16 %v93
  %v801 = vunpack.c.h.b16 %v93
  %v802 = vunpack.c.l.b16 %v94
  %v803 = vunpack.c.h.b16 %v94
  %v804 = vunpack.c.l.b16 %v95
  %v805 = vunpack.c.h.b16 %v95
  %v806 = vunpack.c.l.b16 %v96
  %v807 = vunpack.c.h.b16 %v96
  %v808 = vunpack.c.l.b16 %v97
  %v809 = vunpack.c.h.b16 %v97
  %v810 = vunpack.c.l.b16 %v98
  %v811 = vunpack.c.h.b16 %v98
  %v812 = vunpack.c.l.b16 %v99
  %v813 = vunpack.c.h.b16 %v99
  %v814 = vunpack.c.l.b16 %v100
  %v815 = vunpack.c.h.b16 %v100
  %v816 = vunpack.c.l.b16 %v101
  %v817 = vunpack.c.h.b16 %v101
  %v818 = vunpack.c.l.b16 %v102
  %v819 = vunpack.c.h.b16 %v102
  %v820 = vunpack.c.l.b16 %v103
  %v821 = vunpack.c.h.b16 %v103
  %v822 = vunpack.c.l.b16 %v104
  %v823 = vunpack.c.h.b16 %v104
  %v824 = vunpack.c.l.b16 %v105
  %v825 = vunpack.c.h.b16 %v105
  %v826 = vunpack.c.l.b16 %v106
  %v827 = vunpack.c.h.b16 %v106
  %v828 = vunpack.c.l.b16 %v107
  %v829 = vunpack.c.h.b16 %v107
  %v830 = vunpack.c.l.b16 %v108
  %v831 = vunpack.c.h.b16 %v108
  %v832 = vunpack.c.l.b16 %v109
  %v833 = vunpack.c.h.b16 %v109
  %v834 = vunpack.c.l.b16 %v110
  %v835 = vunpack.c.h.b16 %v110
  %v836 = vunpack.c.l.b16 %v111
  %v837 = vunpack.c.h.b16 %v111
  %v838 = vunpack.c.l.b16 %v112
  %v839 = vunpack.c.h.b16 %v112
  %v840 = vunpack.c.l.b16 %v113
  %v841 = vunpack.c.h.b16 %v113
  %v842 = vunpack.c.l.b16 %v114
  %v843 = vunpack.c.h.b16 %v114
  %v844 = vunpack.c.l.b16 %v115
  %v845 = vunpack.c.h.b16 %v115
  %v846 = vunpack.c.l.b16 %v116
  %v847 = vunpack.c.h.b16 %v116
  %v848 = vunpack.c.l.b16 %v117
  %v849 = vunpack.c.h.b16 %v117
  %v850 = vunpack.c.l.b16 %v118
  %v851 = vunpack.c.h.b16 %v118
  %v852 = vunpack.c.l.b16 %v119
  %v853 = vunpack.c.h.b16 %v119
  %v854 = vunpack.c.l.b16 %v120
  %v855 = vunpack.c.h.b16 %v120
  %v856 = vunpack.c.l.b16 %v121
  %v857 = vunpack.c.h.b16 %v121
  %v858 = vunpack.c.l.b16 %v122
  %v859 = vunpack.c.h.b16 %v122
  %v860 = vunpack.c.l.b16 %v123
  %v861 = vunpack.c.h.b16 %v123
  %v862 = vunpack.c.l.b16 %v124
  %v863 = vunpack.c.h.b16 %v124
  %v864 = vunpack.c.l.b16 %v125
  %v865 = vunpack.c.h.b16 %v125
  %v866 = vunpack.c.l.b16 %v126
  %v867 = vunpack.c.h.b16 %v126
  %v868 = vunpack.c.l.b16 %v127
  %v869 = vunpack.c.h.b16 %v127
  %v870 = vunpack.c.l.b16 %v128
  %v871 = vunpack.c.h.b16 %v128
  %v872 = vunpack.c.l.b16 %v129
  %v873 = vunpack.c.h.b16 %v129
  %v874 = vunpack.c.l.b16 %v130
  %v875 = vunpack.c.h.b16 %v130
  %v876 = vunpack.c.l.b16 %v131
  %v877 = vunpack.c.h.b16 %v131
  %v878 = vunpack.c.l.b16 %v132
  %v879 = vunpack.c.h.b16 %v132
  %v880 = vunpack.c.l.b16 %v133
  %v881 = vunpack.c.h.b16 %v133
  %v882 = vunpack.c.l.b16 %v134
  %v883 = vunpack.c.h.b16 %v134
  %v884 = vunpack.c.l.b16 %v135
  %v885 = vunpack.c.h.b16 %v135
  %v886 = vunpack.c.l.b16 %v136
  %v887 = vunpack.c.h.b16 %v136
  %v888 = vunpack.c.l.b16 %v137
  %v889 = vunpack.c.h.b16 %v137
  %v890 = vunpack.c.l.b16 %v138
  %v891 = vunpack.c.h.b16 %v138
  %v892 = vunpack.c.l.b16 %v139
  %v893 = vunpack.c.h.b16 %v139
  %v894 = vunpack.c.l.b16 %v140
  %v895 = vunpack.c.h.b16 %v140
  %v896 = vunpack.c.l.b16 %v141
  %v897 = vunpack.c.h.b16 %v141
  %v898 = vunpack.c.l.b16 %v142
  %v899 = vunpack.c.h.b16 %v142
  %v900 = vunpack.c.l.b16 %v143
  %v901 = vunpack.c.h.b16 %v143
  %v902 = vunpack.c.l.b16 %v144
  %v903 = vunpack.c.h.b16 %v144
  %v904 = vunpack.c.l.b16 %v145
  %v905 = vunpack.c.h.b16 %v145
  %v906 = vunpack.c.l.b16 %v146
  %v907 = vunpack.c.h.b16 %v146
  %v908 = vunpack.c.l.b16 %v147
  %v909 = vunpack.c.h.b16 %v147
  %v910 = vunpack.c.l.b16 %v148
  %v911 = vunpack.c.h.b16 %v148
  %v912 = vunpack.c.l.b16 %v149
  %v913 = vunpack.c.h.b16 %v149
  %v914 = vunpack.c.l.b16 %v150
  %v915 = vunpack.c.h.b16 %v150
  %v916 = vunpack.c.l.b16 %v151
  %v917 = vunpack.c.h.b16 %v151
  %v918 = vunpack.c.l.b16 %v152
  %v919 = vunpack.c.h.b16 %v152
  %v920 = vunpack.c.l.b16 %v153
  %v921 = vunpack.c.h.b16 %v153
  %v922 = vunpack.c.l.b16 %v154
  %v923 = vunpack.c.h.b16 %v154
  %v924 = vunpack.c.l.b16 %v155
  %v925 = vunpack.c.h.b16 %v155
  %v926 = vunpack.c.l.b16 %v156
  %v927 = vunpack.c.h.b16 %v156
  %v928 = vunpack.c.l.b16 %v157
  %v929 = vunpack.c.h.b16 %v157
  %v930 = vunpack.c.l.b16 %v158
  %v931 = vunpack.c.h.b16 %v158
  %v932 = vunpack.c.l.b16 %v159
  %v933 = vunpack.c.h.b16 %v159
  %v934 = vunpack.c.l.b16 %v160
  %v935 = vunpack.c.h.b16 %v160
  %v936 = vunpack.c.l.b16 %v161
  %v937 = vunpack.c.h.b16 %v161
  %v938 = vunpack.c.l.b16 %v162
  %v939 = vunpack.c.h.b16 %v162
  %v940 = vunpack.c.l.b16 %v163
  %v941 = vunpack.c.h.b16 %v163
  %v942 = vunpack.c.l.b16 %v164
  %v943 = vunpack.c.h.b16 %v164
  %v944 = vunpack.c.l.b16 %v165
  %v945 = vunpack.c.h.b16 %v165
  %v946 = vunpack.c.l.b16 %v166
  %v947 = vunpack.c.h.b16 %v166
  %v948 = vunpack.c.l.b16 %v167
  %v949 = vunpack.c.h.b16 %v167
  %v950 = vunpack.c.l.b16 %v168
  %v951 = vunpack.c.h.b16 %v168
  %v952 = vunpack.c.l.b16 %v169
  %v953 = vunpack.c.h.b16 %v169
  %v954 = vunpack.c.l.b16 %v170
  %v955 = vunpack.c.h.b16 %v170
  %v956 = vunpack.c.l.b16 %v171
  %v957 = vunpack.c.h.b16 %v171
  %v958 = vunpack.c.l.b16 %v172
  %v959 = vunpack.c.h.b16 %v172
  %v960 = vunpack.c.l.b16 %v173
  %v961 = vunpack.c.h.b16 %v173
  %v962 = vunpack.c.l.b16 %v174
  %v963 = vunpack.c.h.b16 %v174
  %v964 = vunpack.c.l.b16 %v175
  %v965 = vunpack.c.h.b16 %v175
  %v966 = vunpack.c.l.b16 %v176
  %v967 = vunpack.c.h.b16 %v176
  %v968 = vunpack.c.l.b16 %v177
  %v969 = vunpack.c.h.b16 %v177
  %v970 = vunpack.c.l.b16 %v178
  %v971 = vunpack.c.h.b16 %v178
  %v972 = vpack.c.b16 %v724, %v716
  %v973 = vpack.c.b16 %v725, %v717
  %v974 = vpack.c.b16 %v726, %v718
  %v975 = vpack.c.b16 %v727, %v719
  %v976 = vpack.c.b16 %v728, %v720
  %v977 = vpack.c.b16 %v729, %v721
  %v978 = vpack.c.b16 %v730, %v722
  %v979 = vpack.c.b16 %v731, %v723
  %v980 = vpack.c.b16 %v740, %v732
  %v981 = vpack.c.b16 %v741, %v733
  %v982 = vpack.c.b16 %v742, %v734
  %v983 = vpack.c.b16 %v743, %v735
  %v984 = vpack.c.b16 %v744, %v736
  %v985 = vpack.c.b16 %v745, %v737
  %v986 = vpack.c.b16 %v746, %v738
  %v987 = vpack.c.b16 %v747, %v739
  %v988 = vpack.c.b16 %v756, %v748
  %v989 = vpack.c.b16 %v757, %v749
  %v990 = vpack.c.b16 %v758, %v750
  %v991 = vpack.c.b16 %v759, %v751
  %v992 = vpack.c.b16 %v760, %v752
  %v993 = vpack.c.b16 %v761, %v753
  %v994 = vpack.c.b16 %v762, %v754
  %v995 = vpack.c.b16 %v763, %v755
  %v996 = vpack.c.b16 %v772, %v764
  %v997 = vpack.c.b16 %v773, %v765
  %v998 = vpack.c.b16 %v774, %v766
  %v999 = vpack.c.b16 %v775, %v767
  %v1000 = vpack.c.b16 %v776, %v768
  %v1001 = vpack.c.b16 %v777, %v769
  %v1002 = vpack.c.b16 %v778, %v770
  %v1003 = vpack.c.b16 %v779, %v771
  %v1004 = vpack.c.b16 %v788, %v780
  %v1005 = vpack.c.b16 %v789, %v781
  %v1006 = vpack.c.b16 %v790, %v782
  %v1007 = vpack.c.b16 %v791, %v783
  %v1008 = vpack.c.b16 %v792, %v784
  %v1009 = vpack.c.b16 %v793, %v785
  %v1010 = vpack.c.b16 %v794, %v786
  %v1011 = vpack.c.b16 %v795, %v787
  %v1012 = vpack.c.b16 %v804, %v796
  %v1013 = vpack.c.b16 %v805, %v797
  %v1014 = vpack.c.b16 %v806, %v798
  %v1015 = vpack.c.b16 %v807, %v799
  %v1016 = vpack.c.b16 %v808, %v800
  %v1017 = vpack.c.b16 %v809, %v801
  %v1018 = vpack.c.b16 %v810, %v802
  %v1019 = vpack.c.b16 %v811, %v803
  %v1020 = vpack.c.b16 %v820, %v812
  %v1021 = vpack.c.b16 %v821, %v813
  %v1022 = vpack.c.b16 %v822, %v814
  %v1023 = vpack.c.b16 %v823, %v815
  %v1024 = vpack.c.b16 %v824, %v816
  %v1025 = vpack.c.b16 %v825, %v817
  %v1026 = vpack.c.b16 %v826, %v818
  %v1027 = vpack.c.b16 %v827, %v819
  %v1028 = vpack.c.b16 %v836, %v828
  %v1029 = vpack.c.b16 %v837, %v829
  %v1030 = vpack.c.b16 %v838, %v830
  %v1031 = vpack.c.b16 %v839, %v831
  %v1032 = vpack.c.b16 %v840, %v832
  %v1033 = vpack.c.b16 %v841, %v833
  %v1034 = vpack.c.b16 %v842, %v834
  %v1035 = vpack.c.b16 %v843, %v835
  %v1036 = vpack.c.b16 %v852, %v844
  %v1037 = vpack.c.b16 %v853, %v845
  %v1038 = vpack.c.b16 %v854, %v846
  %v1039 = vpack.c.b16 %v855, %v847
  %v1040 = vpack.c.b16 %v856, %v848
  %v1041 = vpack.c.b16 %v857, %v849
  %v1042 = vpack.c.b16 %v858, %v850
  %v1043 = vpack.c.b16 %v859, %v851
  %v1044 = vpack.c.b16 %v868, %v860
  %v1045 = vpack.c.b16 %v869, %v861
  %v1046 = vpack.c.b16 %v870, %v862
  %v1047 = vpack.c.b16 %v871, %v863
  %v1048 = vpack.c.b16 %v872, %v864
  %v1049 = vpack.c.b16 %v873, %v865
  %v1050 = vpack.c.b16 %v874, %v866
  %v1051 = vpack.c.b16 %v875, %v867
  %v1052 = vpack.c.b16 %v884, %v876
  %v1053 = vpack.c.b16 %v885, %v877
  %v1054 = vpack.c.b16 %v886, %v878
  %v1055 = vpack.c.b16 %v887, %v879
  %v1056 = vpack.c.b16 %v888, %v880
  %v1057 = vpack.c.b16 %v889, %v881
  %v1058 = vpack.c.b16 %v890, %v882
  %v1059 = vpack.c.b16 %v891, %v883
  %v1060 = vpack.c.b16 %v900, %v892
  %v1061 = vpack.c.b16 %v901, %v893
  %v1062 = vpack.c.b16 %v902, %v894
  %v1063 = vpack.c.b16 %v903, %v895
  %v1064 = vpack.c.b16 %v904, %v896
  %v1065 = vpack.c.b16 %v905, %v897
  %v1066 = vpack.c.b16 %v906, %v898
  %v1067 = vpack.c.b16 %v907, %v899
  %v1068 = vpack.c.b16 %v916, %v908
  %v1069 = vpack.c.b16 %v917, %v909
  %v1070 = vpack.c.b16 %v918, %v910
  %v1071 = vpack.c.b16 %v919, %v911
  %v1072 = vpack.c.b16 %v920, %v912
  %v1073 = vpack.c.b16 %v921, %v913
  %v1074 = vpack.c.b16 %v922, %v914
  %v1075 = vpack.c.b16 %v923, %v915
  %v1076 = vpack.c.b16 %v932, %v924
  %v1077 = vpack.c.b16 %v933, %v925
  %v1078 = vpack.c.b16 %v934, %v926
  %v1079 = vpack.c.b16 %v935, %v927
  %v1080 = vpack.c.b16 %v936, %v928
  %v1081 = vpack.c.b16 %v937, %v929
  %v1082 = vpack.c.b16 %v938, %v930
  %v1083 = vpack.c.b16 %v939, %v931
  %v1084 = vpack.c.b16 %v948, %v940
  %v1085 = vpack.c.b16 %v949, %v941
  %v1086 = vpack.c.b16 %v950, %v942
  %v1087 = vpack.c.b16 %v951, %v943
  %v1088 = vpack.c.b16 %v952, %v944
  %v1089 = vpack.c.b16 %v953, %v945
  %v1090 = vpack.c.b16 %v954, %v946
  %v1091 = vpack.c.b16 %v955, %v947
  %v1092 = vpack.c.b16 %v964, %v956
  %v1093 = vpack.c.b16 %v965, %v957
  %v1094 = vpack.c.b16 %v966, %v958
  %v1095 = vpack.c.b16 %v967, %v959
  %v1096 = vpack.c.b16 %v968, %v960
  %v1097 = vpack.c.b16 %v969, %v961
  %v1098 = vpack.c.b16 %v970, %v962
  %v1099 = vpack.c.b16 %v971, %v963
  %1228 = vmatprep.subr.bf16.mxu0 %v973
  %1229 = vmatpush1.bf16.msra.mxu0 %v972
  %1230 = vmatprep.subr.bf16.mxu0 %v981
  %1231 = vmatpush1.bf16.msra.mxu0 %v980
  %1232 = vmatprep.subr.bf16.mxu0 %v989
  %1233 = vmatpush1.bf16.msra.mxu0 %v988
  %1234 = vmatprep.subr.bf16.mxu0 %v997
  %1235 = vmatpush1.bf16.msra.mxu0 %v996
  %1236 = vmatprep.subr.bf16.mxu0 %v1005
  %1237 = vmatpush1.bf16.msra.mxu0 %v1004
  %1238 = vmatprep.subr.bf16.mxu0 %v1013
  %1239 = vmatpush1.bf16.msra.mxu0 %v1012
  %1240 = vmatprep.subr.bf16.mxu0 %v1021
  %1241 = vmatpush1.bf16.msra.mxu0 %v1020
  %1242 = vmatprep.subr.bf16.mxu0 %v1029
  %1243 = vmatpush1.bf16.msra.mxu0 %v1028
  %1244 = vmatprep.subr.bf16.mxu0 %v1037
  %1245 = vmatpush1.bf16.msra.mxu0 %v1036
  %1246 = vmatprep.subr.bf16.mxu0 %v1045
  %1247 = vmatpush1.bf16.msra.mxu0 %v1044
  %1248 = vmatprep.subr.bf16.mxu0 %v1053
  %1249 = vmatpush1.bf16.msra.mxu0 %v1052
  %1250 = vmatprep.subr.bf16.mxu0 %v1061
  %1251 = vmatpush1.bf16.msra.mxu0 %v1060
  %1252 = vmatprep.subr.bf16.mxu0 %v1069
  %1253 = vmatpush1.bf16.msra.mxu0 %v1068
  %1254 = vmatprep.subr.bf16.mxu0 %v1077
  %1255 = vmatpush1.bf16.msra.mxu0 %v1076
  %1256 = vmatprep.subr.bf16.mxu0 %v1085
  %1257 = vmatpush1.bf16.msra.mxu0 %v1084
  %1258 = vmatprep.subr.bf16.mxu0 %v1093
  %1259 = vmatpush1.bf16.msra.mxu0 %v1092
  %1260 = vmatprep.mubr.bf16.mxu0 %v585
  %1261 = vmatmul.mubr.bf16.gmra.mrb[0].mxu0 %v584
  %v1262 = vpop.f32.mrb[0].mxu0
  %v1263 = vadd.f32 %v544, %v1262
  %v1264 = vpop.f32.mrb[0].mxu0
  %v1265 = vadd.f32 %v548, %v1264
  %v1266 = vpop.f32.mrb[0].mxu0
  %v1267 = vpop.f32.mrb[0].mxu0
  %1268 = vdwg.mxu0
  %1269 = vmatprep.subr.bf16.mxu0 %v975
  %1270 = vmatpush1.bf16.msra.mxu0 %v974
  %1271 = vmatprep.subr.bf16.mxu0 %v983
  %1272 = vmatpush1.bf16.msra.mxu0 %v982
  %1273 = vmatprep.subr.bf16.mxu0 %v991
  %1274 = vmatpush1.bf16.msra.mxu0 %v990
  %1275 = vmatprep.subr.bf16.mxu0 %v999
  %1276 = vmatpush1.bf16.msra.mxu0 %v998
  %1277 = vmatprep.subr.bf16.mxu0 %v1007
  %1278 = vmatpush1.bf16.msra.mxu0 %v1006
  %1279 = vmatprep.subr.bf16.mxu0 %v1015
  %1280 = vmatpush1.bf16.msra.mxu0 %v1014
  %1281 = vmatprep.subr.bf16.mxu0 %v1023
  %1282 = vmatpush1.bf16.msra.mxu0 %v1022
  %1283 = vmatprep.subr.bf16.mxu0 %v1031
  %1284 = vmatpush1.bf16.msra.mxu0 %v1030
  %1285 = vmatprep.subr.bf16.mxu0 %v1039
  %1286 = vmatpush1.bf16.msra.mxu0 %v1038
  %1287 = vmatprep.subr.bf16.mxu0 %v1047
  %1288 = vmatpush1.bf16.msra.mxu0 %v1046
  %1289 = vmatprep.subr.bf16.mxu0 %v1055
  %1290 = vmatpush1.bf16.msra.mxu0 %v1054
  %1291 = vmatprep.subr.bf16.mxu0 %v1063
  %1292 = vmatpush1.bf16.msra.mxu0 %v1062
  %1293 = vmatprep.subr.bf16.mxu0 %v1071
  %1294 = vmatpush1.bf16.msra.mxu0 %v1070
  %1295 = vmatprep.subr.bf16.mxu0 %v1079
  %1296 = vmatpush1.bf16.msra.mxu0 %v1078
  %1297 = vmatprep.subr.bf16.mxu0 %v1087
  %1298 = vmatpush1.bf16.msra.mxu0 %v1086
  %1299 = vmatprep.subr.bf16.mxu0 %v1095
  %1300 = vmatpush1.bf16.msra.mxu0 %v1094
  %1301 = vmatprep.mubr.bf16.mxu0 %v585
  %1302 = vmatmul.mubr.bf16.gmra.mrb[0].mxu0 %v584
  %v1303 = vpop.f32.mrb[0].mxu0
  %v1304 = vadd.f32 %v552, %v1303
  %v1305 = vpop.f32.mrb[0].mxu0
  %v1306 = vadd.f32 %v556, %v1305
  %v1307 = vpop.f32.mrb[0].mxu0
  %v1308 = vpop.f32.mrb[0].mxu0
  %1309 = vdwg.mxu0
  %1310 = vmatprep.subr.bf16.mxu0 %v977
  %1311 = vmatpush1.bf16.msra.mxu0 %v976
  %1312 = vmatprep.subr.bf16.mxu0 %v985
  %1313 = vmatpush1.bf16.msra.mxu0 %v984
  %1314 = vmatprep.subr.bf16.mxu0 %v993
  %1315 = vmatpush1.bf16.msra.mxu0 %v992
  %1316 = vmatprep.subr.bf16.mxu0 %v1001
  %1317 = vmatpush1.bf16.msra.mxu0 %v1000
  %1318 = vmatprep.subr.bf16.mxu0 %v1009
  %1319 = vmatpush1.bf16.msra.mxu0 %v1008
  %1320 = vmatprep.subr.bf16.mxu0 %v1017
  %1321 = vmatpush1.bf16.msra.mxu0 %v1016
  %1322 = vmatprep.subr.bf16.mxu0 %v1025
  %1323 = vmatpush1.bf16.msra.mxu0 %v1024
  %1324 = vmatprep.subr.bf16.mxu0 %v1033
  %1325 = vmatpush1.bf16.msra.mxu0 %v1032
  %1326 = vmatprep.subr.bf16.mxu0 %v1041
  %1327 = vmatpush1.bf16.msra.mxu0 %v1040
  %1328 = vmatprep.subr.bf16.mxu0 %v1049
  %1329 = vmatpush1.bf16.msra.mxu0 %v1048
  %1330 = vmatprep.subr.bf16.mxu0 %v1057
  %1331 = vmatpush1.bf16.msra.mxu0 %v1056
  %1332 = vmatprep.subr.bf16.mxu0 %v1065
  %1333 = vmatpush1.bf16.msra.mxu0 %v1064
  %1334 = vmatprep.subr.bf16.mxu0 %v1073
  %1335 = vmatpush1.bf16.msra.mxu0 %v1072
  %1336 = vmatprep.subr.bf16.mxu0 %v1081
  %1337 = vmatpush1.bf16.msra.mxu0 %v1080
  %1338 = vmatprep.subr.bf16.mxu0 %v1089
  %1339 = vmatpush1.bf16.msra.mxu0 %v1088
  %1340 = vmatprep.subr.bf16.mxu0 %v1097
  %1341 = vmatpush1.bf16.msra.mxu0 %v1096
  %1342 = vmatprep.mubr.bf16.mxu0 %v585
  %1343 = vmatmul.mubr.bf16.gmra.mrb[0].mxu0 %v584
  %v1344 = vpop.f32.mrb[0].mxu0
  %v1345 = vadd.f32 %v560, %v1344
  %v1346 = vpop.f32.mrb[0].mxu0
  %v1347 = vadd.f32 %v564, %v1346
  %v1348 = vpop.f32.mrb[0].mxu0
  %v1349 = vpop.f32.mrb[0].mxu0
  %1350 = vdwg.mxu0
  %1351 = vmatprep.subr.bf16.mxu0 %v979
  %1352 = vmatpush1.bf16.msra.mxu0 %v978
  %1353 = vmatprep.subr.bf16.mxu0 %v987
  %1354 = vmatpush1.bf16.msra.mxu0 %v986
  %1355 = vmatprep.subr.bf16.mxu0 %v995
  %1356 = vmatpush1.bf16.msra.mxu0 %v994
  %1357 = vmatprep.subr.bf16.mxu0 %v1003
  %1358 = vmatpush1.bf16.msra.mxu0 %v1002
  %1359 = vmatprep.subr.bf16.mxu0 %v1011
  %1360 = vmatpush1.bf16.msra.mxu0 %v1010
  %1361 = vmatprep.subr.bf16.mxu0 %v1019
  %1362 = vmatpush1.bf16.msra.mxu0 %v1018
  %1363 = vmatprep.subr.bf16.mxu0 %v1027
  %1364 = vmatpush1.bf16.msra.mxu0 %v1026
  %1365 = vmatprep.subr.bf16.mxu0 %v1035
  %1366 = vmatpush1.bf16.msra.mxu0 %v1034
  %1367 = vmatprep.subr.bf16.mxu0 %v1043
  %1368 = vmatpush1.bf16.msra.mxu0 %v1042
  %1369 = vmatprep.subr.bf16.mxu0 %v1051
  %1370 = vmatpush1.bf16.msra.mxu0 %v1050
  %1371 = vmatprep.subr.bf16.mxu0 %v1059
  %1372 = vmatpush1.bf16.msra.mxu0 %v1058
  %1373 = vmatprep.subr.bf16.mxu0 %v1067
  %1374 = vmatpush1.bf16.msra.mxu0 %v1066
  %1375 = vmatprep.subr.bf16.mxu0 %v1075
  %1376 = vmatpush1.bf16.msra.mxu0 %v1074
  %1377 = vmatprep.subr.bf16.mxu0 %v1083
  %1378 = vmatpush1.bf16.msra.mxu0 %v1082
  %1379 = vmatprep.subr.bf16.mxu0 %v1091
  %1380 = vmatpush1.bf16.msra.mxu0 %v1090
  %1381 = vmatprep.subr.bf16.mxu0 %v1099
  %1382 = vmatpush1.bf16.msra.mxu0 %v1098
  %1383 = vmatprep.mubr.bf16.mxu0 %v585
  %1384 = vmatmul.mubr.bf16.gmra.mrb[0].mxu0 %v584
  %v1385 = vpop.f32.mrb[0].mxu0
  %v1386 = vadd.f32 %v568, %v1385
  %v1387 = vpop.f32.mrb[0].mxu0
  %v1388 = vadd.f32 %v572, %v1387
  %v1389 = vpop.f32.mrb[0].mxu0
  %v1390 = vpop.f32.mrb[0].mxu0
  %1391 = vdwg.mxu0
  %v1392 = vmax.f32 %v1263, %v1345
  %v1393 = vmax.f32 %v1265, %v1347
  %v1394 = vmax.f32 %v1304, %v1386
  %v1395 = vmax.f32 %v1306, %v1388
  %v1396 = vpack.c.bf16 %v1392, %v1392
  %v1397 = vpack.c.bf16 %v1393, %v1393
  %v1398 = vpack.c.bf16 %v1394, %v1394
  %v1399 = vpack.c.bf16 %v1395, %v1395
  %v1401 = vlaneseq
  %v1402 = vshrl.u32 %v1401, 7
  %v1403 = vsub.s32 0, %v1402
  %v1404 = vrot.slane %v528, %v1403
  %v1470 = vunpack.c.l.b16 %v179
  %v1471 = vunpack.c.l.b16 %v180
  %v1472 = vunpack.c.l.b16 %v181
  %v1473 = vunpack.c.l.b16 %v182
  %v1474 = vunpack.c.l.b16 %v183
  %v1475 = vunpack.c.l.b16 %v184
  %v1476 = vunpack.c.l.b16 %v185
  %v1477 = vunpack.c.l.b16 %v186
  %v1478 = vunpack.c.l.b16 %v187
  %v1479 = vunpack.c.l.b16 %v188
  %v1480 = vunpack.c.l.b16 %v189
  %v1481 = vunpack.c.l.b16 %v190
  %v1482 = vunpack.c.l.b16 %v191
  %v1483 = vunpack.c.l.b16 %v192
  %v1484 = vunpack.c.l.b16 %v193
  %v1485 = vunpack.c.l.b16 %v194
  %v1486 = vunpack.c.l.b16 %v195
  %v1487 = vunpack.c.l.b16 %v196
  %v1488 = vunpack.c.l.b16 %v197
  %v1489 = vunpack.c.l.b16 %v198
  %v1490 = vunpack.c.l.b16 %v199
  %v1491 = vunpack.c.l.b16 %v200
  %v1492 = vunpack.c.l.b16 %v201
  %v1493 = vunpack.c.l.b16 %v202
  %v1494 = vunpack.c.l.b16 %v203
  %v1495 = vunpack.c.l.b16 %v204
  %v1496 = vunpack.c.l.b16 %v205
  %v1497 = vunpack.c.l.b16 %v206
  %v1498 = vunpack.c.l.b16 %v207
  %v1499 = vunpack.c.l.b16 %v208
  %v1500 = vunpack.c.l.b16 %v209
  %v1501 = vunpack.c.l.b16 %v210
  %v1502 = vunpack.c.l.b16 %v211
  %v1503 = vunpack.c.l.b16 %v212
  %v1504 = vunpack.c.l.b16 %v213
  %v1505 = vunpack.c.l.b16 %v214
  %v1506 = vunpack.c.l.b16 %v215
  %v1507 = vunpack.c.l.b16 %v216
  %v1508 = vunpack.c.l.b16 %v217
  %v1509 = vunpack.c.l.b16 %v218
  %v1510 = vunpack.c.l.b16 %v219
  %v1511 = vunpack.c.l.b16 %v220
  %v1512 = vunpack.c.l.b16 %v221
  %v1513 = vunpack.c.l.b16 %v222
  %v1514 = vunpack.c.l.b16 %v223
  %v1515 = vunpack.c.l.b16 %v224
  %v1516 = vunpack.c.l.b16 %v225
  %v1517 = vunpack.c.l.b16 %v226
  %v1518 = vunpack.c.l.b16 %v227
  %v1519 = vunpack.c.l.b16 %v228
  %v1520 = vunpack.c.l.b16 %v229
  %v1521 = vunpack.c.l.b16 %v230
  %v1522 = vunpack.c.l.b16 %v231
  %v1523 = vunpack.c.l.b16 %v232
  %v1524 = vunpack.c.l.b16 %v233
  %v1525 = vunpack.c.l.b16 %v234
  %v1526 = vunpack.c.l.b16 %v235
  %v1527 = vunpack.c.l.b16 %v236
  %v1528 = vunpack.c.l.b16 %v237
  %v1529 = vunpack.c.l.b16 %v238
  %v1530 = vunpack.c.l.b16 %v239
  %v1531 = vunpack.c.l.b16 %v240
  %v1532 = vunpack.c.l.b16 %v241
  %v1533 = vunpack.c.l.b16 %v242
  %v1534 = vpack.c.b16 %v1471, %v1470
  %v1535 = vpack.c.b16 %v1473, %v1472
  %v1536 = vpack.c.b16 %v1475, %v1474
  %v1537 = vpack.c.b16 %v1477, %v1476
  %v1538 = vpack.c.b16 %v1479, %v1478
  %v1539 = vpack.c.b16 %v1481, %v1480
  %v1540 = vpack.c.b16 %v1483, %v1482
  %v1541 = vpack.c.b16 %v1485, %v1484
  %v1542 = vpack.c.b16 %v1487, %v1486
  %v1543 = vpack.c.b16 %v1489, %v1488
  %v1544 = vpack.c.b16 %v1491, %v1490
  %v1545 = vpack.c.b16 %v1493, %v1492
  %v1546 = vpack.c.b16 %v1495, %v1494
  %v1547 = vpack.c.b16 %v1497, %v1496
  %v1548 = vpack.c.b16 %v1499, %v1498
  %v1549 = vpack.c.b16 %v1501, %v1500
  %v1550 = vpack.c.b16 %v1503, %v1502
  %v1551 = vpack.c.b16 %v1505, %v1504
  %v1552 = vpack.c.b16 %v1507, %v1506
  %v1553 = vpack.c.b16 %v1509, %v1508
  %v1554 = vpack.c.b16 %v1511, %v1510
  %v1555 = vpack.c.b16 %v1513, %v1512
  %v1556 = vpack.c.b16 %v1515, %v1514
  %v1557 = vpack.c.b16 %v1517, %v1516
  %v1558 = vpack.c.b16 %v1519, %v1518
  %v1559 = vpack.c.b16 %v1521, %v1520
  %v1560 = vpack.c.b16 %v1523, %v1522
  %v1561 = vpack.c.b16 %v1525, %v1524
  %v1562 = vpack.c.b16 %v1527, %v1526
  %v1563 = vpack.c.b16 %v1529, %v1528
  %v1564 = vpack.c.b16 %v1531, %v1530
  %v1565 = vpack.c.b16 %v1533, %v1532
  %1598 = vmatprep.subr.bf16.mxu0 0
  %1599 = vmatpush1.bf16.msra.mxu0 %v1534
  %1600 = vmatprep.subr.bf16.mxu0 0
  %1601 = vmatpush1.bf16.msra.mxu0 %v1535
  %1602 = vmatprep.subr.bf16.mxu0 0
  %1603 = vmatpush1.bf16.msra.mxu0 %v1536
  %1604 = vmatprep.subr.bf16.mxu0 0
  %1605 = vmatpush1.bf16.msra.mxu0 %v1537
  %1606 = vmatprep.subr.bf16.mxu0 0
  %1607 = vmatpush1.bf16.msra.mxu0 %v1538
  %1608 = vmatprep.subr.bf16.mxu0 0
  %1609 = vmatpush1.bf16.msra.mxu0 %v1539
  %1610 = vmatprep.subr.bf16.mxu0 0
  %1611 = vmatpush1.bf16.msra.mxu0 %v1540
  %1612 = vmatprep.subr.bf16.mxu0 0
  %1613 = vmatpush1.bf16.msra.mxu0 %v1541
  %1614 = vmatprep.subr.bf16.mxu0 0
  %1615 = vmatpush1.bf16.msra.mxu0 %v1542
  %1616 = vmatprep.subr.bf16.mxu0 0
  %1617 = vmatpush1.bf16.msra.mxu0 %v1543
  %1618 = vmatprep.subr.bf16.mxu0 0
  %1619 = vmatpush1.bf16.msra.mxu0 %v1544
  %1620 = vmatprep.subr.bf16.mxu0 0
  %1621 = vmatpush1.bf16.msra.mxu0 %v1545
  %1622 = vmatprep.subr.bf16.mxu0 0
  %1623 = vmatpush1.bf16.msra.mxu0 %v1546
  %1624 = vmatprep.subr.bf16.mxu0 0
  %1625 = vmatpush1.bf16.msra.mxu0 %v1547
  %1626 = vmatprep.subr.bf16.mxu0 0
  %1627 = vmatpush1.bf16.msra.mxu0 %v1548
  %1628 = vmatprep.subr.bf16.mxu0 0
  %1629 = vmatpush1.bf16.msra.mxu0 %v1549
  %1630 = vmatprep.mubr.bf16.mxu0 %v1397
  %1631 = vmatmul.mubr.bf16.gmra.mrb[0].mxu0 %v1396
  %v1632 = vpop.f32.mrb[0].mxu0
  %v1633 = vadd.f32 %v1404, %v1632
  %v1634 = vpop.f32.mrb[0].mxu0
  %v1635 = vpop.f32.mrb[0].mxu0
  %v1636 = vpop.f32.mrb[0].mxu0
  %1637 = vdwg.mxu0
  %1638 = vmatprep.subr.bf16.mxu0 0
  %1639 = vmatpush1.bf16.msra.mxu0 %v1550
  %1640 = vmatprep.subr.bf16.mxu0 0
  %1641 = vmatpush1.bf16.msra.mxu0 %v1551
  %1642 = vmatprep.subr.bf16.mxu0 0
  %1643 = vmatpush1.bf16.msra.mxu0 %v1552
  %1644 = vmatprep.subr.bf16.mxu0 0
  %1645 = vmatpush1.bf16.msra.mxu0 %v1553
  %1646 = vmatprep.subr.bf16.mxu0 0
  %1647 = vmatpush1.bf16.msra.mxu0 %v1554
  %1648 = vmatprep.subr.bf16.mxu0 0
  %1649 = vmatpush1.bf16.msra.mxu0 %v1555
  %1650 = vmatprep.subr.bf16.mxu0 0
  %1651 = vmatpush1.bf16.msra.mxu0 %v1556
  %1652 = vmatprep.subr.bf16.mxu0 0
  %1653 = vmatpush1.bf16.msra.mxu0 %v1557
  %1654 = vmatprep.subr.bf16.mxu0 0
  %1655 = vmatpush1.bf16.msra.mxu0 %v1558
  %1656 = vmatprep.subr.bf16.mxu0 0
  %1657 = vmatpush1.bf16.msra.mxu0 %v1559
  %1658 = vmatprep.subr.bf16.mxu0 0
  %1659 = vmatpush1.bf16.msra.mxu0 %v1560
  %1660 = vmatprep.subr.bf16.mxu0 0
  %1661 = vmatpush1.bf16.msra.mxu0 %v1561
  %1662 = vmatprep.subr.bf16.mxu0 0
  %1663 = vmatpush1.bf16.msra.mxu0 %v1562
  %1664 = vmatprep.subr.bf16.mxu0 0
  %1665 = vmatpush1.bf16.msra.mxu0 %v1563
  %1666 = vmatprep.subr.bf16.mxu0 0
  %1667 = vmatpush1.bf16.msra.mxu0 %v1564
  %1668 = vmatprep.subr.bf16.mxu0 0
  %1669 = vmatpush1.bf16.msra.mxu0 %v1565
  %1670 = vmatprep.mubr.bf16.mxu0 %v1399
  %1671 = vmatmul.mubr.bf16.gmra.mrb[0].mxu0 %v1398
  %v1672 = vpop.f32.mrb[0].mxu0
  %v1673 = vadd.f32 %v1633, %v1672
  %v1674 = vpop.f32.mrb[0].mxu0
  %v1675 = vpop.f32.mrb[0].mxu0
  %v1676 = vpop.f32.mrb[0].mxu0
  %1677 = vdwg.mxu0
  %v1678 = vmax.f32 %v1673, 0.0
  %v1679 = vpack.c.bf16 %v1678, %v1678
  %v1681 = vlaneseq
  %v1682 = vshrl.u32 %v1681, 7
  %v1683 = vsub.s32 0, %v1682
  %v1684 = vrot.slane %v529, %v1683
  %v1685 = vlaneseq
  %v1686 = vshrl.u32 %v1685, 7
  %v1687 = vsub.s32 1, %v1686
  %v1688 = vrot.slane %v529, %v1687
  %v1701 = vunpack.c.l.b16 %v243
  %v1702 = vunpack.c.h.b16 %v243
  %v1703 = vunpack.c.l.b16 %v244
  %v1704 = vunpack.c.h.b16 %v244
  %v1705 = vunpack.c.l.b16 %v245
  %v1706 = vunpack.c.h.b16 %v245
  %v1707 = vunpack.c.l.b16 %v246
  %v1708 = vunpack.c.h.b16 %v246
  %v1709 = vunpack.c.l.b16 %v247
  %v1710 = vunpack.c.h.b16 %v247
  %v1711 = vunpack.c.l.b16 %v248
  %v1712 = vunpack.c.h.b16 %v248
  %v1713 = vunpack.c.l.b16 %v249
  %v1714 = vunpack.c.h.b16 %v249
  %v1715 = vunpack.c.l.b16 %v250
  %v1716 = vunpack.c.h.b16 %v250
  %v1717 = vunpack.c.l.b16 %v251
  %v1718 = vunpack.c.h.b16 %v251
  %v1719 = vunpack.c.l.b16 %v252
  %v1720 = vunpack.c.h.b16 %v252
  %v1721 = vpack.c.b16 %v1703, %v1701
  %v1722 = vpack.c.b16 %v1704, %v1702
  %v1723 = vpack.c.b16 %v1707, %v1705
  %v1724 = vpack.c.b16 %v1708, %v1706
  %v1725 = vpack.c.b16 %v1711, %v1709
  %v1726 = vpack.c.b16 %v1712, %v1710
  %v1727 = vpack.c.b16 %v1715, %v1713
  %v1728 = vpack.c.b16 %v1716, %v1714
  %v1729 = vpack.c.b16 %v1719, %v1717
  %v1730 = vpack.c.b16 %v1720, %v1718
  %vm1741 = vcmask 654336
  %v1743 = vsel %vm1741, %v1679, 0
  %1745 = vmatprep.subr.bf16.mxu0 %v1722
  %1746 = vmatpush1.bf16.msra.mxu0 %v1721
  %1747 = vmatprep.subr.bf16.mxu0 %v1724
  %1748 = vmatpush1.bf16.msra.mxu0 %v1723
  %1749 = vmatprep.subr.bf16.mxu0 %v1726
  %1750 = vmatpush1.bf16.msra.mxu0 %v1725
  %1751 = vmatprep.subr.bf16.mxu0 %v1728
  %1752 = vmatpush1.bf16.msra.mxu0 %v1727
  %1753 = vmatprep.subr.bf16.mxu0 %v1730
  %1754 = vmatpush1.bf16.msra.mxu0 %v1729
  %1755 = vmatprep.subr.bf16.mxu0 0
  %1756 = vmatpush1.bf16.msra.mxu0 0
  %1757 = vmatprep.subr.bf16.mxu0 0
  %1758 = vmatpush1.bf16.msra.mxu0 0
  %1759 = vmatprep.subr.bf16.mxu0 0
  %1760 = vmatpush1.bf16.msra.mxu0 0
  %1761 = vmatprep.subr.bf16.mxu0 0
  %1762 = vmatpush1.bf16.msra.mxu0 0
  %1763 = vmatprep.subr.bf16.mxu0 0
  %1764 = vmatpush1.bf16.msra.mxu0 0
  %1765 = vmatprep.subr.bf16.mxu0 0
  %1766 = vmatpush1.bf16.msra.mxu0 0
  %1767 = vmatprep.subr.bf16.mxu0 0
  %1768 = vmatpush1.bf16.msra.mxu0 0
  %1769 = vmatprep.subr.bf16.mxu0 0
  %1770 = vmatpush1.bf16.msra.mxu0 0
  %1771 = vmatprep.subr.bf16.mxu0 0
  %1772 = vmatpush1.bf16.msra.mxu0 0
  %1773 = vmatprep.subr.bf16.mxu0 0
  %1774 = vmatpush1.bf16.msra.mxu0 0
  %1775 = vmatprep.subr.bf16.mxu0 0
  %1776 = vmatpush1.bf16.msra.mxu0 0
  %1777 = vmatprep.mubr.bf16.mxu0 0
  %1778 = vmatmul.mubr.bf16.gmra.mrb[0].mxu0 %v1743
  %v1779 = vpop.f32.mrb[0].mxu0
  %v1780 = vadd.f32 %v1684, %v1779
  %v1781 = vpop.f32.mrb[0].mxu0
  %v1782 = vadd.f32 %v1688, %v1781
  %v1783 = vpop.f32.mrb[0].mxu0
  %v1784 = vpop.f32.mrb[0].mxu0
  %1785 = vdwg.mxu0
  %v1786 = vadd.f32 %v1780, 3.0
  %v1787 = vadd.f32 %v1782, 3.0
  %v1788 = vmax.f32 %v1786, 0.0
  %v1789 = vmax.f32 %v1787, 0.0
  %v1790 = vmin.f32 %v1788, 6.0
  %v1791 = vmin.f32 %v1789, 6.0
  %v1792 = vmul.f32 %v1790, 0.16666667
  %v1793 = vmul.f32 %v1791, 0.16666667
  %v1794 = vpack.c.bf16 %v1792, %v1792
  %v1795 = vpack.c.bf16 %v1793, %v1793
  %v1797 = vlaneseq
  %v1798 = vshrl.u32 %v1797, 7
  %v1799 = vsub.s32 0, %v1798
  %v1800 = vrot.slane %v530, %v1799
  %v1801 = vlaneseq
  %v1802 = vshrl.u32 %v1801, 7
  %v1803 = vsub.s32 1, %v1802
  %v1804 = vrot.slane %v530, %v1803
  %v1839 = vunpack.c.l.b16 %v253
  %v1840 = vunpack.c.h.b16 %v253
  %v1841 = vunpack.c.l.b16 %v254
  %v1842 = vunpack.c.h.b16 %v254
  %v1843 = vunpack.c.l.b16 %v255
  %v1844 = vunpack.c.h.b16 %v255
  %v1845 = vunpack.c.l.b16 %v256
  %v1846 = vunpack.c.h.b16 %v256
  %v1847 = vunpack.c.l.b16 %v257
  %v1848 = vunpack.c.h.b16 %v257
  %v1849 = vunpack.c.l.b16 %v258
  %v1850 = vunpack.c.h.b16 %v258
  %v1851 = vunpack.c.l.b16 %v259
  %v1852 = vunpack.c.h.b16 %v259
  %v1853 = vunpack.c.l.b16 %v260
  %v1854 = vunpack.c.h.b16 %v260
  %v1855 = vunpack.c.l.b16 %v261
  %v1856 = vunpack.c.h.b16 %v261
  %v1857 = vunpack.c.l.b16 %v262
  %v1858 = vunpack.c.h.b16 %v262
  %v1859 = vunpack.c.l.b16 %v263
  %v1860 = vunpack.c.h.b16 %v263
  %v1861 = vunpack.c.l.b16 %v264
  %v1862 = vunpack.c.h.b16 %v264
  %v1863 = vunpack.c.l.b16 %v265
  %v1864 = vunpack.c.h.b16 %v265
  %v1865 = vunpack.c.l.b16 %v266
  %v1866 = vunpack.c.h.b16 %v266
  %v1867 = vunpack.c.l.b16 %v267
  %v1868 = vunpack.c.h.b16 %v267
  %v1869 = vunpack.c.l.b16 %v268
  %v1870 = vunpack.c.h.b16 %v268
  %v1871 = vunpack.c.l.b16 %v269
  %v1872 = vunpack.c.h.b16 %v269
  %v1873 = vunpack.c.l.b16 %v270
  %v1874 = vunpack.c.h.b16 %v270
  %v1875 = vunpack.c.l.b16 %v271
  %v1876 = vunpack.c.h.b16 %v271
  %v1877 = vunpack.c.l.b16 %v272
  %v1878 = vunpack.c.h.b16 %v272
  %v1879 = vunpack.c.l.b16 %v273
  %v1880 = vunpack.c.h.b16 %v273
  %v1881 = vunpack.c.l.b16 %v274
  %v1882 = vunpack.c.h.b16 %v274
  %v1883 = vunpack.c.l.b16 %v275
  %v1884 = vunpack.c.h.b16 %v275
  %v1885 = vunpack.c.l.b16 %v276
  %v1886 = vunpack.c.h.b16 %v276
  %v1887 = vunpack.c.l.b16 %v277
  %v1888 = vunpack.c.h.b16 %v277
  %v1889 = vunpack.c.l.b16 %v278
  %v1890 = vunpack.c.h.b16 %v278
  %v1891 = vunpack.c.l.b16 %v279
  %v1892 = vunpack.c.h.b16 %v279
  %v1893 = vunpack.c.l.b16 %v280
  %v1894 = vunpack.c.h.b16 %v280
  %v1895 = vunpack.c.l.b16 %v281
  %v1896 = vunpack.c.h.b16 %v281
  %v1897 = vunpack.c.l.b16 %v282
  %v1898 = vunpack.c.h.b16 %v282
  %v1899 = vunpack.c.l.b16 %v283
  %v1900 = vunpack.c.h.b16 %v283
  %v1901 = vunpack.c.l.b16 %v284
  %v1902 = vunpack.c.h.b16 %v284
  %v1903 = vpack.c.b16 %v1841, %v1839
  %v1904 = vpack.c.b16 %v1842, %v1840
  %v1905 = vpack.c.b16 %v1845, %v1843
  %v1906 = vpack.c.b16 %v1846, %v1844
  %v1907 = vpack.c.b16 %v1849, %v1847
  %v1908 = vpack.c.b16 %v1850, %v1848
  %v1909 = vpack.c.b16 %v1853, %v1851
  %v1910 = vpack.c.b16 %v1854, %v1852
  %v1911 = vpack.c.b16 %v1857, %v1855
  %v1912 = vpack.c.b16 %v1858, %v1856
  %v1913 = vpack.c.b16 %v1861, %v1859
  %v1914 = vpack.c.b16 %v1862, %v1860
  %v1915 = vpack.c.b16 %v1865, %v1863
  %v1916 = vpack.c.b16 %v1866, %v1864
  %v1917 = vpack.c.b16 %v1869, %v1867
  %v1918 = vpack.c.b16 %v1870, %v1868
  %v1919 = vpack.c.b16 %v1873, %v1871
  %v1920 = vpack.c.b16 %v1874, %v1872
  %v1921 = vpack.c.b16 %v1877, %v1875
  %v1922 = vpack.c.b16 %v1878, %v1876
  %v1923 = vpack.c.b16 %v1881, %v1879
  %v1924 = vpack.c.b16 %v1882, %v1880
  %v1925 = vpack.c.b16 %v1885, %v1883
  %v1926 = vpack.c.b16 %v1886, %v1884
  %v1927 = vpack.c.b16 %v1889, %v1887
  %v1928 = vpack.c.b16 %v1890, %v1888
  %v1929 = vpack.c.b16 %v1893, %v1891
  %v1930 = vpack.c.b16 %v1894, %v1892
  %v1931 = vpack.c.b16 %v1897, %v1895
  %v1932 = vpack.c.b16 %v1898, %v1896
  %v1933 = vpack.c.b16 %v1901, %v1899
  %v1934 = vpack.c.b16 %v1902, %v1900
  %1967 = vmatprep.subr.bf16.mxu0 %v1904
  %1968 = vmatpush1.bf16.msra.mxu0 %v1903
  %1969 = vmatprep.subr.bf16.mxu0 %v1906
  %1970 = vmatpush1.bf16.msra.mxu0 %v1905
  %1971 = vmatprep.subr.bf16.mxu0 %v1908
  %1972 = vmatpush1.bf16.msra.mxu0 %v1907
  %1973 = vmatprep.subr.bf16.mxu0 %v1910
  %1974 = vmatpush1.bf16.msra.mxu0 %v1909
  %1975 = vmatprep.subr.bf16.mxu0 %v1912
  %1976 = vmatpush1.bf16.msra.mxu0 %v1911
  %1977 = vmatprep.subr.bf16.mxu0 %v1914
  %1978 = vmatpush1.bf16.msra.mxu0 %v1913
  %1979 = vmatprep.subr.bf16.mxu0 %v1916
  %1980 = vmatpush1.bf16.msra.mxu0 %v1915
  %1981 = vmatprep.subr.bf16.mxu0 %v1918
  %1982 = vmatpush1.bf16.msra.mxu0 %v1917
  %1983 = vmatprep.subr.bf16.mxu0 %v1920
  %1984 = vmatpush1.bf16.msra.mxu0 %v1919
  %1985 = vmatprep.subr.bf16.mxu0 %v1922
  %1986 = vmatpush1.bf16.msra.mxu0 %v1921
  %1987 = vmatprep.subr.bf16.mxu0 %v1924
  %1988 = vmatpush1.bf16.msra.mxu0 %v1923
  %1989 = vmatprep.subr.bf16.mxu0 %v1926
  %1990 = vmatpush1.bf16.msra.mxu0 %v1925
  %1991 = vmatprep.subr.bf16.mxu0 %v1928
  %1992 = vmatpush1.bf16.msra.mxu0 %v1927
  %1993 = vmatprep.subr.bf16.mxu0 %v1930
  %1994 = vmatpush1.bf16.msra.mxu0 %v1929
  %1995 = vmatprep.subr.bf16.mxu0 %v1932
  %1996 = vmatpush1.bf16.msra.mxu0 %v1931
  %1997 = vmatprep.subr.bf16.mxu0 %v1934
  %1998 = vmatpush1.bf16.msra.mxu0 %v1933
  %1999 = vmatprep.mubr.bf16.mxu0 %v1795
  %2000 = vmatmul.mubr.bf16.gmra.mrb[0].mxu0 %v1794
  %v2001 = vpop.f32.mrb[0].mxu0
  %v2002 = vadd.f32 %v1800, %v2001
  %v2003 = vpop.f32.mrb[0].mxu0
  %v2004 = vadd.f32 %v1804, %v2003
  %v2005 = vpop.f32.mrb[0].mxu0
  %v2006 = vpop.f32.mrb[0].mxu0
  %2007 = vdwg.mxu0
  %v2008 = vadd.f32 %v2002, 3.0
  %v2009 = vadd.f32 %v2004, 3.0
  %v2010 = vmax.f32 %v2008, 0.0
  %v2011 = vmax.f32 %v2009, 0.0
  %v2012 = vmin.f32 %v2010, 6.0
  %v2013 = vmin.f32 %v2011, 6.0
  %v2014 = vmul.f32 %v2012, 0.16666667
  %v2015 = vmul.f32 %v2013, 0.16666667
  %v2016 = vmul.f32 %v2002, %v2014
  %v2017 = vmul.f32 %v2004, %v2015
  %v2018 = vpack.c.bf16 %v2016, %v2016
  %v2019 = vpack.c.bf16 %v2017, %v2017
  %v2021 = vlaneseq
  %v2022 = vshrl.u32 %v2021, 7
  %v2023 = vsub.s32 0, %v2022
  %v2024 = vrot.slane %v531, %v2023
  %v2025 = vlaneseq
  %v2026 = vshrl.u32 %v2025, 7
  %v2027 = vsub.s32 1, %v2026
  %v2028 = vrot.slane %v531, %v2027
  %v2029 = vlaneseq
  %v2030 = vshrl.u32 %v2029, 7
  %v2031 = vsub.s32 2, %v2030
  %v2032 = vrot.slane %v531, %v2031
  %v2076 = vunpack.c.l.b16 %v285
  %v2077 = vunpack.c.h.b16 %v285
  %v2078 = vunpack.c.l.b16 %v286
  %v2079 = vunpack.c.l.b16 %v287
  %v2080 = vunpack.c.h.b16 %v287
  %v2081 = vunpack.c.l.b16 %v288
  %v2082 = vunpack.c.l.b16 %v289
  %v2083 = vunpack.c.h.b16 %v289
  %v2084 = vunpack.c.l.b16 %v290
  %v2085 = vunpack.c.l.b16 %v291
  %v2086 = vunpack.c.h.b16 %v291
  %v2087 = vunpack.c.l.b16 %v292
  %v2088 = vunpack.c.l.b16 %v293
  %v2089 = vunpack.c.h.b16 %v293
  %v2090 = vunpack.c.l.b16 %v294
  %v2091 = vunpack.c.l.b16 %v295
  %v2092 = vunpack.c.h.b16 %v295
  %v2093 = vunpack.c.l.b16 %v296
  %v2094 = vunpack.c.l.b16 %v297
  %v2095 = vunpack.c.h.b16 %v297
  %v2096 = vunpack.c.l.b16 %v298
  %v2097 = vunpack.c.l.b16 %v299
  %v2098 = vunpack.c.h.b16 %v299
  %v2099 = vunpack.c.l.b16 %v300
  %v2100 = vunpack.c.l.b16 %v301
  %v2101 = vunpack.c.h.b16 %v301
  %v2102 = vunpack.c.l.b16 %v302
  %v2103 = vunpack.c.l.b16 %v303
  %v2104 = vunpack.c.h.b16 %v303
  %v2105 = vunpack.c.l.b16 %v304
  %v2106 = vunpack.c.l.b16 %v305
  %v2107 = vunpack.c.h.b16 %v305
  %v2108 = vunpack.c.l.b16 %v306
  %v2109 = vunpack.c.l.b16 %v307
  %v2110 = vunpack.c.h.b16 %v307
  %v2111 = vunpack.c.l.b16 %v308
  %v2112 = vunpack.c.l.b16 %v309
  %v2113 = vunpack.c.h.b16 %v309
  %v2114 = vunpack.c.l.b16 %v310
  %v2115 = vunpack.c.l.b16 %v311
  %v2116 = vunpack.c.h.b16 %v311
  %v2117 = vunpack.c.l.b16 %v312
  %v2118 = vunpack.c.l.b16 %v313
  %v2119 = vunpack.c.h.b16 %v313
  %v2120 = vunpack.c.l.b16 %v314
  %v2121 = vunpack.c.l.b16 %v315
  %v2122 = vunpack.c.h.b16 %v315
  %v2123 = vunpack.c.l.b16 %v316
  %v2124 = vunpack.c.l.b16 %v317
  %v2125 = vunpack.c.h.b16 %v317
  %v2126 = vunpack.c.l.b16 %v318
  %v2127 = vunpack.c.l.b16 %v319
  %v2128 = vunpack.c.h.b16 %v319
  %v2129 = vunpack.c.l.b16 %v320
  %v2130 = vunpack.c.l.b16 %v321
  %v2131 = vunpack.c.h.b16 %v321
  %v2132 = vunpack.c.l.b16 %v322
  %v2133 = vunpack.c.l.b16 %v323
  %v2134 = vunpack.c.h.b16 %v323
  %v2135 = vunpack.c.l.b16 %v324
  %v2136 = vpack.c.b16 %v2079, %v2076
  %v2137 = vpack.c.b16 %v2080, %v2077
  %v2138 = vpack.c.b16 %v2081, %v2078
  %v2139 = vpack.c.b16 %v2085, %v2082
  %v2140 = vpack.c.b16 %v2086, %v2083
  %v2141 = vpack.c.b16 %v2087, %v2084
  %v2142 = vpack.c.b16 %v2091, %v2088
  %v2143 = vpack.c.b16 %v2092, %v2089
  %v2144 = vpack.c.b16 %v2093, %v2090
  %v2145 = vpack.c.b16 %v2097, %v2094
  %v2146 = vpack.c.b16 %v2098, %v2095
  %v2147 = vpack.c.b16 %v2099, %v2096
  %v2148 = vpack.c.b16 %v2103, %v2100
  %v2149 = vpack.c.b16 %v2104, %v2101
  %v2150 = vpack.c.b16 %v2105, %v2102
  %v2151 = vpack.c.b16 %v2109, %v2106
  %v2152 = vpack.c.b16 %v2110, %v2107
  %v2153 = vpack.c.b16 %v2111, %v2108
  %v2154 = vpack.c.b16 %v2115, %v2112
  %v2155 = vpack.c.b16 %v2116, %v2113
  %v2156 = vpack.c.b16 %v2117, %v2114
  %v2157 = vpack.c.b16 %v2121, %v2118
  %v2158 = vpack.c.b16 %v2122, %v2119
  %v2159 = vpack.c.b16 %v2123, %v2120
  %v2160 = vpack.c.b16 %v2127, %v2124
  %v2161 = vpack.c.b16 %v2128, %v2125
  %v2162 = vpack.c.b16 %v2129, %v2126
  %v2163 = vpack.c.b16 %v2133, %v2130
  %v2164 = vpack.c.b16 %v2134, %v2131
  %v2165 = vpack.c.b16 %v2135, %v2132
  %vm2196 = vcmask 261120
  %v2198 = vsel %vm2196, %v2019, 0
  %2200 = vmatprep.subr.bf16.mxu0 %v2137
  %2201 = vmatpush1.bf16.msra.mxu0 %v2136
  %2202 = vmatprep.subr.bf16.mxu0 %v2140
  %2203 = vmatpush1.bf16.msra.mxu0 %v2139
  %2204 = vmatprep.subr.bf16.mxu0 %v2143
  %2205 = vmatpush1.bf16.msra.mxu0 %v2142
  %2206 = vmatprep.subr.bf16.mxu0 %v2146
  %2207 = vmatpush1.bf16.msra.mxu0 %v2145
  %2208 = vmatprep.subr.bf16.mxu0 %v2149
  %2209 = vmatpush1.bf16.msra.mxu0 %v2148
  %2210 = vmatprep.subr.bf16.mxu0 %v2152
  %2211 = vmatpush1.bf16.msra.mxu0 %v2151
  %2212 = vmatprep.subr.bf16.mxu0 %v2155
  %2213 = vmatpush1.bf16.msra.mxu0 %v2154
  %2214 = vmatprep.subr.bf16.mxu0 %v2158
  %2215 = vmatpush1.bf16.msra.mxu0 %v2157
  %2216 = vmatprep.subr.bf16.mxu0 %v2161
  %2217 = vmatpush1.bf16.msra.mxu0 %v2160
  %2218 = vmatprep.subr.bf16.mxu0 %v2164
  %2219 = vmatpush1.bf16.msra.mxu0 %v2163
  %2220 = vmatprep.subr.bf16.mxu0 0
  %2221 = vmatpush1.bf16.msra.mxu0 0
  %2222 = vmatprep.subr.bf16.mxu0 0
  %2223 = vmatpush1.bf16.msra.mxu0 0
  %2224 = vmatprep.subr.bf16.mxu0 0
  %2225 = vmatpush1.bf16.msra.mxu0 0
  %2226 = vmatprep.subr.bf16.mxu0 0
  %2227 = vmatpush1.bf16.msra.mxu0 0
  %2228 = vmatprep.subr.bf16.mxu0 0
  %2229 = vmatpush1.bf16.msra.mxu0 0
  %2230 = vmatprep.subr.bf16.mxu0 0
  %2231 = vmatpush1.bf16.msra.mxu0 0
  %2232 = vmatprep.mubr.bf16.mxu0 %v2198
  %2233 = vmatmul.mubr.bf16.gmra.mrb[0].mxu0 %v2018
  %v2234 = vpop.f32.mrb[0].mxu0
  %v2235 = vadd.f32 %v2024, %v2234
  %v2236 = vpop.f32.mrb[0].mxu0
  %v2237 = vadd.f32 %v2028, %v2236
  %v2238 = vpop.f32.mrb[0].mxu0
  %v2239 = vpop.f32.mrb[0].mxu0
  %2240 = vdwg.mxu0
  %2241 = vmatprep.subr.bf16.mxu0 0
  %2242 = vmatpush1.bf16.msra.mxu0 %v2138
  %2243 = vmatprep.subr.bf16.mxu0 0
  %2244 = vmatpush1.bf16.msra.mxu0 %v2141
  %2245 = vmatprep.subr.bf16.mxu0 0
  %2246 = vmatpush1.bf16.msra.mxu0 %v2144
  %2247 = vmatprep.subr.bf16.mxu0 0
  %2248 = vmatpush1.bf16.msra.mxu0 %v2147
  %2249 = vmatprep.subr.bf16.mxu0 0
  %2250 = vmatpush1.bf16.msra.mxu0 %v2150
  %2251 = vmatprep.subr.bf16.mxu0 0
  %2252 = vmatpush1.bf16.msra.mxu0 %v2153
  %2253 = vmatprep.subr.bf16.mxu0 0
  %2254 = vmatpush1.bf16.msra.mxu0 %v2156
  %2255 = vmatprep.subr.bf16.mxu0 0
  %2256 = vmatpush1.bf16.msra.mxu0 %v2159
  %2257 = vmatprep.subr.bf16.mxu0 0
  %2258 = vmatpush1.bf16.msra.mxu0 %v2162
  %2259 = vmatprep.subr.bf16.mxu0 0
  %2260 = vmatpush1.bf16.msra.mxu0 %v2165
  %2261 = vmatprep.subr.bf16.mxu0 0
  %2262 = vmatpush1.bf16.msra.mxu0 0
  %2263 = vmatprep.subr.bf16.mxu0 0
  %2264 = vmatpush1.bf16.msra.mxu0 0
  %2265 = vmatprep.subr.bf16.mxu0 0
  %2266 = vmatpush1.bf16.msra.mxu0 0
  %2267 = vmatprep.subr.bf16.mxu0 0
  %2268 = vmatpush1.bf16.msra.mxu0 0
  %2269 = vmatprep.subr.bf16.mxu0 0
  %2270 = vmatpush1.bf16.msra.mxu0 0
  %2271 = vmatprep.subr.bf16.mxu0 0
  %2272 = vmatpush1.bf16.msra.mxu0 0
  %2273 = vmatprep.mubr.bf16.mxu0 %v2198
  %2274 = vmatmul.mubr.bf16.gmra.mrb[0].mxu0 %v2018
  %v2275 = vpop.f32.mrb[0].mxu0
  %v2276 = vadd.f32 %v2032, %v2275
  %v2277 = vpop.f32.mrb[0].mxu0
  %v2278 = vpop.f32.mrb[0].mxu0
  %v2279 = vpop.f32.mrb[0].mxu0
  %2280 = vdwg.mxu0
  %v2281 = vmax.f32 %v2235, 0.0
  %v2282 = vmax.f32 %v2237, 0.0
  %v2283 = vmax.f32 %v2276, 0.0
  %v2284 = vpack.c.bf16 %v2281, %v2281
  %v2285 = vpack.c.bf16 %v2282, %v2282
  %v2286 = vpack.c.bf16 %v2283, %v2283
  %v2288 = vlaneseq
  %v2289 = vshrl.u32 %v2288, 7
  %v2290 = vsub.s32 0, %v2289
  %v2291 = vrot.slane %v532, %v2290
  %v2292 = vlaneseq
  %v2293 = vshrl.u32 %v2292, 7
  %v2294 = vsub.s32 1, %v2293
  %v2295 = vrot.slane %v532, %v2294
  %v2346 = vunpack.c.l.b16 %v325
  %v2347 = vunpack.c.h.b16 %v325
  %v2348 = vunpack.c.l.b16 %v326
  %v2349 = vunpack.c.h.b16 %v326
  %v2350 = vunpack.c.l.b16 %v327
  %v2351 = vunpack.c.h.b16 %v327
  %v2352 = vunpack.c.l.b16 %v328
  %v2353 = vunpack.c.h.b16 %v328
  %v2354 = vunpack.c.l.b16 %v329
  %v2355 = vunpack.c.h.b16 %v329
  %v2356 = vunpack.c.l.b16 %v330
  %v2357 = vunpack.c.h.b16 %v330
  %v2358 = vunpack.c.l.b16 %v331
  %v2359 = vunpack.c.h.b16 %v331
  %v2360 = vunpack.c.l.b16 %v332
  %v2361 = vunpack.c.h.b16 %v332
  %v2362 = vunpack.c.l.b16 %v333
  %v2363 = vunpack.c.h.b16 %v333
  %v2364 = vunpack.c.l.b16 %v334
  %v2365 = vunpack.c.h.b16 %v334
  %v2366 = vunpack.c.l.b16 %v335
  %v2367 = vunpack.c.h.b16 %v335
  %v2368 = vunpack.c.l.b16 %v336
  %v2369 = vunpack.c.h.b16 %v336
  %v2370 = vunpack.c.l.b16 %v337
  %v2371 = vunpack.c.h.b16 %v337
  %v2372 = vunpack.c.l.b16 %v338
  %v2373 = vunpack.c.h.b16 %v338
  %v2374 = vunpack.c.l.b16 %v339
  %v2375 = vunpack.c.h.b16 %v339
  %v2376 = vunpack.c.l.b16 %v340
  %v2377 = vunpack.c.h.b16 %v340
  %v2378 = vunpack.c.l.b16 %v341
  %v2379 = vunpack.c.h.b16 %v341
  %v2380 = vunpack.c.l.b16 %v342
  %v2381 = vunpack.c.h.b16 %v342
  %v2382 = vunpack.c.l.b16 %v343
  %v2383 = vunpack.c.h.b16 %v343
  %v2384 = vunpack.c.l.b16 %v344
  %v2385 = vunpack.c.h.b16 %v344
  %v2386 = vunpack.c.l.b16 %v345
  %v2387 = vunpack.c.h.b16 %v345
  %v2388 = vunpack.c.l.b16 %v346
  %v2389 = vunpack.c.h.b16 %v346
  %v2390 = vunpack.c.l.b16 %v347
  %v2391 = vunpack.c.h.b16 %v347
  %v2392 = vunpack.c.l.b16 %v348
  %v2393 = vunpack.c.h.b16 %v348
  %v2394 = vunpack.c.l.b16 %v349
  %v2395 = vunpack.c.h.b16 %v349
  %v2396 = vunpack.c.l.b16 %v350
  %v2397 = vunpack.c.h.b16 %v350
  %v2398 = vunpack.c.l.b16 %v351
  %v2399 = vunpack.c.h.b16 %v351
  %v2400 = vunpack.c.l.b16 %v352
  %v2401 = vunpack.c.h.b16 %v352
  %v2402 = vunpack.c.l.b16 %v353
  %v2403 = vunpack.c.h.b16 %v353
  %v2404 = vunpack.c.l.b16 %v354
  %v2405 = vunpack.c.h.b16 %v354
  %v2406 = vunpack.c.l.b16 %v355
  %v2407 = vunpack.c.h.b16 %v355
  %v2408 = vunpack.c.l.b16 %v356
  %v2409 = vunpack.c.h.b16 %v356
  %v2410 = vunpack.c.l.b16 %v357
  %v2411 = vunpack.c.h.b16 %v357
  %v2412 = vunpack.c.l.b16 %v358
  %v2413 = vunpack.c.h.b16 %v358
  %v2414 = vunpack.c.l.b16 %v359
  %v2415 = vunpack.c.h.b16 %v359
  %v2416 = vunpack.c.l.b16 %v360
  %v2417 = vunpack.c.h.b16 %v360
  %v2418 = vunpack.c.l.b16 %v361
  %v2419 = vunpack.c.h.b16 %v361
  %v2420 = vunpack.c.l.b16 %v362
  %v2421 = vunpack.c.h.b16 %v362
  %v2422 = vunpack.c.l.b16 %v363
  %v2423 = vunpack.c.h.b16 %v363
  %v2424 = vunpack.c.l.b16 %v364
  %v2425 = vunpack.c.h.b16 %v364
  %v2426 = vunpack.c.l.b16 %v365
  %v2427 = vunpack.c.h.b16 %v365
  %v2428 = vunpack.c.l.b16 %v366
  %v2429 = vunpack.c.h.b16 %v366
  %v2430 = vunpack.c.l.b16 %v367
  %v2431 = vunpack.c.h.b16 %v367
  %v2432 = vunpack.c.l.b16 %v368
  %v2433 = vunpack.c.h.b16 %v368
  %v2434 = vunpack.c.l.b16 %v369
  %v2435 = vunpack.c.h.b16 %v369
  %v2436 = vunpack.c.l.b16 %v370
  %v2437 = vunpack.c.h.b16 %v370
  %v2438 = vunpack.c.l.b16 %v371
  %v2439 = vunpack.c.h.b16 %v371
  %v2440 = vunpack.c.l.b16 %v372
  %v2441 = vunpack.c.h.b16 %v372
  %v2442 = vpack.c.b16 %v2348, %v2346
  %v2443 = vpack.c.b16 %v2349, %v2347
  %v2444 = vpack.c.b16 %v2352, %v2350
  %v2445 = vpack.c.b16 %v2353, %v2351
  %v2446 = vpack.c.b16 %v2356, %v2354
  %v2447 = vpack.c.b16 %v2357, %v2355
  %v2448 = vpack.c.b16 %v2360, %v2358
  %v2449 = vpack.c.b16 %v2361, %v2359
  %v2450 = vpack.c.b16 %v2364, %v2362
  %v2451 = vpack.c.b16 %v2365, %v2363
  %v2452 = vpack.c.b16 %v2368, %v2366
  %v2453 = vpack.c.b16 %v2369, %v2367
  %v2454 = vpack.c.b16 %v2372, %v2370
  %v2455 = vpack.c.b16 %v2373, %v2371
  %v2456 = vpack.c.b16 %v2376, %v2374
  %v2457 = vpack.c.b16 %v2377, %v2375
  %v2458 = vpack.c.b16 %v2380, %v2378
  %v2459 = vpack.c.b16 %v2381, %v2379
  %v2460 = vpack.c.b16 %v2384, %v2382
  %v2461 = vpack.c.b16 %v2385, %v2383
  %v2462 = vpack.c.b16 %v2388, %v2386
  %v2463 = vpack.c.b16 %v2389, %v2387
  %v2464 = vpack.c.b16 %v2392, %v2390
  %v2465 = vpack.c.b16 %v2393, %v2391
  %v2466 = vpack.c.b16 %v2396, %v2394
  %v2467 = vpack.c.b16 %v2397, %v2395
  %v2468 = vpack.c.b16 %v2400, %v2398
  %v2469 = vpack.c.b16 %v2401, %v2399
  %v2470 = vpack.c.b16 %v2404, %v2402
  %v2471 = vpack.c.b16 %v2405, %v2403
  %v2472 = vpack.c.b16 %v2408, %v2406
  %v2473 = vpack.c.b16 %v2409, %v2407
  %v2474 = vpack.c.b16 %v2412, %v2410
  %v2475 = vpack.c.b16 %v2413, %v2411
  %v2476 = vpack.c.b16 %v2416, %v2414
  %v2477 = vpack.c.b16 %v2417, %v2415
  %v2478 = vpack.c.b16 %v2420, %v2418
  %v2479 = vpack.c.b16 %v2421, %v2419
  %v2480 = vpack.c.b16 %v2424, %v2422
  %v2481 = vpack.c.b16 %v2425, %v2423
  %v2482 = vpack.c.b16 %v2428, %v2426
  %v2483 = vpack.c.b16 %v2429, %v2427
  %v2484 = vpack.c.b16 %v2432, %v2430
  %v2485 = vpack.c.b16 %v2433, %v2431
  %v2486 = vpack.c.b16 %v2436, %v2434
  %v2487 = vpack.c.b16 %v2437, %v2435
  %v2488 = vpack.c.b16 %v2440, %v2438
  %v2489 = vpack.c.b16 %v2441, %v2439
  %2538 = vmatprep.subr.bf16.mxu0 %v2443
  %2539 = vmatpush1.bf16.msra.mxu0 %v2442
  %2540 = vmatprep.subr.bf16.mxu0 %v2445
  %2541 = vmatpush1.bf16.msra.mxu0 %v2444
  %2542 = vmatprep.subr.bf16.mxu0 %v2447
  %2543 = vmatpush1.bf16.msra.mxu0 %v2446
  %2544 = vmatprep.subr.bf16.mxu0 %v2449
  %2545 = vmatpush1.bf16.msra.mxu0 %v2448
  %2546 = vmatprep.subr.bf16.mxu0 %v2451
  %2547 = vmatpush1.bf16.msra.mxu0 %v2450
  %2548 = vmatprep.subr.bf16.mxu0 %v2453
  %2549 = vmatpush1.bf16.msra.mxu0 %v2452
  %2550 = vmatprep.subr.bf16.mxu0 %v2455
  %2551 = vmatpush1.bf16.msra.mxu0 %v2454
  %2552 = vmatprep.subr.bf16.mxu0 %v2457
  %2553 = vmatpush1.bf16.msra.mxu0 %v2456
  %2554 = vmatprep.subr.bf16.mxu0 %v2459
  %2555 = vmatpush1.bf16.msra.mxu0 %v2458
  %2556 = vmatprep.subr.bf16.mxu0 %v2461
  %2557 = vmatpush1.bf16.msra.mxu0 %v2460
  %2558 = vmatprep.subr.bf16.mxu0 %v2463
  %2559 = vmatpush1.bf16.msra.mxu0 %v2462
  %2560 = vmatprep.subr.bf16.mxu0 %v2465
  %2561 = vmatpush1.bf16.msra.mxu0 %v2464
  %2562 = vmatprep.subr.bf16.mxu0 %v2467
  %2563 = vmatpush1.bf16.msra.mxu0 %v2466
  %2564 = vmatprep.subr.bf16.mxu0 %v2469
  %2565 = vmatpush1.bf16.msra.mxu0 %v2468
  %2566 = vmatprep.subr.bf16.mxu0 %v2471
  %2567 = vmatpush1.bf16.msra.mxu0 %v2470
  %2568 = vmatprep.subr.bf16.mxu0 %v2473
  %2569 = vmatpush1.bf16.msra.mxu0 %v2472
  %2570 = vmatprep.mubr.bf16.mxu0 %v2285
  %2571 = vmatmul.mubr.bf16.gmra.mrb[0].mxu0 %v2284
  %v2572 = vpop.f32.mrb[0].mxu0
  %v2573 = vadd.f32 %v2291, %v2572
  %v2574 = vpop.f32.mrb[0].mxu0
  %v2575 = vadd.f32 %v2295, %v2574
  %v2576 = vpop.f32.mrb[0].mxu0
  %v2577 = vpop.f32.mrb[0].mxu0
  %2578 = vdwg.mxu0
  %2579 = vmatprep.subr.bf16.mxu0 %v2475
  %2580 = vmatpush1.bf16.msra.mxu0 %v2474
  %2581 = vmatprep.subr.bf16.mxu0 %v2477
  %2582 = vmatpush1.bf16.msra.mxu0 %v2476
  %2583 = vmatprep.subr.bf16.mxu0 %v2479
  %2584 = vmatpush1.bf16.msra.mxu0 %v2478
  %2585 = vmatprep.subr.bf16.mxu0 %v2481
  %2586 = vmatpush1.bf16.msra.mxu0 %v2480
  %2587 = vmatprep.subr.bf16.mxu0 %v2483
  %2588 = vmatpush1.bf16.msra.mxu0 %v2482
  %2589 = vmatprep.subr.bf16.mxu0 %v2485
  %2590 = vmatpush1.bf16.msra.mxu0 %v2484
  %2591 = vmatprep.subr.bf16.mxu0 %v2487
  %2592 = vmatpush1.bf16.msra.mxu0 %v2486
  %2593 = vmatprep.subr.bf16.mxu0 %v2489
  %2594 = vmatpush1.bf16.msra.mxu0 %v2488
  %2595 = vmatprep.subr.bf16.mxu0 0
  %2596 = vmatpush1.bf16.msra.mxu0 0
  %2597 = vmatprep.subr.bf16.mxu0 0
  %2598 = vmatpush1.bf16.msra.mxu0 0
  %2599 = vmatprep.subr.bf16.mxu0 0
  %2600 = vmatpush1.bf16.msra.mxu0 0
  %2601 = vmatprep.subr.bf16.mxu0 0
  %2602 = vmatpush1.bf16.msra.mxu0 0
  %2603 = vmatprep.subr.bf16.mxu0 0
  %2604 = vmatpush1.bf16.msra.mxu0 0
  %2605 = vmatprep.subr.bf16.mxu0 0
  %2606 = vmatpush1.bf16.msra.mxu0 0
  %2607 = vmatprep.subr.bf16.mxu0 0
  %2608 = vmatpush1.bf16.msra.mxu0 0
  %2609 = vmatprep.subr.bf16.mxu0 0
  %2610 = vmatpush1.bf16.msra.mxu0 0
  %2611 = vmatprep.mubr.bf16.mxu0 0
  %2612 = vmatmul.mubr.bf16.gmra.mrb[0].mxu0 %v2286
  %v2613 = vpop.f32.mrb[0].mxu0
  %v2614 = vadd.f32 %v2573, %v2613
  %v2615 = vpop.f32.mrb[0].mxu0
  %v2616 = vadd.f32 %v2575, %v2615
  %v2617 = vpop.f32.mrb[0].mxu0
  %v2618 = vpop.f32.mrb[0].mxu0
  %2619 = vdwg.mxu0
  %v2620 = vpack.c.bf16 %v2614, %v2614
  %v2621 = vpack.c.bf16 %v2616, %v2616
  %v2623 = vlaneseq
  %v2624 = vshrl.u32 %v2623, 7
  %v2625 = vsub.s32 0, %v2624
  %v2626 = vrot.slane %v533, %v2625
  %v2627 = vlaneseq
  %v2628 = vshrl.u32 %v2627, 7
  %v2629 = vsub.s32 1, %v2628
  %v2630 = vrot.slane %v533, %v2629
  %v2631 = vlaneseq
  %v2632 = vshrl.u32 %v2631, 7
  %v2633 = vsub.s32 2, %v2632
  %v2634 = vrot.slane %v533, %v2633
  %v2686 = vunpack.c.l.b16 %v373
  %v2687 = vunpack.c.h.b16 %v373
  %v2688 = vunpack.c.l.b16 %v374
  %v2689 = vunpack.c.l.b16 %v375
  %v2690 = vunpack.c.h.b16 %v375
  %v2691 = vunpack.c.l.b16 %v376
  %v2692 = vunpack.c.l.b16 %v377
  %v2693 = vunpack.c.h.b16 %v377
  %v2694 = vunpack.c.l.b16 %v378
  %v2695 = vunpack.c.l.b16 %v379
  %v2696 = vunpack.c.h.b16 %v379
  %v2697 = vunpack.c.l.b16 %v380
  %v2698 = vunpack.c.l.b16 %v381
  %v2699 = vunpack.c.h.b16 %v381
  %v2700 = vunpack.c.l.b16 %v382
  %v2701 = vunpack.c.l.b16 %v383
  %v2702 = vunpack.c.h.b16 %v383
  %v2703 = vunpack.c.l.b16 %v384
  %v2704 = vunpack.c.l.b16 %v385
  %v2705 = vunpack.c.h.b16 %v385
  %v2706 = vunpack.c.l.b16 %v386
  %v2707 = vunpack.c.l.b16 %v387
  %v2708 = vunpack.c.h.b16 %v387
  %v2709 = vunpack.c.l.b16 %v388
  %v2710 = vunpack.c.l.b16 %v389
  %v2711 = vunpack.c.h.b16 %v389
  %v2712 = vunpack.c.l.b16 %v390
  %v2713 = vunpack.c.l.b16 %v391
  %v2714 = vunpack.c.h.b16 %v391
  %v2715 = vunpack.c.l.b16 %v392
  %v2716 = vunpack.c.l.b16 %v393
  %v2717 = vunpack.c.h.b16 %v393
  %v2718 = vunpack.c.l.b16 %v394
  %v2719 = vunpack.c.l.b16 %v395
  %v2720 = vunpack.c.h.b16 %v395
  %v2721 = vunpack.c.l.b16 %v396
  %v2722 = vunpack.c.l.b16 %v397
  %v2723 = vunpack.c.h.b16 %v397
  %v2724 = vunpack.c.l.b16 %v398
  %v2725 = vunpack.c.l.b16 %v399
  %v2726 = vunpack.c.h.b16 %v399
  %v2727 = vunpack.c.l.b16 %v400
  %v2728 = vunpack.c.l.b16 %v401
  %v2729 = vunpack.c.h.b16 %v401
  %v2730 = vunpack.c.l.b16 %v402
  %v2731 = vunpack.c.l.b16 %v403
  %v2732 = vunpack.c.h.b16 %v403
  %v2733 = vunpack.c.l.b16 %v404
  %v2734 = vunpack.c.l.b16 %v405
  %v2735 = vunpack.c.h.b16 %v405
  %v2736 = vunpack.c.l.b16 %v406
  %v2737 = vunpack.c.l.b16 %v407
  %v2738 = vunpack.c.h.b16 %v407
  %v2739 = vunpack.c.l.b16 %v408
  %v2740 = vunpack.c.l.b16 %v409
  %v2741 = vunpack.c.h.b16 %v409
  %v2742 = vunpack.c.l.b16 %v410
  %v2743 = vunpack.c.l.b16 %v411
  %v2744 = vunpack.c.h.b16 %v411
  %v2745 = vunpack.c.l.b16 %v412
  %v2746 = vunpack.c.l.b16 %v413
  %v2747 = vunpack.c.h.b16 %v413
  %v2748 = vunpack.c.l.b16 %v414
  %v2749 = vunpack.c.l.b16 %v415
  %v2750 = vunpack.c.h.b16 %v415
  %v2751 = vunpack.c.l.b16 %v416
  %v2752 = vunpack.c.l.b16 %v417
  %v2753 = vunpack.c.h.b16 %v417
  %v2754 = vunpack.c.l.b16 %v418
  %v2755 = vunpack.c.l.b16 %v419
  %v2756 = vunpack.c.h.b16 %v419
  %v2757 = vunpack.c.l.b16 %v420
  %v2758 = vpack.c.b16 %v2689, %v2686
  %v2759 = vpack.c.b16 %v2690, %v2687
  %v2760 = vpack.c.b16 %v2691, %v2688
  %v2761 = vpack.c.b16 %v2695, %v2692
  %v2762 = vpack.c.b16 %v2696, %v2693
  %v2763 = vpack.c.b16 %v2697, %v2694
  %v2764 = vpack.c.b16 %v2701, %v2698
  %v2765 = vpack.c.b16 %v2702, %v2699
  %v2766 = vpack.c.b16 %v2703, %v2700
  %v2767 = vpack.c.b16 %v2707, %v2704
  %v2768 = vpack.c.b16 %v2708, %v2705
  %v2769 = vpack.c.b16 %v2709, %v2706
  %v2770 = vpack.c.b16 %v2713, %v2710
  %v2771 = vpack.c.b16 %v2714, %v2711
  %v2772 = vpack.c.b16 %v2715, %v2712
  %v2773 = vpack.c.b16 %v2719, %v2716
  %v2774 = vpack.c.b16 %v2720, %v2717
  %v2775 = vpack.c.b16 %v2721, %v2718
  %v2776 = vpack.c.b16 %v2725, %v2722
  %v2777 = vpack.c.b16 %v2726, %v2723
  %v2778 = vpack.c.b16 %v2727, %v2724
  %v2779 = vpack.c.b16 %v2731, %v2728
  %v2780 = vpack.c.b16 %v2732, %v2729
  %v2781 = vpack.c.b16 %v2733, %v2730
  %v2782 = vpack.c.b16 %v2737, %v2734
  %v2783 = vpack.c.b16 %v2738, %v2735
  %v2784 = vpack.c.b16 %v2739, %v2736
  %v2785 = vpack.c.b16 %v2743, %v2740
  %v2786 = vpack.c.b16 %v2744, %v2741
  %v2787 = vpack.c.b16 %v2745, %v2742
  %v2788 = vpack.c.b16 %v2749, %v2746
  %v2789 = vpack.c.b16 %v2750, %v2747
  %v2790 = vpack.c.b16 %v2751, %v2748
  %v2791 = vpack.c.b16 %v2755, %v2752
  %v2792 = vpack.c.b16 %v2756, %v2753
  %v2793 = vpack.c.b16 %v2757, %v2754
  %vm2830 = vcmask 523264
  %v2832 = vsel %vm2830, %v2621, 0
  %2834 = vmatprep.subr.bf16.mxu0 %v2759
  %2835 = vmatpush1.bf16.msra.mxu0 %v2758
  %2836 = vmatprep.subr.bf16.mxu0 %v2762
  %2837 = vmatpush1.bf16.msra.mxu0 %v2761
  %2838 = vmatprep.subr.bf16.mxu0 %v2765
  %2839 = vmatpush1.bf16.msra.mxu0 %v2764
  %2840 = vmatprep.subr.bf16.mxu0 %v2768
  %2841 = vmatpush1.bf16.msra.mxu0 %v2767
  %2842 = vmatprep.subr.bf16.mxu0 %v2771
  %2843 = vmatpush1.bf16.msra.mxu0 %v2770
  %2844 = vmatprep.subr.bf16.mxu0 %v2774
  %2845 = vmatpush1.bf16.msra.mxu0 %v2773
  %2846 = vmatprep.subr.bf16.mxu0 %v2777
  %2847 = vmatpush1.bf16.msra.mxu0 %v2776
  %2848 = vmatprep.subr.bf16.mxu0 %v2780
  %2849 = vmatpush1.bf16.msra.mxu0 %v2779
  %2850 = vmatprep.subr.bf16.mxu0 %v2783
  %2851 = vmatpush1.bf16.msra.mxu0 %v2782
  %2852 = vmatprep.subr.bf16.mxu0 %v2786
  %2853 = vmatpush1.bf16.msra.mxu0 %v2785
  %2854 = vmatprep.subr.bf16.mxu0 %v2789
  %2855 = vmatpush1.bf16.msra.mxu0 %v2788
  %2856 = vmatprep.subr.bf16.mxu0 %v2792
  %2857 = vmatpush1.bf16.msra.mxu0 %v2791
  %2858 = vmatprep.subr.bf16.mxu0 0
  %2859 = vmatpush1.bf16.msra.mxu0 0
  %2860 = vmatprep.subr.bf16.mxu0 0
  %2861 = vmatpush1.bf16.msra.mxu0 0
  %2862 = vmatprep.subr.bf16.mxu0 0
  %2863 = vmatpush1.bf16.msra.mxu0 0
  %2864 = vmatprep.subr.bf16.mxu0 0
  %2865 = vmatpush1.bf16.msra.mxu0 0
  %2866 = vmatprep.mubr.bf16.mxu0 %v2832
  %2867 = vmatmul.mubr.bf16.gmra.mrb[0].mxu0 %v2620
  %v2868 = vpop.f32.mrb[0].mxu0
  %v2869 = vadd.f32 %v2626, %v2868
  %v2870 = vpop.f32.mrb[0].mxu0
  %v2871 = vadd.f32 %v2630, %v2870
  %v2872 = vpop.f32.mrb[0].mxu0
  %v2873 = vpop.f32.mrb[0].mxu0
  %2874 = vdwg.mxu0
  %2875 = vmatprep.subr.bf16.mxu0 0
  %2876 = vmatpush1.bf16.msra.mxu0 %v2760
  %2877 = vmatprep.subr.bf16.mxu0 0
  %2878 = vmatpush1.bf16.msra.mxu0 %v2763
  %2879 = vmatprep.subr.bf16.mxu0 0
  %2880 = vmatpush1.bf16.msra.mxu0 %v2766
  %2881 = vmatprep.subr.bf16.mxu0 0
  %2882 = vmatpush1.bf16.msra.mxu0 %v2769
  %2883 = vmatprep.subr.bf16.mxu0 0
  %2884 = vmatpush1.bf16.msra.mxu0 %v2772
  %2885 = vmatprep.subr.bf16.mxu0 0
  %2886 = vmatpush1.bf16.msra.mxu0 %v2775
  %2887 = vmatprep.subr.bf16.mxu0 0
  %2888 = vmatpush1.bf16.msra.mxu0 %v2778
  %2889 = vmatprep.subr.bf16.mxu0 0
  %2890 = vmatpush1.bf16.msra.mxu0 %v2781
  %2891 = vmatprep.subr.bf16.mxu0 0
  %2892 = vmatpush1.bf16.msra.mxu0 %v2784
  %2893 = vmatprep.subr.bf16.mxu0 0
  %2894 = vmatpush1.bf16.msra.mxu0 %v2787
  %2895 = vmatprep.subr.bf16.mxu0 0
  %2896 = vmatpush1.bf16.msra.mxu0 %v2790
  %2897 = vmatprep.subr.bf16.mxu0 0
  %2898 = vmatpush1.bf16.msra.mxu0 %v2793
  %2899 = vmatprep.subr.bf16.mxu0 0
  %2900 = vmatpush1.bf16.msra.mxu0 0
  %2901 = vmatprep.subr.bf16.mxu0 0
  %2902 = vmatpush1.bf16.msra.mxu0 0
  %2903 = vmatprep.subr.bf16.mxu0 0
  %2904 = vmatpush1.bf16.msra.mxu0 0
  %2905 = vmatprep.subr.bf16.mxu0 0
  %2906 = vmatpush1.bf16.msra.mxu0 0
  %2907 = vmatprep.mubr.bf16.mxu0 %v2832
  %2908 = vmatmul.mubr.bf16.gmra.mrb[0].mxu0 %v2620
  %v2909 = vpop.f32.mrb[0].mxu0
  %v2910 = vadd.f32 %v2634, %v2909
  %v2911 = vpop.f32.mrb[0].mxu0
  %v2912 = vpop.f32.mrb[0].mxu0
  %v2913 = vpop.f32.mrb[0].mxu0
  %2914 = vdwg.mxu0
  %v2915 = vmax.f32 %v2869, 0.0
  %v2916 = vmax.f32 %v2871, 0.0
  %v2917 = vmax.f32 %v2910, 0.0
  %v2918 = vpack.c.bf16 %v2915, %v2915
  %v2919 = vpack.c.bf16 %v2916, %v2916
  %v2920 = vpack.c.bf16 %v2917, %v2917
  %v2922 = vlaneseq
  %v2923 = vshrl.u32 %v2922, 7
  %v2924 = vsub.s32 0, %v2923
  %v2925 = vrot.slane %v534, %v2924
  %v2975 = vunpack.c.l.b16 %v421
  %v2976 = vunpack.c.l.b16 %v422
  %v2977 = vunpack.c.l.b16 %v423
  %v2978 = vunpack.c.l.b16 %v424
  %v2979 = vunpack.c.l.b16 %v425
  %v2980 = vunpack.c.l.b16 %v426
  %v2981 = vunpack.c.l.b16 %v427
  %v2982 = vunpack.c.l.b16 %v428
  %v2983 = vunpack.c.l.b16 %v429
  %v2984 = vunpack.c.l.b16 %v430
  %v2985 = vunpack.c.l.b16 %v431
  %v2986 = vunpack.c.l.b16 %v432
  %v2987 = vunpack.c.l.b16 %v433
  %v2988 = vunpack.c.l.b16 %v434
  %v2989 = vunpack.c.l.b16 %v435
  %v2990 = vunpack.c.l.b16 %v436
  %v2991 = vunpack.c.l.b16 %v437
  %v2992 = vunpack.c.l.b16 %v438
  %v2993 = vunpack.c.l.b16 %v439
  %v2994 = vunpack.c.l.b16 %v440
  %v2995 = vunpack.c.l.b16 %v441
  %v2996 = vunpack.c.l.b16 %v442
  %v2997 = vunpack.c.l.b16 %v443
  %v2998 = vunpack.c.l.b16 %v444
  %v2999 = vunpack.c.l.b16 %v445
  %v3000 = vunpack.c.l.b16 %v446
  %v3001 = vunpack.c.l.b16 %v447
  %v3002 = vunpack.c.l.b16 %v448
  %v3003 = vunpack.c.l.b16 %v449
  %v3004 = vunpack.c.l.b16 %v450
  %v3005 = vunpack.c.l.b16 %v451
  %v3006 = vunpack.c.l.b16 %v452
  %v3007 = vunpack.c.l.b16 %v453
  %v3008 = vunpack.c.l.b16 %v454
  %v3009 = vunpack.c.l.b16 %v455
  %v3010 = vunpack.c.l.b16 %v456
  %v3011 = vunpack.c.l.b16 %v457
  %v3012 = vunpack.c.l.b16 %v458
  %v3013 = vunpack.c.l.b16 %v459
  %v3014 = vunpack.c.l.b16 %v460
  %v3015 = vunpack.c.l.b16 %v461
  %v3016 = vunpack.c.l.b16 %v462
  %v3017 = vunpack.c.l.b16 %v463
  %v3018 = vunpack.c.l.b16 %v464
  %v3019 = vunpack.c.l.b16 %v465
  %v3020 = vunpack.c.l.b16 %v466
  %v3021 = vunpack.c.l.b16 %v467
  %v3022 = vunpack.c.l.b16 %v468
  %v3023 = vpack.c.b16 %v2976, %v2975
  %v3024 = vpack.c.b16 %v2978, %v2977
  %v3025 = vpack.c.b16 %v2980, %v2979
  %v3026 = vpack.c.b16 %v2982, %v2981
  %v3027 = vpack.c.b16 %v2984, %v2983
  %v3028 = vpack.c.b16 %v2986, %v2985
  %v3029 = vpack.c.b16 %v2988, %v2987
  %v3030 = vpack.c.b16 %v2990, %v2989
  %v3031 = vpack.c.b16 %v2992, %v2991
  %v3032 = vpack.c.b16 %v2994, %v2993
  %v3033 = vpack.c.b16 %v2996, %v2995
  %v3034 = vpack.c.b16 %v2998, %v2997
  %v3035 = vpack.c.b16 %v3000, %v2999
  %v3036 = vpack.c.b16 %v3002, %v3001
  %v3037 = vpack.c.b16 %v3004, %v3003
  %v3038 = vpack.c.b16 %v3006, %v3005
  %v3039 = vpack.c.b16 %v3008, %v3007
  %v3040 = vpack.c.b16 %v3010, %v3009
  %v3041 = vpack.c.b16 %v3012, %v3011
  %v3042 = vpack.c.b16 %v3014, %v3013
  %v3043 = vpack.c.b16 %v3016, %v3015
  %v3044 = vpack.c.b16 %v3018, %v3017
  %v3045 = vpack.c.b16 %v3020, %v3019
  %v3046 = vpack.c.b16 %v3022, %v3021
  %3071 = vmatprep.subr.bf16.mxu0 0
  %3072 = vmatpush1.bf16.msra.mxu0 %v3023
  %3073 = vmatprep.subr.bf16.mxu0 0
  %3074 = vmatpush1.bf16.msra.mxu0 %v3024
  %3075 = vmatprep.subr.bf16.mxu0 0
  %3076 = vmatpush1.bf16.msra.mxu0 %v3025
  %3077 = vmatprep.subr.bf16.mxu0 0
  %3078 = vmatpush1.bf16.msra.mxu0 %v3026
  %3079 = vmatprep.subr.bf16.mxu0 0
  %3080 = vmatpush1.bf16.msra.mxu0 %v3027
  %3081 = vmatprep.subr.bf16.mxu0 0
  %3082 = vmatpush1.bf16.msra.mxu0 %v3028
  %3083 = vmatprep.subr.bf16.mxu0 0
  %3084 = vmatpush1.bf16.msra.mxu0 %v3029
  %3085 = vmatprep.subr.bf16.mxu0 0
  %3086 = vmatpush1.bf16.msra.mxu0 %v3030
  %3087 = vmatprep.subr.bf16.mxu0 0
  %3088 = vmatpush1.bf16.msra.mxu0 %v3031
  %3089 = vmatprep.subr.bf16.mxu0 0
  %3090 = vmatpush1.bf16.msra.mxu0 %v3032
  %3091 = vmatprep.subr.bf16.mxu0 0
  %3092 = vmatpush1.bf16.msra.mxu0 %v3033
  %3093 = vmatprep.subr.bf16.mxu0 0
  %3094 = vmatpush1.bf16.msra.mxu0 %v3034
  %3095 = vmatprep.subr.bf16.mxu0 0
  %3096 = vmatpush1.bf16.msra.mxu0 %v3035
  %3097 = vmatprep.subr.bf16.mxu0 0
  %3098 = vmatpush1.bf16.msra.mxu0 %v3036
  %3099 = vmatprep.subr.bf16.mxu0 0
  %3100 = vmatpush1.bf16.msra.mxu0 %v3037
  %3101 = vmatprep.subr.bf16.mxu0 0
  %3102 = vmatpush1.bf16.msra.mxu0 %v3038
  %3103 = vmatprep.mubr.bf16.mxu0 %v2919
  %3104 = vmatmul.mubr.bf16.gmra.mrb[0].mxu0 %v2918
  %v3105 = vpop.f32.mrb[0].mxu0
  %v3106 = vadd.f32 %v2925, %v3105
  %v3107 = vpop.f32.mrb[0].mxu0
  %v3108 = vpop.f32.mrb[0].mxu0
  %v3109 = vpop.f32.mrb[0].mxu0
  %3110 = vdwg.mxu0
  %3111 = vmatprep.subr.bf16.mxu0 0
  %3112 = vmatpush1.bf16.msra.mxu0 %v3039
  %3113 = vmatprep.subr.bf16.mxu0 0
  %3114 = vmatpush1.bf16.msra.mxu0 %v3040
  %3115 = vmatprep.subr.bf16.mxu0 0
  %3116 = vmatpush1.bf16.msra.mxu0 %v3041
  %3117 = vmatprep.subr.bf16.mxu0 0
  %3118 = vmatpush1.bf16.msra.mxu0 %v3042
  %3119 = vmatprep.subr.bf16.mxu0 0
  %3120 = vmatpush1.bf16.msra.mxu0 %v3043
  %3121 = vmatprep.subr.bf16.mxu0 0
  %3122 = vmatpush1.bf16.msra.mxu0 %v3044
  %3123 = vmatprep.subr.bf16.mxu0 0
  %3124 = vmatpush1.bf16.msra.mxu0 %v3045
  %3125 = vmatprep.subr.bf16.mxu0 0
  %3126 = vmatpush1.bf16.msra.mxu0 %v3046
  %3127 = vmatprep.subr.bf16.mxu0 0
  %3128 = vmatpush1.bf16.msra.mxu0 0
  %3129 = vmatprep.subr.bf16.mxu0 0
  %3130 = vmatpush1.bf16.msra.mxu0 0
  %3131 = vmatprep.subr.bf16.mxu0 0
  %3132 = vmatpush1.bf16.msra.mxu0 0
  %3133 = vmatprep.subr.bf16.mxu0 0
  %3134 = vmatpush1.bf16.msra.mxu0 0
  %3135 = vmatprep.subr.bf16.mxu0 0
  %3136 = vmatpush1.bf16.msra.mxu0 0
  %3137 = vmatprep.subr.bf16.mxu0 0
  %3138 = vmatpush1.bf16.msra.mxu0 0
  %3139 = vmatprep.subr.bf16.mxu0 0
  %3140 = vmatpush1.bf16.msra.mxu0 0
  %3141 = vmatprep.subr.bf16.mxu0 0
  %3142 = vmatpush1.bf16.msra.mxu0 0
  %3143 = vmatprep.mubr.bf16.mxu0 0
  %3144 = vmatmul.mubr.bf16.gmra.mrb[0].mxu0 %v2920
  %v3145 = vpop.f32.mrb[0].mxu0
  %v3146 = vadd.f32 %v3106, %v3145
  %v3147 = vpop.f32.mrb[0].mxu0
  %v3148 = vpop.f32.mrb[0].mxu0
  %v3149 = vpop.f32.mrb[0].mxu0
  %3150 = vdwg.mxu0
  %v3151 = vmax.f32 %v3146, 0.0
  %v3152 = vpack.c.bf16 %v3151, %v3151
  %v3154 = vlaneseq
  %v3155 = vshrl.u32 %v3154, 7
  %v3156 = vsub.s32 0, %v3155
  %v3157 = vrot.slane %v535, %v3156
  %v3161 = vunpack.c.l.b16 %v469
  %v3162 = vunpack.c.l.b16 %v470
  %v3163 = vpack.c.b16 %v3162, %v3161
  %vm3165 = vcmask 130048
  %v3167 = vsel %vm3165, %v3152, 0
  %3169 = vmatprep.subr.bf16.mxu0 0
  %3170 = vmatpush1.bf16.msra.mxu0 %v3163
  %3171 = vmatprep.subr.bf16.mxu0 0
  %3172 = vmatpush1.bf16.msra.mxu0 0
  %3173 = vmatprep.subr.bf16.mxu0 0
  %3174 = vmatpush1.bf16.msra.mxu0 0
  %3175 = vmatprep.subr.bf16.mxu0 0
  %3176 = vmatpush1.bf16.msra.mxu0 0
  %3177 = vmatprep.subr.bf16.mxu0 0
  %3178 = vmatpush1.bf16.msra.mxu0 0
  %3179 = vmatprep.subr.bf16.mxu0 0
  %3180 = vmatpush1.bf16.msra.mxu0 0
  %3181 = vmatprep.subr.bf16.mxu0 0
  %3182 = vmatpush1.bf16.msra.mxu0 0
  %3183 = vmatprep.subr.bf16.mxu0 0
  %3184 = vmatpush1.bf16.msra.mxu0 0
  %3185 = vmatprep.subr.bf16.mxu0 0
  %3186 = vmatpush1.bf16.msra.mxu0 0
  %3187 = vmatprep.subr.bf16.mxu0 0
  %3188 = vmatpush1.bf16.msra.mxu0 0
  %3189 = vmatprep.subr.bf16.mxu0 0
  %3190 = vmatpush1.bf16.msra.mxu0 0
  %3191 = vmatprep.subr.bf16.mxu0 0
  %3192 = vmatpush1.bf16.msra.mxu0 0
  %3193 = vmatprep.subr.bf16.mxu0 0
  %3194 = vmatpush1.bf16.msra.mxu0 0
  %3195 = vmatprep.subr.bf16.mxu0 0
  %3196 = vmatpush1.bf16.msra.mxu0 0
  %3197 = vmatprep.subr.bf16.mxu0 0
  %3198 = vmatpush1.bf16.msra.mxu0 0
  %3199 = vmatprep.subr.bf16.mxu0 0
  %3200 = vmatpush1.bf16.msra.mxu0 0
  %3201 = vmatprep.mubr.bf16.mxu0 0
  %3202 = vmatmul.mubr.bf16.gmra.mrb[0].mxu0 %v3167
  %v3203 = vpop.f32.mrb[0].mxu0
  %v3204 = vadd.f32 %v3157, %v3203
  %v3205 = vpop.f32.mrb[0].mxu0
  %v3206 = vpop.f32.mrb[0].mxu0
  %v3207 = vpop.f32.mrb[0].mxu0
  %3208 = vdwg.mxu0
  %v3209 = vadd.f32 %v3204, 3.0
  %v3210 = vmax.f32 %v3209, 0.0
  %v3211 = vmin.f32 %v3210, 6.0
  %v3212 = vmul.f32 %v3211, 0.16666667
  %v3213 = vpack.c.bf16 %v3212, %v3212
  %v3218 = vunpack.c.l.b16 %v471
  %v3219 = vunpack.c.h.b16 %v471
  %v3220 = vunpack.c.l.b16 %v472
  %v3221 = vunpack.c.h.b16 %v472
  %v3222 = vunpack.c.l.b16 %v473
  %v3223 = vunpack.c.h.b16 %v473
  %v3224 = vunpack.c.l.b16 %v474
  %v3225 = vunpack.c.h.b16 %v474
  %v3226 = vpack.c.b16 %v3220, %v3218
  %v3227 = vpack.c.b16 %v3221, %v3219
  %v3228 = vpack.c.b16 %v3224, %v3222
  %v3229 = vpack.c.b16 %v3225, %v3223
  %v3235 = vsel %vm2196, %v3213, 0
  %3237 = vmatprep.subr.bf16.mxu0 %v3227
  %3238 = vmatpush1.bf16.msra.mxu0 %v3226
  %3239 = vmatprep.subr.bf16.mxu0 %v3229
  %3240 = vmatpush1.bf16.msra.mxu0 %v3228
  %3241 = vmatprep.subr.bf16.mxu0 0
  %3242 = vmatpush1.bf16.msra.mxu0 0
  %3243 = vmatprep.subr.bf16.mxu0 0
  %3244 = vmatpush1.bf16.msra.mxu0 0
  %3245 = vmatprep.subr.bf16.mxu0 0
  %3246 = vmatpush1.bf16.msra.mxu0 0
  %3247 = vmatprep.subr.bf16.mxu0 0
  %3248 = vmatpush1.bf16.msra.mxu0 0
  %3249 = vmatprep.subr.bf16.mxu0 0
  %3250 = vmatpush1.bf16.msra.mxu0 0
  %3251 = vmatprep.subr.bf16.mxu0 0
  %3252 = vmatpush1.bf16.msra.mxu0 0
  %3253 = vmatprep.subr.bf16.mxu0 0
  %3254 = vmatpush1.bf16.msra.mxu0 0
  %3255 = vmatprep.subr.bf16.mxu0 0
  %3256 = vmatpush1.bf16.msra.mxu0 0
  %3257 = vmatprep.subr.bf16.mxu0 0
  %3258 = vmatpush1.bf16.msra.mxu0 0
  %3259 = vmatprep.subr.bf16.mxu0 0
  %3260 = vmatpush1.bf16.msra.mxu0 0
  %3261 = vmatprep.subr.bf16.mxu0 0
  %3262 = vmatpush1.bf16.msra.mxu0 0
  %3263 = vmatprep.subr.bf16.mxu0 0
  %3264 = vmatpush1.bf16.msra.mxu0 0
  %3265 = vmatprep.subr.bf16.mxu0 0
  %3266 = vmatpush1.bf16.msra.mxu0 0
  %3267 = vmatprep.subr.bf16.mxu0 0
  %3268 = vmatpush1.bf16.msra.mxu0 0
  %3269 = vmatprep.mubr.bf16.mxu0 0
  %3270 = vmatmul.mubr.bf16.gmra.mrb[0].mxu0 %v3235
  %v3271 = vpop.f32.mrb[0].mxu0
  %v3272 = vadd.f32 0.0, %v3271
  %v3273 = vpop.f32.mrb[0].mxu0
  %v3274 = vadd.f32 0.0, %v3273
  %v3275 = vpop.f32.mrb[0].mxu0
  %v3276 = vpop.f32.mrb[0].mxu0
  %3277 = vdwg.mxu0
  %v3278 = vmul.f32 %v3272, %v2614
  %v3279 = vmul.f32 %v3274, %v2616
  %v3280 = vpack.c.bf16 %v3278, %v3278
  %v3281 = vpack.c.bf16 %v3279, %v3279
  %v3283 = vlaneseq
  %v3284 = vshrl.u32 %v3283, 7
  %v3285 = vsub.s32 0, %v3284
  %v3286 = vrot.slane %v536, %v3285
  %v3287 = vlaneseq
  %v3288 = vshrl.u32 %v3287, 7
  %v3289 = vsub.s32 1, %v3288
  %v3290 = vrot.slane %v536, %v3289
  %v3317 = vunpack.c.l.b16 %v475
  %v3318 = vunpack.c.h.b16 %v475
  %v3319 = vunpack.c.l.b16 %v476
  %v3320 = vunpack.c.h.b16 %v476
  %v3321 = vunpack.c.l.b16 %v477
  %v3322 = vunpack.c.h.b16 %v477
  %v3323 = vunpack.c.l.b16 %v478
  %v3324 = vunpack.c.h.b16 %v478
  %v3325 = vunpack.c.l.b16 %v479
  %v3326 = vunpack.c.h.b16 %v479
  %v3327 = vunpack.c.l.b16 %v480
  %v3328 = vunpack.c.h.b16 %v480
  %v3329 = vunpack.c.l.b16 %v481
  %v3330 = vunpack.c.h.b16 %v481
  %v3331 = vunpack.c.l.b16 %v482
  %v3332 = vunpack.c.h.b16 %v482
  %v3333 = vunpack.c.l.b16 %v483
  %v3334 = vunpack.c.h.b16 %v483
  %v3335 = vunpack.c.l.b16 %v484
  %v3336 = vunpack.c.h.b16 %v484
  %v3337 = vunpack.c.l.b16 %v485
  %v3338 = vunpack.c.h.b16 %v485
  %v3339 = vunpack.c.l.b16 %v486
  %v3340 = vunpack.c.h.b16 %v486
  %v3341 = vunpack.c.l.b16 %v487
  %v3342 = vunpack.c.h.b16 %v487
  %v3343 = vunpack.c.l.b16 %v488
  %v3344 = vunpack.c.h.b16 %v488
  %v3345 = vunpack.c.l.b16 %v489
  %v3346 = vunpack.c.h.b16 %v489
  %v3347 = vunpack.c.l.b16 %v490
  %v3348 = vunpack.c.h.b16 %v490
  %v3349 = vunpack.c.l.b16 %v491
  %v3350 = vunpack.c.h.b16 %v491
  %v3351 = vunpack.c.l.b16 %v492
  %v3352 = vunpack.c.h.b16 %v492
  %v3353 = vunpack.c.l.b16 %v493
  %v3354 = vunpack.c.h.b16 %v493
  %v3355 = vunpack.c.l.b16 %v494
  %v3356 = vunpack.c.h.b16 %v494
  %v3357 = vunpack.c.l.b16 %v495
  %v3358 = vunpack.c.h.b16 %v495
  %v3359 = vunpack.c.l.b16 %v496
  %v3360 = vunpack.c.h.b16 %v496
  %v3361 = vunpack.c.l.b16 %v497
  %v3362 = vunpack.c.h.b16 %v497
  %v3363 = vunpack.c.l.b16 %v498
  %v3364 = vunpack.c.h.b16 %v498
  %v3365 = vpack.c.b16 %v3319, %v3317
  %v3366 = vpack.c.b16 %v3320, %v3318
  %v3367 = vpack.c.b16 %v3323, %v3321
  %v3368 = vpack.c.b16 %v3324, %v3322
  %v3369 = vpack.c.b16 %v3327, %v3325
  %v3370 = vpack.c.b16 %v3328, %v3326
  %v3371 = vpack.c.b16 %v3331, %v3329
  %v3372 = vpack.c.b16 %v3332, %v3330
  %v3373 = vpack.c.b16 %v3335, %v3333
  %v3374 = vpack.c.b16 %v3336, %v3334
  %v3375 = vpack.c.b16 %v3339, %v3337
  %v3376 = vpack.c.b16 %v3340, %v3338
  %v3377 = vpack.c.b16 %v3343, %v3341
  %v3378 = vpack.c.b16 %v3344, %v3342
  %v3379 = vpack.c.b16 %v3347, %v3345
  %v3380 = vpack.c.b16 %v3348, %v3346
  %v3381 = vpack.c.b16 %v3351, %v3349
  %v3382 = vpack.c.b16 %v3352, %v3350
  %v3383 = vpack.c.b16 %v3355, %v3353
  %v3384 = vpack.c.b16 %v3356, %v3354
  %v3385 = vpack.c.b16 %v3359, %v3357
  %v3386 = vpack.c.b16 %v3360, %v3358
  %v3387 = vpack.c.b16 %v3363, %v3361
  %v3388 = vpack.c.b16 %v3364, %v3362
  %v3414 = vsel %vm2830, %v3281, 0
  %3416 = vmatprep.subr.bf16.mxu0 %v3366
  %3417 = vmatpush1.bf16.msra.mxu0 %v3365
  %3418 = vmatprep.subr.bf16.mxu0 %v3368
  %3419 = vmatpush1.bf16.msra.mxu0 %v3367
  %3420 = vmatprep.subr.bf16.mxu0 %v3370
  %3421 = vmatpush1.bf16.msra.mxu0 %v3369
  %3422 = vmatprep.subr.bf16.mxu0 %v3372
  %3423 = vmatpush1.bf16.msra.mxu0 %v3371
  %3424 = vmatprep.subr.bf16.mxu0 %v3374
  %3425 = vmatpush1.bf16.msra.mxu0 %v3373
  %3426 = vmatprep.subr.bf16.mxu0 %v3376
  %3427 = vmatpush1.bf16.msra.mxu0 %v3375
  %3428 = vmatprep.subr.bf16.mxu0 %v3378
  %3429 = vmatpush1.bf16.msra.mxu0 %v3377
  %3430 = vmatprep.subr.bf16.mxu0 %v3380
  %3431 = vmatpush1.bf16.msra.mxu0 %v3379
  %3432 = vmatprep.subr.bf16.mxu0 %v3382
  %3433 = vmatpush1.bf16.msra.mxu0 %v3381
  %3434 = vmatprep.subr.bf16.mxu0 %v3384
  %3435 = vmatpush1.bf16.msra.mxu0 %v3383
  %3436 = vmatprep.subr.bf16.mxu0 %v3386
  %3437 = vmatpush1.bf16.msra.mxu0 %v3385
  %3438 = vmatprep.subr.bf16.mxu0 %v3388
  %3439 = vmatpush1.bf16.msra.mxu0 %v3387
  %3440 = vmatprep.subr.bf16.mxu0 0
  %3441 = vmatpush1.bf16.msra.mxu0 0
  %3442 = vmatprep.subr.bf16.mxu0 0
  %3443 = vmatpush1.bf16.msra.mxu0 0
  %3444 = vmatprep.subr.bf16.mxu0 0
  %3445 = vmatpush1.bf16.msra.mxu0 0
  %3446 = vmatprep.subr.bf16.mxu0 0
  %3447 = vmatpush1.bf16.msra.mxu0 0
  %3448 = vmatprep.mubr.bf16.mxu0 %v3414
  %3449 = vmatmul.mubr.bf16.gmra.mrb[0].mxu0 %v3280
  %v3450 = vpop.f32.mrb[0].mxu0
  %v3451 = vadd.f32 %v3286, %v3450
  %v3452 = vpop.f32.mrb[0].mxu0
  %v3453 = vadd.f32 %v3290, %v3452
  %v3454 = vpop.f32.mrb[0].mxu0
  %v3455 = vpop.f32.mrb[0].mxu0
  %3456 = vdwg.mxu0
  %v3457 = vmax.f32 %v3451, 0.0
  %v3458 = vmax.f32 %v3453, 0.0
  %v3459 = vpack.c.bf16 %v3457, %v3457
  %v3460 = vpack.c.bf16 %v3458, %v3458
  %v3462 = vlaneseq
  %v3463 = vshrl.u32 %v3462, 7
  %v3464 = vsub.s32 0, %v3463
  %v3465 = vrot.slane %v537, %v3464
  %v3491 = vunpack.c.l.b16 %v499
  %v3492 = vunpack.c.l.b16 %v500
  %v3493 = vunpack.c.l.b16 %v501
  %v3494 = vunpack.c.l.b16 %v502
  %v3495 = vunpack.c.l.b16 %v503
  %v3496 = vunpack.c.l.b16 %v504
  %v3497 = vunpack.c.l.b16 %v505
  %v3498 = vunpack.c.l.b16 %v506
  %v3499 = vunpack.c.l.b16 %v507
  %v3500 = vunpack.c.l.b16 %v508
  %v3501 = vunpack.c.l.b16 %v509
  %v3502 = vunpack.c.l.b16 %v510
  %v3503 = vunpack.c.l.b16 %v511
  %v3504 = vunpack.c.l.b16 %v512
  %v3505 = vunpack.c.l.b16 %v513
  %v3506 = vunpack.c.l.b16 %v514
  %v3507 = vunpack.c.l.b16 %v515
  %v3508 = vunpack.c.l.b16 %v516
  %v3509 = vunpack.c.l.b16 %v517
  %v3510 = vunpack.c.l.b16 %v518
  %v3511 = vunpack.c.l.b16 %v519
  %v3512 = vunpack.c.l.b16 %v520
  %v3513 = vunpack.c.l.b16 %v521
  %v3514 = vunpack.c.l.b16 %v522
  %v3515 = vpack.c.b16 %v3492, %v3491
  %v3516 = vpack.c.b16 %v3494, %v3493
  %v3517 = vpack.c.b16 %v3496, %v3495
  %v3518 = vpack.c.b16 %v3498, %v3497
  %v3519 = vpack.c.b16 %v3500, %v3499
  %v3520 = vpack.c.b16 %v3502, %v3501
  %v3521 = vpack.c.b16 %v3504, %v3503
  %v3522 = vpack.c.b16 %v3506, %v3505
  %v3523 = vpack.c.b16 %v3508, %v3507
  %v3524 = vpack.c.b16 %v3510, %v3509
  %v3525 = vpack.c.b16 %v3512, %v3511
  %v3526 = vpack.c.b16 %v3514, %v3513
  %v3540 = vsel %vm2830, %v3460, 0
  %3542 = vmatprep.subr.bf16.mxu0 0
  %3543 = vmatpush1.bf16.msra.mxu0 %v3515
  %3544 = vmatprep.subr.bf16.mxu0 0
  %3545 = vmatpush1.bf16.msra.mxu0 %v3516
  %3546 = vmatprep.subr.bf16.mxu0 0
  %3547 = vmatpush1.bf16.msra.mxu0 %v3517
  %3548 = vmatprep.subr.bf16.mxu0 0
  %3549 = vmatpush1.bf16.msra.mxu0 %v3518
  %3550 = vmatprep.subr.bf16.mxu0 0
  %3551 = vmatpush1.bf16.msra.mxu0 %v3519
  %3552 = vmatprep.subr.bf16.mxu0 0
  %3553 = vmatpush1.bf16.msra.mxu0 %v3520
  %3554 = vmatprep.subr.bf16.mxu0 0
  %3555 = vmatpush1.bf16.msra.mxu0 %v3521
  %3556 = vmatprep.subr.bf16.mxu0 0
  %3557 = vmatpush1.bf16.msra.mxu0 %v3522
  %3558 = vmatprep.subr.bf16.mxu0 0
  %3559 = vmatpush1.bf16.msra.mxu0 %v3523
  %3560 = vmatprep.subr.bf16.mxu0 0
  %3561 = vmatpush1.bf16.msra.mxu0 %v3524
  %3562 = vmatprep.subr.bf16.mxu0 0
  %3563 = vmatpush1.bf16.msra.mxu0 %v3525
  %3564 = vmatprep.subr.bf16.mxu0 0
  %3565 = vmatpush1.bf16.msra.mxu0 %v3526
  %3566 = vmatprep.subr.bf16.mxu0 0
  %3567 = vmatpush1.bf16.msra.mxu0 0
  %3568 = vmatprep.subr.bf16.mxu0 0
  %3569 = vmatpush1.bf16.msra.mxu0 0
  %3570 = vmatprep.subr.bf16.mxu0 0
  %3571 = vmatpush1.bf16.msra.mxu0 0
  %3572 = vmatprep.subr.bf16.mxu0 0
  %3573 = vmatpush1.bf16.msra.mxu0 0
  %3574 = vmatprep.mubr.bf16.mxu0 %v3540
  %3575 = vmatmul.mubr.bf16.gmra.mrb[0].mxu0 %v3459
  %v3576 = vpop.f32.mrb[0].mxu0
  %v3577 = vadd.f32 %v3465, %v3576
  %v3578 = vpop.f32.mrb[0].mxu0
  %v3579 = vpop.f32.mrb[0].mxu0
  %v3580 = vpop.f32.mrb[0].mxu0
  %3581 = vdwg.mxu0
  %v3582 = vadd.f32 %v3577, 3.0
  %v3583 = vmax.f32 %v3582, 0.0
  %v3584 = vmin.f32 %v3583, 6.0
  %v3585 = vmul.f32 %v3584, 0.16666667
  %v3586 = vmul.f32 %v3577, %v3585
  %v3587 = vpack.c.bf16 %v3586, %v3586
  %v3589 = vlaneseq
  %v3590 = vshrl.u32 %v3589, 7
  %v3591 = vsub.s32 0, %v3590
  %v3592 = vrot.slane %v538, %v3591
  %v3598 = vunpack.c.l.b16 %v523
  %v3599 = vunpack.c.l.b16 %v524
  %v3600 = vunpack.c.l.b16 %v525
  %v3601 = vunpack.c.l.b16 %v526
  %v3602 = vpack.c.b16 %v3599, %v3598
  %v3603 = vpack.c.b16 %v3601, %v3600
  %v3607 = vsel %vm2196, %v3587, 0
  %3609 = vmatprep.subr.bf16.mxu0 0
  %3610 = vmatpush1.bf16.msra.mxu0 %v3602
  %3611 = vmatprep.subr.bf16.mxu0 0
  %3612 = vmatpush1.bf16.msra.mxu0 %v3603
  %3613 = vmatprep.subr.bf16.mxu0 0
  %3614 = vmatpush1.bf16.msra.mxu0 0
  %3615 = vmatprep.subr.bf16.mxu0 0
  %3616 = vmatpush1.bf16.msra.mxu0 0
  %3617 = vmatprep.subr.bf16.mxu0 0
  %3618 = vmatpush1.bf16.msra.mxu0 0
  %3619 = vmatprep.subr.bf16.mxu0 0
  %3620 = vmatpush1.bf16.msra.mxu0 0
  %3621 = vmatprep.subr.bf16.mxu0 0
  %3622 = vmatpush1.bf16.msra.mxu0 0
  %3623 = vmatprep.subr.bf16.mxu0 0
  %3624 = vmatpush1.bf16.msra.mxu0 0
  %3625 = vmatprep.subr.bf16.mxu0 0
  %3626 = vmatpush1.bf16.msra.mxu0 0
  %3627 = vmatprep.subr.bf16.mxu0 0
  %3628 = vmatpush1.bf16.msra.mxu0 0
  %3629 = vmatprep.subr.bf16.mxu0 0
  %3630 = vmatpush1.bf16.msra.mxu0 0
  %3631 = vmatprep.subr.bf16.mxu0 0
  %3632 = vmatpush1.bf16.msra.mxu0 0
  %3633 = vmatprep.subr.bf16.mxu0 0
  %3634 = vmatpush1.bf16.msra.mxu0 0
  %3635 = vmatprep.subr.bf16.mxu0 0
  %3636 = vmatpush1.bf16.msra.mxu0 0
  %3637 = vmatprep.subr.bf16.mxu0 0
  %3638 = vmatpush1.bf16.msra.mxu0 0
  %3639 = vmatprep.subr.bf16.mxu0 0
  %3640 = vmatpush1.bf16.msra.mxu0 0
  %3641 = vmatprep.mubr.bf16.mxu0 0
  %3642 = vmatmul.mubr.bf16.gmra.mrb[0].mxu0 %v3607
  %v3643 = vpop.f32.mrb[0].mxu0
  %v3644 = vadd.f32 %v3592, %v3643
  %v3645 = vpop.f32.mrb[0].mxu0
  %v3646 = vpop.f32.mrb[0].mxu0
  %v3647 = vpop.f32.mrb[0].mxu0
  %3648 = vdwg.mxu0
  %3649 = vst [vmem:[%s15] sm:$0xff] %v3644
  // Predicated region
  $region62: #{_lambda_.1} parent=0 // pred_check
    _
  $region63: #{_lambda_.1} parent=0 // pred_check_branch
    %3651 = sbr.rel (0) target = $region65
  $region64: #{_lambda_.1} parent=0 // pred_region
    _
  $region65: #{_lambda_.1} parent=0 // pred_fallthru
    _
  // Predicated region
  $region66: #{_lambda_.1} parent=0 // pred_check
    _
  $region67: #{_lambda_.1} parent=0 // pred_check_branch
    %3653 = sbr.rel (0) target = $region69
  $region68: #{_lambda_.1} parent=0 // pred_region
    _
  $region69: #{_lambda_.1} parent=0 // pred_fallthru
    _

</llo_original>
